<compile_context>
chip_gen: v6e
topology: v6e:2x2x1
jax: 0.10.0
libtpu: 0.0.40
codegen_flags: <defaults>
</compile_context>

<pallas_src>
import jax
import jax.numpy as jnp
import numpy as np
from jax.experimental import pallas as pl
from jax.experimental.pallas import tpu as pltpu

# Small synthetic CLIP-text config
B, S, D, H, I, P, V, L = 2, 8, 32, 4, 64, 16, 64, 2
DH = D // H
EPS = 1e-5
NEG = -1e9

STACK_ORDER = ("ln1_g", "ln1_b", "wq", "bq", "wk", "bk", "wv", "bv",
               "wo", "bo", "ln2_g", "ln2_b", "w1", "b1", "w2", "b2")


# ---------------------------------------------------------------------------
# Fused Pallas kernel: all L encoder layers + pooling + final LN + projection
# ---------------------------------------------------------------------------
def _layernorm(v, g, b):
    mu = jnp.mean(v, axis=-1, keepdims=True)
    var = jnp.mean((v - mu) ** 2, axis=-1, keepdims=True)
    return (v - mu) * jax.lax.rsqrt(var + EPS) * g + b


def _encoder_kernel(h0_ref, bias_ref, qmask_ref, gsel_ref, eos_ref,
                    ln1_g, ln1_b, wq, bq, wk, bk, wv, bv, wo, bo,
                    ln2_g, ln2_b, w1, b1, w2, b2,
                    lnf_g, lnf_b, wproj_ref,
                    out_ref, x_vmem):
    l = pl.program_id(0)

    # layer 0: load the embedding output into the resident residual stream
    @pl.when(l == 0)
    def _():
        x_vmem[...] = h0_ref[...]

    x = x_vmem[...]                                         # [B*S, D]

    # ---- self-attention (pre-LN), heads fused into lane-dense matmuls ----
    xn = _layernorm(x, ln1_g[0], ln1_b[0])
    q = jnp.dot(xn, wq[0], preferred_element_type=jnp.float32) + bq[0]
    k = jnp.dot(xn, wk[0], preferred_element_type=jnp.float32) + bk[0]
    v = jnp.dot(xn, wv[0], preferred_element_type=jnp.float32) + bv[0]

    qmask = qmask_ref[...]                                  # [H*S, D] block-diag head mask
    gsel = gsel_ref[...]                                    # [S, H*S] head-recombine selector
    scale = DH ** -0.5

    ctx_rows = []
    for b in range(B):                                      # B=2, static; attention only
        sl = slice(b * S, (b + 1) * S)
        qb, kb, vb = q[sl, :], k[sl, :], v[sl, :]           # [S, D] each
        # heads folded into sublanes: rows h*S+i hold head-h query of token i
        q_hs = jnp.concatenate([qb] * H, axis=0) * qmask    # [H*S, D]
        s = jax.lax.dot_general(q_hs, kb, (((1,), (1,)), ((), ())),
                                preferred_element_type=jnp.float32)   # [H*S, S]
        s = s * scale + bias_ref[b]                         # causal + padding bias
        s = s - jnp.max(s, axis=-1, keepdims=True)          # one pass for all heads
        p = jnp.exp(s)
        p = p * pl.reciprocal(jnp.sum(p, axis=-1, keepdims=True), approx=True)
        c_hs = jnp.dot(p, vb, preferred_element_type=jnp.float32)     # [H*S, D]
        # keep only head-h lanes in row-group h, then fold head groups back to [S, D]
        ctx_rows.append(jnp.dot(gsel, c_hs * qmask,
                                preferred_element_type=jnp.float32))  # [S, D]
    ctx = jnp.concatenate(ctx_rows, axis=0)                 # [B*S, D]
    x = x + jnp.dot(ctx, wo[0], preferred_element_type=jnp.float32) + bo[0]

    # ---- MLP (pre-LN, quick_gelu) ----
    xn = _layernorm(x, ln2_g[0], ln2_b[0])
    h1 = jnp.dot(xn, w1[0], preferred_element_type=jnp.float32) + b1[0]
    h1 = h1 * pl.reciprocal(1.0 + jnp.exp(-1.702 * h1), approx=True)  # quick_gelu
    x = x + jnp.dot(h1, w2[0], preferred_element_type=jnp.float32) + b2[0]

    x_vmem[...] = x                                         # residual stays in VMEM

    # ---- last layer: EOS pooling + final LN + text projection ----
    @pl.when(l == pl.num_programs(0) - 1)
    def _():
        pooled = jnp.dot(eos_ref[...], x,
                         preferred_element_type=jnp.float32)          # [B, D]
        mu = jnp.mean(pooled, axis=-1, keepdims=True)
        var = jnp.mean((pooled - mu) ** 2, axis=-1, keepdims=True)
        pn = (pooled - mu) * jax.lax.rsqrt(var + EPS) * lnf_g[...] + lnf_b[...]
        out_ref[...] = jnp.dot(pn, wproj_ref[...],
                               preferred_element_type=jnp.float32)    # [B, P]


# ---------------------------------------------------------------------------
# Wrapper
# ---------------------------------------------------------------------------
def _const_spec(shape):
    n = len(shape)
    return pl.BlockSpec(shape, lambda l, n=n: (0,) * n)


def _stacked_spec(shape):                                   # shape = (L, ...)
    n = len(shape) - 1
    return pl.BlockSpec((1,) + tuple(shape[1:]), lambda l, n=n: (l,) + (0,) * n)


def clip_text_proj_encode(params, input_ids, attention_mask):
    # glue: embedding lookup, masks and head-folding selectors (plain JAX)
    h0 = (params["tok_emb"][input_ids] + params["pos_emb"][None]).astype(jnp.float32)
    h0 = h0.reshape(B * S, D)                               # batch folded into sublanes

    causal = jnp.where(jnp.tril(jnp.ones((S, S), bool)), 0.0, NEG).astype(jnp.float32)
    pad = jnp.where(attention_mask[:, None, :] > 0, 0.0, NEG).astype(jnp.float32)
    bias = causal[None] + pad                               # [B, S, S]
    bias_hs = jnp.tile(bias, (1, H, 1))                     # [B, H*S, S] (heads->sublanes)

    head_cols = jnp.repeat(jnp.eye(H, dtype=jnp.float32), DH, axis=1)   # [H, D]
    qmask = jnp.repeat(head_cols, S, axis=0)                # [H*S, D]
    gsel = jnp.tile(jnp.eye(S, dtype=jnp.float32), (1, H))  # [S, H*S]

    eos_idx = jnp.argmax(input_ids, axis=-1)                # HF CLIP: EOS = max id
    eos_sel = jax.nn.one_hot(jnp.arange(B) * S + eos_idx, B * S,
                             dtype=jnp.float32)             # [B, B*S]

    stacked = [jnp.stack([lp[k] for lp in params["layers"]]) for k in STACK_ORDER]

    in_specs = ([_const_spec(h0.shape), _const_spec(bias_hs.shape),
                 _const_spec(qmask.shape), _const_spec(gsel.shape),
                 _const_spec(eos_sel.shape)]
                + [_stacked_spec(a.shape) for a in stacked]
                + [_const_spec(params["lnf_g"].shape),
                   _const_spec(params["lnf_b"].shape),
                   _const_spec(params["wproj"].shape)])

    text_embeds = pl.pallas_call(
        _encoder_kernel,
        out_shape=jax.ShapeDtypeStruct((B, P), jnp.float32),
        grid_spec=pltpu.PrefetchScalarGridSpec(
            num_scalar_prefetch=0,
            grid=(L,),
            in_specs=in_specs,
            out_specs=pl.BlockSpec((B, P), lambda l: (0, 0)),
            scratch_shapes=[pltpu.VMEM((B * S, D), jnp.float32)],
        ),
        compiler_params=pltpu.CompilerParams(
            dimension_semantics=("arbitrary",)),
    )(h0, bias_hs, qmask, gsel, eos_sel, *stacked,
      params["lnf_g"], params["lnf_b"], params["wproj"])

    return text_embeds[:, None, :]                          # unsqueeze(1) -> [B, 1, P]


# ---------------------------------------------------------------------------
# Deterministic parameter init (synthetic; no checkpoint loading)
# ---------------------------------------------------------------------------
def init_params(key):
    keys = iter(jax.random.split(key, 64))

    def nrm(shape, scale=0.02):
        return (scale * jax.random.normal(next(keys), shape)).astype(jnp.float32)

    params = {
        "tok_emb": nrm((V, D)),
        "pos_emb": nrm((S, D)),
        "lnf_g": jnp.ones((1, D), jnp.float32),
        "lnf_b": jnp.zeros((1, D), jnp.float32),
        "wproj": nrm((D, P)),
        "layers": [],
    }
    for _ in range(L):
        params["layers"].append({
            "ln1_g": jnp.ones((1, D), jnp.float32),
            "ln1_b": jnp.zeros((1, D), jnp.float32),
            # heads concatenated along the output/lane dim -> lane-dense matmuls
            "wq": nrm((D, D)), "bq": nrm((1, D)),
            "wk": nrm((D, D)), "bk": nrm((1, D)),
            "wv": nrm((D, D)), "bv": nrm((1, D)),
            "wo": nrm((D, D)), "bo": nrm((1, D)),
            "ln2_g": jnp.ones((1, D), jnp.float32),
            "ln2_b": jnp.zeros((1, D), jnp.float32),
            "w1": nrm((D, I)), "b1": nrm((1, I)),
            "w2": nrm((I, D)), "b2": nrm((1, D)),
        })
    return params


# ---------------------------------------------------------------------------
# Pure-JAX reference (standard multi-head attention) for correctness check
# ---------------------------------------------------------------------------
def _ref_layer(x, mask, lp):
    def lnorm(v, g, b):
        mu = v.mean(-1, keepdims=True)
        var = ((v - mu) ** 2).mean(-1, keepdims=True)
        return (v - mu) / jnp.sqrt(var + EPS) * g + b

    xn = lnorm(x, lp["ln1_g"][0], lp["ln1_b"][0])
    q = (xn @ lp["wq"] + lp["bq"][0]).reshape(S, H, DH).transpose(1, 0, 2)
    k = (xn @ lp["wk"] + lp["bk"][0]).reshape(S, H, DH).transpose(1, 0, 2)
    v = (xn @ lp["wv"] + lp["bv"][0]).reshape(S, H, DH).transpose(1, 0, 2)
    s = jnp.einsum("hid,hjd->hij", q, k) / jnp.sqrt(DH) + mask[None]
    p = jax.nn.softmax(s, axis=-1)
    ctx = jnp.einsum("hij,hjd->hid", p, v).transpose(1, 0, 2).reshape(S, D)
    x = x + ctx @ lp["wo"] + lp["bo"][0]
    xn = lnorm(x, lp["ln2_g"][0], lp["ln2_b"][0])
    h1 = xn @ lp["w1"] + lp["b1"][0]
    h1 = h1 * jax.nn.sigmoid(1.702 * h1)
    return x + h1 @ lp["w2"] + lp["b2"][0]


def _ref_forward(params, input_ids, attention_mask):
    h = (params["tok_emb"][input_ids] + params["pos_emb"][None]).astype(jnp.float32)
    causal = jnp.where(jnp.tril(jnp.ones((S, S), bool)), 0.0, NEG).astype(jnp.float32)
    pad = jnp.where(attention_mask[:, None, :] > 0, 0.0, NEG).astype(jnp.float32)
    mask = causal[None] + pad
    for lp in params["layers"]:
        h = jax.vmap(lambda xx, mm, lp=lp: _ref_layer(xx, mm, lp))(h, mask)
    eos = jnp.argmax(input_ids, axis=-1)
    pooled = h[jnp.arange(B), eos]
    mu = pooled.mean(-1, keepdims=True)
    var = ((pooled - mu) ** 2).mean(-1, keepdims=True)
    xn = (pooled - mu) / jnp.sqrt(var + EPS) * params["lnf_g"][0] + params["lnf_b"][0]
    return (xn @ params["wproj"])[:, None, :]


# ---------------------------------------------------------------------------
if __name__ == "__main__":
    root = jax.random.PRNGKey(0)
    k_param, k_ids = jax.random.split(root)
    params = init_params(k_param)

    # synthetic token ids: EOS (= V-1, the max id) marks sequence end; id 0 = pad
    ids = jax.random.randint(k_ids, (B, S), 1, V - 1)
    ids = ids.at[0, S - 1].set(V - 1)
    ids = ids.at[1, 5].set(V - 1)
    ids = ids.at[1, 6:].set(0)
    attn_mask = jnp.array([[1] * S, [1] * 6 + [0] * 2], dtype=jnp.int32)

    out = clip_text_proj_encode(params, ids, attn_mask)
    out = jax.block_until_ready(out)

    assert out.shape == (B, 1, P), out.shape
    ref = _ref_forward(params, ids, attn_mask)
    np.testing.assert_allclose(np.asarray(out), np.asarray(ref), rtol=2e-2, atol=5e-3)

    # TODO(synk): HF tokenizer / pretrained-checkpoint loading (load_model) has no
    # Pallas equivalent; parameters are synthesized deterministically instead.
    print("KERNEL_OK")
</pallas_src>

<mosaic_0001>
module attributes {stable_mosaic.version = 11 : i64} {
  func.func @_encoder_kernel(%arg0: i32, %arg1: memref<16x32xf32, #tpu.memory_space<vmem>>, %arg2: memref<2x32x8xf32, #tpu.memory_space<vmem>>, %arg3: memref<32x32xf32, #tpu.memory_space<vmem>>, %arg4: memref<8x32xf32, #tpu.memory_space<vmem>>, %arg5: memref<2x16xf32, #tpu.memory_space<vmem>>, %arg6: memref<1x1x32xf32, #tpu.memory_space<vmem>>, %arg7: memref<1x1x32xf32, #tpu.memory_space<vmem>>, %arg8: memref<1x32x32xf32, #tpu.memory_space<vmem>>, %arg9: memref<1x1x32xf32, #tpu.memory_space<vmem>>, %arg10: memref<1x32x32xf32, #tpu.memory_space<vmem>>, %arg11: memref<1x1x32xf32, #tpu.memory_space<vmem>>, %arg12: memref<1x32x32xf32, #tpu.memory_space<vmem>>, %arg13: memref<1x1x32xf32, #tpu.memory_space<vmem>>, %arg14: memref<1x32x32xf32, #tpu.memory_space<vmem>>, %arg15: memref<1x1x32xf32, #tpu.memory_space<vmem>>, %arg16: memref<1x1x32xf32, #tpu.memory_space<vmem>>, %arg17: memref<1x1x32xf32, #tpu.memory_space<vmem>>, %arg18: memref<1x32x64xf32, #tpu.memory_space<vmem>>, %arg19: memref<1x1x64xf32, #tpu.memory_space<vmem>>, %arg20: memref<1x64x32xf32, #tpu.memory_space<vmem>>, %arg21: memref<1x1x32xf32, #tpu.memory_space<vmem>>, %arg22: memref<1x32xf32, #tpu.memory_space<vmem>>, %arg23: memref<1x32xf32, #tpu.memory_space<vmem>>, %arg24: memref<32x16xf32, #tpu.memory_space<vmem>>, %arg25: memref<2x16xf32, #tpu.memory_space<vmem>>, %arg26: memref<16x32xf32, #tpu.memory_space<vmem>>) attributes {dimension_semantics = [#tpu.dimension_semantics<arbitrary>], iteration_bounds = array<i64: 2>, scalar_prefetch = 0 : i64, scratch_operands = 1 : i64, tpu.core_type = #tpu.core_type<tc>, window_params = [{pipeline_mode = #tpu.pipeline_mode<synchronous>, transform_indices = @transform_0, window_bounds = array<i64: 16, 32>}, {pipeline_mode = #tpu.pipeline_mode<synchronous>, transform_indices = @transform_1, window_bounds = array<i64: 2, 32, 8>}, {pipeline_mode = #tpu.pipeline_mode<synchronous>, transform_indices = @transform_2, window_bounds = array<i64: 32, 32>}, {pipeline_mode = #tpu.pipeline_mode<synchronous>, transform_indices = @transform_3, window_bounds = array<i64: 8, 32>}, {pipeline_mode = #tpu.pipeline_mode<synchronous>, transform_indices = @transform_4, window_bounds = array<i64: 2, 16>}, {transform_indices = @transform_5, window_bounds = array<i64: 1, 1, 32>}, {transform_indices = @transform_6, window_bounds = array<i64: 1, 1, 32>}, {transform_indices = @transform_7, window_bounds = array<i64: 1, 32, 32>}, {transform_indices = @transform_8, window_bounds = array<i64: 1, 1, 32>}, {transform_indices = @transform_9, window_bounds = array<i64: 1, 32, 32>}, {transform_indices = @transform_10, window_bounds = array<i64: 1, 1, 32>}, {transform_indices = @transform_11, window_bounds = array<i64: 1, 32, 32>}, {transform_indices = @transform_12, window_bounds = array<i64: 1, 1, 32>}, {transform_indices = @transform_13, window_bounds = array<i64: 1, 32, 32>}, {transform_indices = @transform_14, window_bounds = array<i64: 1, 1, 32>}, {transform_indices = @transform_15, window_bounds = array<i64: 1, 1, 32>}, {transform_indices = @transform_16, window_bounds = array<i64: 1, 1, 32>}, {transform_indices = @transform_17, window_bounds = array<i64: 1, 32, 64>}, {transform_indices = @transform_18, window_bounds = array<i64: 1, 1, 64>}, {transform_indices = @transform_19, window_bounds = array<i64: 1, 64, 32>}, {transform_indices = @transform_20, window_bounds = array<i64: 1, 1, 32>}, {pipeline_mode = #tpu.pipeline_mode<synchronous>, transform_indices = @transform_21, window_bounds = array<i64: 1, 32>}, {pipeline_mode = #tpu.pipeline_mode<synchronous>, transform_indices = @transform_22, window_bounds = array<i64: 1, 32>}, {pipeline_mode = #tpu.pipeline_mode<synchronous>, transform_indices = @transform_23, window_bounds = array<i64: 32, 16>}, {pipeline_mode = #tpu.pipeline_mode<synchronous>, transform_indices = @transform_24, window_bounds = array<i64: 2, 16>}]} {
    %c0_i32 = arith.constant 0 : i32
    %0 = arith.cmpi eq, %arg0, %c0_i32 : i32
    %1 = arith.extui %0 : i1 to i32
    %c0_i32_0 = arith.constant 0 : i32
    %2 = arith.cmpi ne, %1, %c0_i32_0 : i32
    scf.if %2 {
      %c0_91 = arith.constant 0 : index
      %c0_92 = arith.constant 0 : index
      %162 = vector.load %arg1[%c0_91, %c0_92] : memref<16x32xf32, #tpu.memory_space<vmem>>, vector<16x32xf32>
      %c0_93 = arith.constant 0 : index
      %c0_94 = arith.constant 0 : index
      %163 = vector.load %arg26[%c0_93, %c0_94] : memref<16x32xf32, #tpu.memory_space<vmem>>, vector<16x32xf32>
      tpu.vector_store %arg26[%c0_93, %c0_94], %162 {strides = array<i32>} : memref<16x32xf32, #tpu.memory_space<vmem>>, vector<16x32xf32>,
    } else {
    }
    %c0 = arith.constant 0 : index
    %c0_1 = arith.constant 0 : index
    %3 = vector.load %arg26[%c0, %c0_1] : memref<16x32xf32, #tpu.memory_space<vmem>>, vector<16x32xf32>
    %c0_2 = arith.constant 0 : index
    %c0_3 = arith.constant 0 : index
    %c0_4 = arith.constant 0 : index
    %4 = vector.load %arg6[%c0_2, %c0_3, %c0_4] : memref<1x1x32xf32, #tpu.memory_space<vmem>>, vector<1x1x32xf32>
    %5 = vector.shape_cast %4 : vector<1x1x32xf32> to vector<1x32xf32>
    %c0_5 = arith.constant 0 : index
    %c0_6 = arith.constant 0 : index
    %c0_7 = arith.constant 0 : index
    %6 = vector.load %arg7[%c0_5, %c0_6, %c0_7] : memref<1x1x32xf32, #tpu.memory_space<vmem>>, vector<1x1x32xf32>
    %7 = vector.shape_cast %6 : vector<1x1x32xf32> to vector<1x32xf32>
    %cst = arith.constant dense<0.000000e+00> : vector<16xf32>
    %8 = vector.multi_reduction <add>, %3, %cst [1] : vector<16x32xf32> to vector<16xf32>
    %9 = vector.shape_cast %8 : vector<16xf32> to vector<16x1xf32>
    %cst_8 = arith.constant 3.200000e+01 : f32
    %10 = vector.broadcast %cst_8 : f32 to vector<16x1xf32>
    %11 = arith.divf %9, %10 : vector<16x1xf32>
    %12 = vector.broadcast %11 : vector<16x1xf32> to vector<16x32xf32>
    %13 = arith.subf %3, %12 : vector<16x32xf32>
    %14 = arith.mulf %13, %13 : vector<16x32xf32>
    %cst_9 = arith.constant dense<0.000000e+00> : vector<16xf32>
    %15 = vector.multi_reduction <add>, %14, %cst_9 [1] : vector<16x32xf32> to vector<16xf32>
    %16 = vector.shape_cast %15 : vector<16xf32> to vector<16x1xf32>
    %cst_10 = arith.constant 3.200000e+01 : f32
    %17 = vector.broadcast %cst_10 : f32 to vector<16x1xf32>
    %18 = arith.divf %16, %17 : vector<16x1xf32>
    %19 = vector.broadcast %11 : vector<16x1xf32> to vector<16x32xf32>
    %20 = arith.subf %3, %19 : vector<16x32xf32>
    %cst_11 = arith.constant 9.99999974E-6 : f32
    %21 = vector.broadcast %cst_11 : f32 to vector<16x1xf32>
    %22 = arith.addf %18, %21 : vector<16x1xf32>
    %23 = math.rsqrt %22 : vector<16x1xf32>
    %24 = vector.broadcast %23 : vector<16x1xf32> to vector<16x32xf32>
    %25 = arith.mulf %20, %24 : vector<16x32xf32>
    %26 = vector.broadcast %5 : vector<1x32xf32> to vector<16x32xf32>
    %27 = arith.mulf %25, %26 : vector<16x32xf32>
    %28 = vector.broadcast %7 : vector<1x32xf32> to vector<16x32xf32>
    %29 = arith.addf %27, %28 : vector<16x32xf32>
    %c0_12 = arith.constant 0 : index
    %c0_13 = arith.constant 0 : index
    %c0_14 = arith.constant 0 : index
    %30 = vector.load %arg8[%c0_12, %c0_13, %c0_14] : memref<1x32x32xf32, #tpu.memory_space<vmem>>, vector<1x32x32xf32>
    %31 = vector.shape_cast %30 : vector<1x32x32xf32> to vector<32x32xf32>
    %cst_15 = arith.constant dense<0.000000e+00> : vector<16x32xf32>
    %32 = tpu.matmul %29, %31, %cst_15 {dimension_numbers = #tpu.dot_dimension_numbers<[1], [0], [0], [1], [0, 0, 1, 1], [], []>} : vector<16x32xf32>, vector<32x32xf32>, vector<16x32xf32> -> vector<16x32xf32>
    %c0_16 = arith.constant 0 : index
    %c0_17 = arith.constant 0 : index
    %c0_18 = arith.constant 0 : index
    %33 = vector.load %arg9[%c0_16, %c0_17, %c0_18] : memref<1x1x32xf32, #tpu.memory_space<vmem>>, vector<1x1x32xf32>
    %34 = vector.shape_cast %33 : vector<1x1x32xf32> to vector<1x32xf32>
    %35 = vector.broadcast %34 : vector<1x32xf32> to vector<16x32xf32>
    %36 = arith.addf %32, %35 : vector<16x32xf32>
    %c0_19 = arith.constant 0 : index
    %c0_20 = arith.constant 0 : index
    %c0_21 = arith.constant 0 : index
    %37 = vector.load %arg10[%c0_19, %c0_20, %c0_21] : memref<1x32x32xf32, #tpu.memory_space<vmem>>, vector<1x32x32xf32>
    %38 = vector.shape_cast %37 : vector<1x32x32xf32> to vector<32x32xf32>
    %cst_22 = arith.constant dense<0.000000e+00> : vector<16x32xf32>
    %39 = tpu.matmul %29, %38, %cst_22 {dimension_numbers = #tpu.dot_dimension_numbers<[1], [0], [0], [1], [0, 0, 1, 1], [], []>} : vector<16x32xf32>, vector<32x32xf32>, vector<16x32xf32> -> vector<16x32xf32>
    %c0_23 = arith.constant 0 : index
    %c0_24 = arith.constant 0 : index
    %c0_25 = arith.constant 0 : index
    %40 = vector.load %arg11[%c0_23, %c0_24, %c0_25] : memref<1x1x32xf32, #tpu.memory_space<vmem>>, vector<1x1x32xf32>
    %41 = vector.shape_cast %40 : vector<1x1x32xf32> to vector<1x32xf32>
    %42 = vector.broadcast %41 : vector<1x32xf32> to vector<16x32xf32>
    %43 = arith.addf %39, %42 : vector<16x32xf32>
    %c0_26 = arith.constant 0 : index
    %c0_27 = arith.constant 0 : index
    %c0_28 = arith.constant 0 : index
    %44 = vector.load %arg12[%c0_26, %c0_27, %c0_28] : memref<1x32x32xf32, #tpu.memory_space<vmem>>, vector<1x32x32xf32>
    %45 = vector.shape_cast %44 : vector<1x32x32xf32> to vector<32x32xf32>
    %cst_29 = arith.constant dense<0.000000e+00> : vector<16x32xf32>
    %46 = tpu.matmul %29, %45, %cst_29 {dimension_numbers = #tpu.dot_dimension_numbers<[1], [0], [0], [1], [0, 0, 1, 1], [], []>} : vector<16x32xf32>, vector<32x32xf32>, vector<16x32xf32> -> vector<16x32xf32>
    %c0_30 = arith.constant 0 : index
    %c0_31 = arith.constant 0 : index
    %c0_32 = arith.constant 0 : index
    %47 = vector.load %arg13[%c0_30, %c0_31, %c0_32] : memref<1x1x32xf32, #tpu.memory_space<vmem>>, vector<1x1x32xf32>
    %48 = vector.shape_cast %47 : vector<1x1x32xf32> to vector<1x32xf32>
    %49 = vector.broadcast %48 : vector<1x32xf32> to vector<16x32xf32>
    %50 = arith.addf %46, %49 : vector<16x32xf32>
    %c0_33 = arith.constant 0 : index
    %c0_34 = arith.constant 0 : index
    %51 = vector.load %arg3[%c0_33, %c0_34] : memref<32x32xf32, #tpu.memory_space<vmem>>, vector<32x32xf32>
    %c0_35 = arith.constant 0 : index
    %c0_36 = arith.constant 0 : index
    %52 = vector.load %arg4[%c0_35, %c0_36] : memref<8x32xf32, #tpu.memory_space<vmem>>, vector<8x32xf32>
    %53 = vector.extract_strided_slice %36 {offsets = [0, 0], sizes = [8, 32], strides = [1, 1]} : vector<16x32xf32> to vector<8x32xf32>
    %54 = vector.extract_strided_slice %43 {offsets = [0, 0], sizes = [8, 32], strides = [1, 1]} : vector<16x32xf32> to vector<8x32xf32>
    %55 = vector.extract_strided_slice %50 {offsets = [0, 0], sizes = [8, 32], strides = [1, 1]} : vector<16x32xf32> to vector<8x32xf32>
    %56 = tpu.concatenate %53, %53, %53, %53 in 0 : vector<8x32xf32>, vector<8x32xf32>, vector<8x32xf32>, vector<8x32xf32> -> vector<32x32xf32>
    %57 = arith.mulf %56, %51 : vector<32x32xf32>
    %cst_37 = arith.constant dense<0.000000e+00> : vector<32x8xf32>
    %58 = tpu.matmul %57, %54, %cst_37 {dimension_numbers = #tpu.dot_dimension_numbers<[1], [1], [0], [0], [0, 0, 1, 0], [], []>} : vector<32x32xf32>, vector<8x32xf32>, vector<32x8xf32> -> vector<32x8xf32>
    %cst_38 = arith.constant 0.353553385 : f32
    %59 = vector.broadcast %cst_38 : f32 to vector<32x8xf32>
    %60 = arith.mulf %58, %59 : vector<32x8xf32>
    %c0_39 = arith.constant 0 : index
    %c0_40 = arith.constant 0 : index
    %c0_41 = arith.constant 0 : index
    %61 = vector.load %arg2[%c0_39, %c0_40, %c0_41] : memref<2x32x8xf32, #tpu.memory_space<vmem>>, vector<1x32x8xf32>
    %62 = vector.shape_cast %61 : vector<1x32x8xf32> to vector<32x8xf32>
    %63 = arith.addf %60, %62 : vector<32x8xf32>
    %cst_42 = arith.constant dense<0xFF800000> : vector<32xf32>
    %64 = vector.multi_reduction <maximumf>, %63, %cst_42 [1] : vector<32x8xf32> to vector<32xf32>
    %65 = vector.shape_cast %64 : vector<32xf32> to vector<32x1xf32>
    %66 = vector.broadcast %65 : vector<32x1xf32> to vector<32x8xf32>
    %67 = arith.subf %63, %66 : vector<32x8xf32>
    %68 = math.exp %67 : vector<32x8xf32>
    %cst_43 = arith.constant dense<0.000000e+00> : vector<32xf32>
    %69 = vector.multi_reduction <add>, %68, %cst_43 [1] : vector<32x8xf32> to vector<32xf32>
    %70 = vector.shape_cast %69 : vector<32xf32> to vector<32x1xf32>
    %71 = tpu.reciprocal %70 {approx = true} : vector<32x1xf32> -> vector<32x1xf32>
    %72 = vector.broadcast %71 : vector<32x1xf32> to vector<32x8xf32>
    %73 = arith.mulf %68, %72 : vector<32x8xf32>
    %cst_44 = arith.constant dense<0.000000e+00> : vector<32x32xf32>
    %74 = tpu.matmul %73, %55, %cst_44 {dimension_numbers = #tpu.dot_dimension_numbers<[1], [0], [0], [1], [0, 0, 1, 1], [], []>} : vector<32x8xf32>, vector<8x32xf32>, vector<32x32xf32> -> vector<32x32xf32>
    %75 = arith.mulf %74, %51 : vector<32x32xf32>
    %cst_45 = arith.constant dense<0.000000e+00> : vector<8x32xf32>
    %76 = tpu.matmul %52, %75, %cst_45 {dimension_numbers = #tpu.dot_dimension_numbers<[1], [0], [0], [1], [0, 0, 1, 1], [], []>} : vector<8x32xf32>, vector<32x32xf32>, vector<8x32xf32> -> vector<8x32xf32>
    %77 = vector.extract_strided_slice %36 {offsets = [8, 0], sizes = [8, 32], strides = [1, 1]} : vector<16x32xf32> to vector<8x32xf32>
    %78 = vector.extract_strided_slice %43 {offsets = [8, 0], sizes = [8, 32], strides = [1, 1]} : vector<16x32xf32> to vector<8x32xf32>
    %79 = vector.extract_strided_slice %50 {offsets = [8, 0], sizes = [8, 32], strides = [1, 1]} : vector<16x32xf32> to vector<8x32xf32>
    %80 = tpu.concatenate %77, %77, %77, %77 in 0 : vector<8x32xf32>, vector<8x32xf32>, vector<8x32xf32>, vector<8x32xf32> -> vector<32x32xf32>
    %81 = arith.mulf %80, %51 : vector<32x32xf32>
    %cst_46 = arith.constant dense<0.000000e+00> : vector<32x8xf32>
    %82 = tpu.matmul %81, %78, %cst_46 {dimension_numbers = #tpu.dot_dimension_numbers<[1], [1], [0], [0], [0, 0, 1, 0], [], []>} : vector<32x32xf32>, vector<8x32xf32>, vector<32x8xf32> -> vector<32x8xf32>
    %cst_47 = arith.constant 0.353553385 : f32
    %83 = vector.broadcast %cst_47 : f32 to vector<32x8xf32>
    %84 = arith.mulf %82, %83 : vector<32x8xf32>
    %c1 = arith.constant 1 : index
    %c0_48 = arith.constant 0 : index
    %c0_49 = arith.constant 0 : index
    %85 = vector.load %arg2[%c1, %c0_48, %c0_49] : memref<2x32x8xf32, #tpu.memory_space<vmem>>, vector<1x32x8xf32>
    %86 = vector.shape_cast %85 : vector<1x32x8xf32> to vector<32x8xf32>
    %87 = arith.addf %84, %86 : vector<32x8xf32>
    %cst_50 = arith.constant dense<0xFF800000> : vector<32xf32>
    %88 = vector.multi_reduction <maximumf>, %87, %cst_50 [1] : vector<32x8xf32> to vector<32xf32>
    %89 = vector.shape_cast %88 : vector<32xf32> to vector<32x1xf32>
    %90 = vector.broadcast %89 : vector<32x1xf32> to vector<32x8xf32>
    %91 = arith.subf %87, %90 : vector<32x8xf32>
    %92 = math.exp %91 : vector<32x8xf32>
    %cst_51 = arith.constant dense<0.000000e+00> : vector<32xf32>
    %93 = vector.multi_reduction <add>, %92, %cst_51 [1] : vector<32x8xf32> to vector<32xf32>
    %94 = vector.shape_cast %93 : vector<32xf32> to vector<32x1xf32>
    %95 = tpu.reciprocal %94 {approx = true} : vector<32x1xf32> -> vector<32x1xf32>
    %96 = vector.broadcast %95 : vector<32x1xf32> to vector<32x8xf32>
    %97 = arith.mulf %92, %96 : vector<32x8xf32>
    %cst_52 = arith.constant dense<0.000000e+00> : vector<32x32xf32>
    %98 = tpu.matmul %97, %79, %cst_52 {dimension_numbers = #tpu.dot_dimension_numbers<[1], [0], [0], [1], [0, 0, 1, 1], [], []>} : vector<32x8xf32>, vector<8x32xf32>, vector<32x32xf32> -> vector<32x32xf32>
    %99 = arith.mulf %98, %51 : vector<32x32xf32>
    %cst_53 = arith.constant dense<0.000000e+00> : vector<8x32xf32>
    %100 = tpu.matmul %52, %99, %cst_53 {dimension_numbers = #tpu.dot_dimension_numbers<[1], [0], [0], [1], [0, 0, 1, 1], [], []>} : vector<8x32xf32>, vector<32x32xf32>, vector<8x32xf32> -> vector<8x32xf32>
    %101 = tpu.concatenate %76, %100 in 0 : vector<8x32xf32>, vector<8x32xf32> -> vector<16x32xf32>
    %c0_54 = arith.constant 0 : index
    %c0_55 = arith.constant 0 : index
    %c0_56 = arith.constant 0 : index
    %102 = vector.load %arg14[%c0_54, %c0_55, %c0_56] : memref<1x32x32xf32, #tpu.memory_space<vmem>>, vector<1x32x32xf32>
    %103 = vector.shape_cast %102 : vector<1x32x32xf32> to vector<32x32xf32>
    %cst_57 = arith.constant dense<0.000000e+00> : vector<16x32xf32>
    %104 = tpu.matmul %101, %103, %cst_57 {dimension_numbers = #tpu.dot_dimension_numbers<[1], [0], [0], [1], [0, 0, 1, 1], [], []>} : vector<16x32xf32>, vector<32x32xf32>, vector<16x32xf32> -> vector<16x32xf32>
    %105 = arith.addf %3, %104 : vector<16x32xf32>
    %c0_58 = arith.constant 0 : index
    %c0_59 = arith.constant 0 : index
    %c0_60 = arith.constant 0 : index
    %106 = vector.load %arg15[%c0_58, %c0_59, %c0_60] : memref<1x1x32xf32, #tpu.memory_space<vmem>>, vector<1x1x32xf32>
    %107 = vector.shape_cast %106 : vector<1x1x32xf32> to vector<1x32xf32>
    %108 = vector.broadcast %107 : vector<1x32xf32> to vector<16x32xf32>
    %109 = arith.addf %105, %108 : vector<16x32xf32>
    %c0_61 = arith.constant 0 : index
    %c0_62 = arith.constant 0 : index
    %c0_63 = arith.constant 0 : index
    %110 = vector.load %arg16[%c0_61, %c0_62, %c0_63] : memref<1x1x32xf32, #tpu.memory_space<vmem>>, vector<1x1x32xf32>
    %111 = vector.shape_cast %110 : vector<1x1x32xf32> to vector<1x32xf32>
    %c0_64 = arith.constant 0 : index
    %c0_65 = arith.constant 0 : index
    %c0_66 = arith.constant 0 : index
    %112 = vector.load %arg17[%c0_64, %c0_65, %c0_66] : memref<1x1x32xf32, #tpu.memory_space<vmem>>, vector<1x1x32xf32>
    %113 = vector.shape_cast %112 : vector<1x1x32xf32> to vector<1x32xf32>
    %cst_67 = arith.constant dense<0.000000e+00> : vector<16xf32>
    %114 = vector.multi_reduction <add>, %109, %cst_67 [1] : vector<16x32xf32> to vector<16xf32>
    %115 = vector.shape_cast %114 : vector<16xf32> to vector<16x1xf32>
    %cst_68 = arith.constant 3.200000e+01 : f32
    %116 = vector.broadcast %cst_68 : f32 to vector<16x1xf32>
    %117 = arith.divf %115, %116 : vector<16x1xf32>
    %118 = vector.broadcast %117 : vector<16x1xf32> to vector<16x32xf32>
    %119 = arith.subf %109, %118 : vector<16x32xf32>
    %120 = arith.mulf %119, %119 : vector<16x32xf32>
    %cst_69 = arith.constant dense<0.000000e+00> : vector<16xf32>
    %121 = vector.multi_reduction <add>, %120, %cst_69 [1] : vector<16x32xf32> to vector<16xf32>
    %122 = vector.shape_cast %121 : vector<16xf32> to vector<16x1xf32>
    %cst_70 = arith.constant 3.200000e+01 : f32
    %123 = vector.broadcast %cst_70 : f32 to vector<16x1xf32>
    %124 = arith.divf %122, %123 : vector<16x1xf32>
    %125 = vector.broadcast %117 : vector<16x1xf32> to vector<16x32xf32>
    %126 = arith.subf %109, %125 : vector<16x32xf32>
    %cst_71 = arith.constant 9.99999974E-6 : f32
    %127 = vector.broadcast %cst_71 : f32 to vector<16x1xf32>
    %128 = arith.addf %124, %127 : vector<16x1xf32>
    %129 = math.rsqrt %128 : vector<16x1xf32>
    %130 = vector.broadcast %129 : vector<16x1xf32> to vector<16x32xf32>
    %131 = arith.mulf %126, %130 : vector<16x32xf32>
    %132 = vector.broadcast %111 : vector<1x32xf32> to vector<16x32xf32>
    %133 = arith.mulf %131, %132 : vector<16x32xf32>
    %134 = vector.broadcast %113 : vector<1x32xf32> to vector<16x32xf32>
    %135 = arith.addf %133, %134 : vector<16x32xf32>
    %c0_72 = arith.constant 0 : index
    %c0_73 = arith.constant 0 : index
    %c0_74 = arith.constant 0 : index
    %136 = vector.load %arg18[%c0_72, %c0_73, %c0_74] : memref<1x32x64xf32, #tpu.memory_space<vmem>>, vector<1x32x64xf32>
    %137 = vector.shape_cast %136 : vector<1x32x64xf32> to vector<32x64xf32>
    %cst_75 = arith.constant dense<0.000000e+00> : vector<16x64xf32>
    %138 = tpu.matmul %135, %137, %cst_75 {dimension_numbers = #tpu.dot_dimension_numbers<[1], [0], [0], [1], [0, 0, 1, 1], [], []>} : vector<16x32xf32>, vector<32x64xf32>, vector<16x64xf32> -> vector<16x64xf32>
    %c0_76 = arith.constant 0 : index
    %c0_77 = arith.constant 0 : index
    %c0_78 = arith.constant 0 : index
    %139 = vector.load %arg19[%c0_76, %c0_77, %c0_78] : memref<1x1x64xf32, #tpu.memory_space<vmem>>, vector<1x1x64xf32>
    %140 = vector.shape_cast %139 : vector<1x1x64xf32> to vector<1x64xf32>
    %141 = vector.broadcast %140 : vector<1x64xf32> to vector<16x64xf32>
    %142 = arith.addf %138, %141 : vector<16x64xf32>
    %cst_79 = arith.constant -1.702000e+00 : f32
    %143 = vector.broadcast %cst_79 : f32 to vector<16x64xf32>
    %144 = arith.mulf %143, %142 : vector<16x64xf32>
    %145 = math.exp %144 : vector<16x64xf32>
    %cst_80 = arith.constant 1.000000e+00 : f32
    %146 = vector.broadcast %cst_80 : f32 to vector<16x64xf32>
    %147 = arith.addf %146, %145 : vector<16x64xf32>
    %148 = tpu.reciprocal %147 {approx = true} : vector<16x64xf32> -> vector<16x64xf32>
    %149 = arith.mulf %142, %148 : vector<16x64xf32>
    %c0_81 = arith.constant 0 : index
    %c0_82 = arith.constant 0 : index
    %c0_83 = arith.constant 0 : index
    %150 = vector.load %arg20[%c0_81, %c0_82, %c0_83] : memref<1x64x32xf32, #tpu.memory_space<vmem>>, vector<1x64x32xf32>
    %151 = vector.shape_cast %150 : vector<1x64x32xf32> to vector<64x32xf32>
    %cst_84 = arith.constant dense<0.000000e+00> : vector<16x32xf32>
    %152 = tpu.matmul %149, %151, %cst_84 {dimension_numbers = #tpu.dot_dimension_numbers<[1], [0], [0], [1], [0, 0, 1, 1], [], []>} : vector<16x64xf32>, vector<64x32xf32>, vector<16x32xf32> -> vector<16x32xf32>
    %153 = arith.addf %109, %152 : vector<16x32xf32>
    %c0_85 = arith.constant 0 : index
    %c0_86 = arith.constant 0 : index
    %c0_87 = arith.constant 0 : index
    %154 = vector.load %arg21[%c0_85, %c0_86, %c0_87] : memref<1x1x32xf32, #tpu.memory_space<vmem>>, vector<1x1x32xf32>
    %155 = vector.shape_cast %154 : vector<1x1x32xf32> to vector<1x32xf32>
    %156 = vector.broadcast %155 : vector<1x32xf32> to vector<16x32xf32>
    %157 = arith.addf %153, %156 : vector<16x32xf32>
    %c0_88 = arith.constant 0 : index
    %c0_89 = arith.constant 0 : index
    %158 = vector.load %arg26[%c0_88, %c0_89] : memref<16x32xf32, #tpu.memory_space<vmem>>, vector<16x32xf32>
    tpu.vector_store %arg26[%c0_88, %c0_89], %157 {strides = array<i32>} : memref<16x32xf32, #tpu.memory_space<vmem>>, vector<16x32xf32>,
    %c1_i32 = arith.constant 1 : i32
    %159 = arith.cmpi eq, %arg0, %c1_i32 : i32
    %160 = arith.extui %159 : i1 to i32
    %c0_i32_90 = arith.constant 0 : i32
    %161 = arith.cmpi ne, %160, %c0_i32_90 : i32
    scf.if %161 {
      %c0_91 = arith.constant 0 : index
      %c0_92 = arith.constant 0 : index
      %162 = vector.load %arg5[%c0_91, %c0_92] : memref<2x16xf32, #tpu.memory_space<vmem>>, vector<2x16xf32>
      %cst_93 = arith.constant dense<0.000000e+00> : vector<2x32xf32>
      %163 = tpu.matmul %162, %157, %cst_93 {dimension_numbers = #tpu.dot_dimension_numbers<[1], [0], [0], [1], [0, 0, 1, 1], [], []>} : vector<2x16xf32>, vector<16x32xf32>, vector<2x32xf32> -> vector<2x32xf32>
      %cst_94 = arith.constant dense<0.000000e+00> : vector<2xf32>
      %164 = vector.multi_reduction <add>, %163, %cst_94 [1] : vector<2x32xf32> to vector<2xf32>
      %165 = vector.shape_cast %164 : vector<2xf32> to vector<2x1xf32>
      %cst_95 = arith.constant 3.200000e+01 : f32
      %166 = vector.broadcast %cst_95 : f32 to vector<2x1xf32>
      %167 = arith.divf %165, %166 : vector<2x1xf32>
      %168 = vector.broadcast %167 : vector<2x1xf32> to vector<2x32xf32>
      %169 = arith.subf %163, %168 : vector<2x32xf32>
      %170 = arith.mulf %169, %169 : vector<2x32xf32>
      %cst_96 = arith.constant dense<0.000000e+00> : vector<2xf32>
      %171 = vector.multi_reduction <add>, %170, %cst_96 [1] : vector<2x32xf32> to vector<2xf32>
      %172 = vector.shape_cast %171 : vector<2xf32> to vector<2x1xf32>
      %cst_97 = arith.constant 3.200000e+01 : f32
      %173 = vector.broadcast %cst_97 : f32 to vector<2x1xf32>
      %174 = arith.divf %172, %173 : vector<2x1xf32>
      %175 = vector.broadcast %167 : vector<2x1xf32> to vector<2x32xf32>
      %176 = arith.subf %163, %175 : vector<2x32xf32>
      %cst_98 = arith.constant 9.99999974E-6 : f32
      %177 = vector.broadcast %cst_98 : f32 to vector<2x1xf32>
      %178 = arith.addf %174, %177 : vector<2x1xf32>
      %179 = math.rsqrt %178 : vector<2x1xf32>
      %180 = vector.broadcast %179 : vector<2x1xf32> to vector<2x32xf32>
      %181 = arith.mulf %176, %180 : vector<2x32xf32>
      %c0_99 = arith.constant 0 : index
      %c0_100 = arith.constant 0 : index
      %182 = vector.load %arg22[%c0_99, %c0_100] : memref<1x32xf32, #tpu.memory_space<vmem>>, vector<1x32xf32>
      %183 = vector.broadcast %182 : vector<1x32xf32> to vector<2x32xf32>
      %184 = arith.mulf %181, %183 : vector<2x32xf32>
      %c0_101 = arith.constant 0 : index
      %c0_102 = arith.constant 0 : index
      %185 = vector.load %arg23[%c0_101, %c0_102] : memref<1x32xf32, #tpu.memory_space<vmem>>, vector<1x32xf32>
      %186 = vector.broadcast %185 : vector<1x32xf32> to vector<2x32xf32>
      %187 = arith.addf %184, %186 : vector<2x32xf32>
      %c0_103 = arith.constant 0 : index
      %c0_104 = arith.constant 0 : index
      %188 = vector.load %arg24[%c0_103, %c0_104] : memref<32x16xf32, #tpu.memory_space<vmem>>, vector<32x16xf32>
      %cst_105 = arith.constant dense<0.000000e+00> : vector<2x16xf32>
      %189 = tpu.matmul %187, %188, %cst_105 {dimension_numbers = #tpu.dot_dimension_numbers<[1], [0], [0], [1], [0, 0, 1, 1], [], []>} : vector<2x32xf32>, vector<32x16xf32>, vector<2x16xf32> -> vector<2x16xf32>
      %c0_106 = arith.constant 0 : index
      %c0_107 = arith.constant 0 : index
      %190 = vector.load %arg25[%c0_106, %c0_107] : memref<2x16xf32, #tpu.memory_space<vmem>>, vector<2x16xf32>
      tpu.vector_store %arg25[%c0_106, %c0_107], %189 {strides = array<i32>} : memref<2x16xf32, #tpu.memory_space<vmem>>, vector<2x16xf32>,
    } else {
    }
    return
  }
  func.func @transform_0(%arg0: i32) -> (i32, i32) {
    %c0_i32 = arith.constant 0 : i32
    %c0_i32_0 = arith.constant 0 : i32
    %c0_i32_1 = arith.constant 0 : i32
    return %c0_i32, %c0_i32_0 : i32, i32
  }
  func.func @transform_1(%arg0: i32) -> (i32, i32, i32) {
    %c0_i32 = arith.constant 0 : i32
    %c0_i32_0 = arith.constant 0 : i32
    %c0_i32_1 = arith.constant 0 : i32
    %c0_i32_2 = arith.constant 0 : i32
    return %c0_i32, %c0_i32_0, %c0_i32_1 : i32, i32, i32
  }
  func.func @transform_2(%arg0: i32) -> (i32, i32) {
    %c0_i32 = arith.constant 0 : i32
    %c0_i32_0 = arith.constant 0 : i32
    %c0_i32_1 = arith.constant 0 : i32
    return %c0_i32, %c0_i32_0 : i32, i32
  }
  func.func @transform_3(%arg0: i32) -> (i32, i32) {
    %c0_i32 = arith.constant 0 : i32
    %c0_i32_0 = arith.constant 0 : i32
    %c0_i32_1 = arith.constant 0 : i32
    return %c0_i32, %c0_i32_0 : i32, i32
  }
  func.func @transform_4(%arg0: i32) -> (i32, i32) {
    %c0_i32 = arith.constant 0 : i32
    %c0_i32_0 = arith.constant 0 : i32
    %c0_i32_1 = arith.constant 0 : i32
    return %c0_i32, %c0_i32_0 : i32, i32
  }
  func.func @transform_5(%arg0: i32) -> (i32, i32, i32) {
    %c0_i32 = arith.constant 0 : i32
    %c0_i32_0 = arith.constant 0 : i32
    %c0_i32_1 = arith.constant 0 : i32
    return %arg0, %c0_i32, %c0_i32_0 : i32, i32, i32
  }
  func.func @transform_6(%arg0: i32) -> (i32, i32, i32) {
    %c0_i32 = arith.constant 0 : i32
    %c0_i32_0 = arith.constant 0 : i32
    %c0_i32_1 = arith.constant 0 : i32
    return %arg0, %c0_i32, %c0_i32_0 : i32, i32, i32
  }
  func.func @transform_7(%arg0: i32) -> (i32, i32, i32) {
    %c0_i32 = arith.constant 0 : i32
    %c0_i32_0 = arith.constant 0 : i32
    %c0_i32_1 = arith.constant 0 : i32
    return %arg0, %c0_i32, %c0_i32_0 : i32, i32, i32
  }
  func.func @transform_8(%arg0: i32) -> (i32, i32, i32) {
    %c0_i32 = arith.constant 0 : i32
    %c0_i32_0 = arith.constant 0 : i32
    %c0_i32_1 = arith.constant 0 : i32
    return %arg0, %c0_i32, %c0_i32_0 : i32, i32, i32
  }
  func.func @transform_9(%arg0: i32) -> (i32, i32, i32) {
    %c0_i32 = arith.constant 0 : i32
    %c0_i32_0 = arith.constant 0 : i32
    %c0_i32_1 = arith.constant 0 : i32
    return %arg0, %c0_i32, %c0_i32_0 : i32, i32, i32
  }
  func.func @transform_10(%arg0: i32) -> (i32, i32, i32) {
    %c0_i32 = arith.constant 0 : i32
    %c0_i32_0 = arith.constant 0 : i32
    %c0_i32_1 = arith.constant 0 : i32
    return %arg0, %c0_i32, %c0_i32_0 : i32, i32, i32
  }
  func.func @transform_11(%arg0: i32) -> (i32, i32, i32) {
    %c0_i32 = arith.constant 0 : i32
    %c0_i32_0 = arith.constant 0 : i32
    %c0_i32_1 = arith.constant 0 : i32
    return %arg0, %c0_i32, %c0_i32_0 : i32, i32, i32
  }
  func.func @transform_12(%arg0: i32) -> (i32, i32, i32) {
    %c0_i32 = arith.constant 0 : i32
    %c0_i32_0 = arith.constant 0 : i32
    %c0_i32_1 = arith.constant 0 : i32
    return %arg0, %c0_i32, %c0_i32_0 : i32, i32, i32
  }
  func.func @transform_13(%arg0: i32) -> (i32, i32, i32) {
    %c0_i32 = arith.constant 0 : i32
    %c0_i32_0 = arith.constant 0 : i32
    %c0_i32_1 = arith.constant 0 : i32
    return %arg0, %c0_i32, %c0_i32_0 : i32, i32, i32
  }
  func.func @transform_14(%arg0: i32) -> (i32, i32, i32) {
    %c0_i32 = arith.constant 0 : i32
    %c0_i32_0 = arith.constant 0 : i32
    %c0_i32_1 = arith.constant 0 : i32
    return %arg0, %c0_i32, %c0_i32_0 : i32, i32, i32
  }
  func.func @transform_15(%arg0: i32) -> (i32, i32, i32) {
    %c0_i32 = arith.constant 0 : i32
    %c0_i32_0 = arith.constant 0 : i32
    %c0_i32_1 = arith.constant 0 : i32
    return %arg0, %c0_i32, %c0_i32_0 : i32, i32, i32
  }
  func.func @transform_16(%arg0: i32) -> (i32, i32, i32) {
    %c0_i32 = arith.constant 0 : i32
    %c0_i32_0 = arith.constant 0 : i32
    %c0_i32_1 = arith.constant 0 : i32
    return %arg0, %c0_i32, %c0_i32_0 : i32, i32, i32
  }
  func.func @transform_17(%arg0: i32) -> (i32, i32, i32) {
    %c0_i32 = arith.constant 0 : i32
    %c0_i32_0 = arith.constant 0 : i32
    %c0_i32_1 = arith.constant 0 : i32
    return %arg0, %c0_i32, %c0_i32_0 : i32, i32, i32
  }
  func.func @transform_18(%arg0: i32) -> (i32, i32, i32) {
    %c0_i32 = arith.constant 0 : i32
    %c0_i32_0 = arith.constant 0 : i32
    %c0_i32_1 = arith.constant 0 : i32
    return %arg0, %c0_i32, %c0_i32_0 : i32, i32, i32
  }
  func.func @transform_19(%arg0: i32) -> (i32, i32, i32) {
    %c0_i32 = arith.constant 0 : i32
    %c0_i32_0 = arith.constant 0 : i32
    %c0_i32_1 = arith.constant 0 : i32
    return %arg0, %c0_i32, %c0_i32_0 : i32, i32, i32
  }
  func.func @transform_20(%arg0: i32) -> (i32, i32, i32) {
    %c0_i32 = arith.constant 0 : i32
    %c0_i32_0 = arith.constant 0 : i32
    %c0_i32_1 = arith.constant 0 : i32
    return %arg0, %c0_i32, %c0_i32_0 : i32, i32, i32
  }
  func.func @transform_21(%arg0: i32) -> (i32, i32) {
    %c0_i32 = arith.constant 0 : i32
    %c0_i32_0 = arith.constant 0 : i32
    %c0_i32_1 = arith.constant 0 : i32
    return %c0_i32, %c0_i32_0 : i32, i32
  }
  func.func @transform_22(%arg0: i32) -> (i32, i32) {
    %c0_i32 = arith.constant 0 : i32
    %c0_i32_0 = arith.constant 0 : i32
    %c0_i32_1 = arith.constant 0 : i32
    return %c0_i32, %c0_i32_0 : i32, i32
  }
  func.func @transform_23(%arg0: i32) -> (i32, i32) {
    %c0_i32 = arith.constant 0 : i32
    %c0_i32_0 = arith.constant 0 : i32
    %c0_i32_1 = arith.constant 0 : i32
    return %c0_i32, %c0_i32_0 : i32, i32
  }
  func.func @transform_24(%arg0: i32) -> (i32, i32) {
    %c0_i32 = arith.constant 0 : i32
    %c0_i32_0 = arith.constant 0 : i32
    %c0_i32_1 = arith.constant 0 : i32
    return %c0_i32, %c0_i32_0 : i32, i32
  }
}

</mosaic_0001>

<llo_original>
// kernel: tpu_custom_call.1
$region0: #{tpu_custom_call.1}
  #allocation0 [shape = 'u32[]', space=smem, size = 0x4, offset = 0x4, fixed_abs, tag = 'smem constant byte address 0x4 - core index']
  #allocation1 [shape = 'u32[144,128]{1,0:T(1,128)}', space=vmem, size = 0x12000, scoped, tag = 'internal scratch']
  #allocation2 [shape = 'f32[16,32]{1,0:T(8,128)}', space=vmem, size = 0x2000, scoped, tag = 'scratch operand']
  %s0 = inlined_call_operand.hbm [shape: f32[16,32], index: 0, kind: input, shape index: {}]
  %s1 = inlined_call_operand.vmem [shape: f32[2,32,8], index: 1, kind: input, shape index: {}]
  %s2 = inlined_call_operand.hbm [shape: f32[32,32], index: 2, kind: input, shape index: {}]
  %s3 = inlined_call_operand.hbm [shape: f32[8,32], index: 3, kind: input, shape index: {}]
  %s4 = inlined_call_operand.vmem [shape: f32[2,16], index: 4, kind: input, shape index: {}]
  %s5 = inlined_call_operand.vmem [shape: f32[2,1,32], index: 5, kind: input, shape index: {}]
  %s6 = inlined_call_operand.vmem [shape: f32[2,1,32], index: 6, kind: input, shape index: {}]
  %s7 = inlined_call_operand.vmem [shape: f32[2,32,32], index: 7, kind: input, shape index: {}]
  %s8 = inlined_call_operand.vmem [shape: f32[2,1,32], index: 8, kind: input, shape index: {}]
  %s9 = inlined_call_operand.vmem [shape: f32[2,32,32], index: 9, kind: input, shape index: {}]
  %s10 = inlined_call_operand.vmem [shape: f32[2,1,32], index: 10, kind: input, shape index: {}]
  %s11 = inlined_call_operand.vmem [shape: f32[2,32,32], index: 11, kind: input, shape index: {}]
  %s12 = inlined_call_operand.vmem [shape: f32[2,1,32], index: 12, kind: input, shape index: {}]
  %s13 = inlined_call_operand.vmem [shape: f32[2,32,32], index: 13, kind: input, shape index: {}]
  %s14 = inlined_call_operand.vmem [shape: f32[2,1,32], index: 14, kind: input, shape index: {}]
  %s15 = inlined_call_operand.vmem [shape: f32[2,1,32], index: 15, kind: input, shape index: {}]
  %s16 = inlined_call_operand.hbm [shape: f32[2,1,32], index: 16, kind: input, shape index: {}]
  %s17 = inlined_call_operand.hbm [shape: f32[2,32,64], index: 17, kind: input, shape index: {}]
  %s18 = inlined_call_operand.hbm [shape: f32[2,1,64], index: 18, kind: input, shape index: {}]
  %s19 = inlined_call_operand.vmem [shape: f32[2,64,32], index: 19, kind: input, shape index: {}]
  %s20 = inlined_call_operand.vmem [shape: f32[2,1,32], index: 20, kind: input, shape index: {}]
  %s21 = inlined_call_operand.vmem [shape: f32[1,32], index: 21, kind: input, shape index: {}]
  %s22 = inlined_call_operand.vmem [shape: f32[1,32], index: 22, kind: input, shape index: {}]
  %s23 = inlined_call_operand.vmem [shape: f32[32,16], index: 23, kind: input, shape index: {}]
  %s24 = inlined_call_operand.hbm [shape: f32[2,16], index: 24, kind: output, shape index: {}]
  %s25 = sld [smem:[#allocation0]]
  $region161: #{tpu_custom_call.1} parent=0
    _
  %s27 = ssub.s32 1, %s25
  %s28 = scalar_select 0, %s27, %s25
  $region1: #{tpu_custom_call.1} parent=0
    #allocation3 [shape = 'u8[8192]{0}', space=vmem, size = 0x2000, scoped, tag = 'input window, operand 0, single buffered']
    #allocation4 [shape = 's32[2]{0}', space=sflag, size = 0x8, scoped, tag = 'scoped memory for tpu_custom_call.1']
    #allocation5 [shape = 's32[2]{0}', space=sflag, size = 0x8, scoped, tag = 'scoped memory for tpu_custom_call.1']
    #allocation6 [shape = 'u8[16384]{0}', space=vmem, size = 0x4000, scoped, tag = 'input window, operand 2, single buffered']
    #allocation7 [shape = 's32[1]{0}', space=sflag, size = 0x4, scoped, tag = 'scoped memory for tpu_custom_call.1']
    #allocation8 [shape = 'u8[4096]{0}', space=vmem, size = 0x1000, scoped, tag = 'input window, operand 3, single buffered']
    #allocation9 [shape = 'u8[1024]{0}', space=vmem, size = 0x400, scoped, tag = 'input window, operand 16']
    #allocation10 [shape = 's32[2]{0}', space=sflag, size = 0x8, scoped, tag = 'scoped memory for tpu_custom_call.1']
    #allocation11 [shape = 'u8[32768]{0}', space=vmem, size = 0x8000, scoped, tag = 'input window, operand 17']
    #allocation12 [shape = 'u8[1024]{0}', space=vmem, size = 0x400, scoped, tag = 'input window, operand 18']
    #allocation13 [shape = 's32[2]{0}', space=sflag, size = 0x8, scoped, tag = 'scoped memory for tpu_custom_call.1']
    #allocation14 [shape = 'u8[1024]{0}', space=vmem, size = 0x400, scoped, tag = 'output window, operand 0, single buffered']
    %29 = vsyncpa [#allocation4], 0
    %30 = vsyncpa [#allocation7], 0
    %31 = vsyncpa [#allocation10], 0
    %s32 = scalar_lea.sflag [#allocation10], 1
    %33 = vsyncpa %s32, 0
    %34 = vsyncpa [#allocation13], 0
    %s35 = scalar_lea.sflag [#allocation13], 1
    %36 = vsyncpa %s35, 0
    %37 = vsyncpa [#allocation5], 0
    loop: start=0, step=1, limit=4
    $region2: #{tpu_custom_call.1} parent=1 // loop_pre_header
      _
    $region3: #{tpu_custom_call.1} parent=1 // loop_header
      %s39 = sphi 0, %s43
      %p40 = scmp.ge.s32.totalorder %s39, 4
      %s47 = sphi 0, %s47
      %s49 = sphi 0, %s47
      %s50 = sphi 0, %s49
      %s64 = sphi 0, %s50
      %s68 = sphi 0, %s68
      %s70 = sphi 0, %s68
      %s71 = sphi 0, %s70
      %s85 = sphi 0, %s71
      %s89 = sphi 0, %s89
      %s91 = sphi 0, %s89
      %s92 = sphi 0, %s91
      %s106 = sphi 0, %s92
      %s110 = sphi 0, %s110
      %s112 = sphi 0, %s110
      %s113 = sphi 0, %s112
      %s127 = sphi 0, %s113
      %s131 = sphi 0, %s131
      %s133 = sphi 0, %s131
      %s134 = sphi 0, %s133
      %s148 = sphi 0, %s134
      %s154 = sphi 0, %s156
      %s157 = sphi 0, %s154
      %s158 = sphi 0, %s157
      %s174 = sphi 0, %s158
      %s180 = sphi 0, %s182
      %s183 = sphi 0, %s180
      %s184 = sphi 0, %s183
      %s200 = sphi 0, %s184
      %s206 = sphi 0, %s208
      %s209 = sphi 0, %s206
      %s210 = sphi 0, %s209
      %s226 = sphi 0, %s210
      %s232 = sphi 0, %s234
      %s235 = sphi 0, %s232
      %s236 = sphi 0, %s235
      %s252 = sphi 0, %s236
      %s258 = sphi 0, %s260
      %s261 = sphi 0, %s258
      %s262 = sphi 0, %s261
      %s278 = sphi 0, %s262
      %s284 = sphi 0, %s286
      %s287 = sphi 0, %s284
      %s288 = sphi 0, %s287
      %s304 = sphi 0, %s288
      %s310 = sphi 0, %s312
      %s313 = sphi 0, %s310
      %s314 = sphi 0, %s313
      %s330 = sphi 0, %s314
      %s336 = sphi 0, %s338
      %s339 = sphi 0, %s336
      %s340 = sphi 0, %s339
      %s356 = sphi 0, %s340
      %s362 = sphi 0, %s364
      %s365 = sphi 0, %s362
      %s366 = sphi 0, %s365
      %s382 = sphi 0, %s366
      %s388 = sphi 0, %s390
      %s391 = sphi 0, %s388
      %s392 = sphi 0, %s391
      %s408 = sphi 0, %s392
      %s414 = sphi 0, %s416
      %s417 = sphi 0, %s414
      %s418 = sphi 0, %s417
      %s434 = sphi 0, %s418
      %s440 = sphi 0, %s442
      %s443 = sphi 0, %s440
      %s444 = sphi 0, %s443
      %s460 = sphi 0, %s444
      %s466 = sphi 0, %s468
      %s469 = sphi 0, %s466
      %s470 = sphi 0, %s469
      %s486 = sphi 0, %s470
      %s492 = sphi 0, %s494
      %s495 = sphi 0, %s492
      %s496 = sphi 0, %s495
      %s512 = sphi 0, %s496
      %s518 = sphi 0, %s520
      %s521 = sphi 0, %s518
      %s522 = sphi 0, %s521
      %s538 = sphi 0, %s522
      %s544 = sphi 0, %s546
      %s547 = sphi 0, %s544
      %s548 = sphi 0, %s547
      %s564 = sphi 0, %s548
      %s568 = sphi 0, %s568
      %s570 = sphi 0, %s568
      %s571 = sphi 0, %s570
      %s585 = sphi 0, %s571
      %s589 = sphi 0, %s589
      %s591 = sphi 0, %s589
      %s592 = sphi 0, %s591
      %s606 = sphi 0, %s592
      %s610 = sphi 0, %s610
      %s612 = sphi 0, %s610
      %s613 = sphi 0, %s612
      %s627 = sphi 0, %s613
      %s631 = sphi 0, %s631
      %s633 = sphi 0, %s631
      %s634 = sphi 0, %s633
      %s648 = sphi 0, %s634
    $region4: #{tpu_custom_call.1} parent=1 // loop_header_branch
      %42 = sbr.rel (%p40) target = $region8
    $region5: #{tpu_custom_call.1} parent=1 // loop_body
      %s44 = ssub.s32 %s39, 1
      %s45 = ssub.s32 %s39, 2
      %s46 = sadd.s32 %s39, 1
      %s48 = sadd.s32 %s47, 1
      %p51 = scmp.eq.s32.totalorder %s39, 1
      %p52 = scmp.ne.s32.totalorder %s47, %s49
      %p53 = scmp.eq.s32.totalorder %s39, 0
      %p54 = por %p52, %p53
      %p55 = scmp.ne.s32.totalorder %s47, %s49
      %p56 = scmp.eq.s32.totalorder %s44, 1
      %p57 = por %p55, %p56
      %p58 = scmp.ne.s32.totalorder %s49, %s50
      %p59 = scmp.eq.s32.totalorder %s44, 0
      %p60 = por %p58, %p59
      %p61 = scmp.ne.s32.totalorder %s49, %s50
      %p62 = scmp.eq.s32.totalorder %s45, 1
      %p63 = por %p61, %p62
      %p65 = scmp.ne.s32.totalorder %s50, %s64
      %p66 = scmp.eq.s32.totalorder %s45, 0
      %p67 = por %p65, %p66
      %s69 = sadd.s32 %s68, 1
      %p72 = scmp.eq.s32.totalorder %s39, 1
      %p73 = scmp.ne.s32.totalorder %s68, %s70
      %p74 = scmp.eq.s32.totalorder %s39, 0
      %p75 = por %p73, %p74
      %p76 = scmp.ne.s32.totalorder %s68, %s70
      %p77 = scmp.eq.s32.totalorder %s44, 1
      %p78 = por %p76, %p77
      %p79 = scmp.ne.s32.totalorder %s70, %s71
      %p80 = scmp.eq.s32.totalorder %s44, 0
      %p81 = por %p79, %p80
      %p82 = scmp.ne.s32.totalorder %s70, %s71
      %p83 = scmp.eq.s32.totalorder %s45, 1
      %p84 = por %p82, %p83
      %p86 = scmp.ne.s32.totalorder %s71, %s85
      %p87 = scmp.eq.s32.totalorder %s45, 0
      %p88 = por %p86, %p87
      %s90 = sadd.s32 %s89, 1
      %p93 = scmp.eq.s32.totalorder %s39, 1
      %p94 = scmp.ne.s32.totalorder %s89, %s91
      %p95 = scmp.eq.s32.totalorder %s39, 0
      %p96 = por %p94, %p95
      %p97 = scmp.ne.s32.totalorder %s89, %s91
      %p98 = scmp.eq.s32.totalorder %s44, 1
      %p99 = por %p97, %p98
      %p100 = scmp.ne.s32.totalorder %s91, %s92
      %p101 = scmp.eq.s32.totalorder %s44, 0
      %p102 = por %p100, %p101
      %p103 = scmp.ne.s32.totalorder %s91, %s92
      %p104 = scmp.eq.s32.totalorder %s45, 1
      %p105 = por %p103, %p104
      %p107 = scmp.ne.s32.totalorder %s92, %s106
      %p108 = scmp.eq.s32.totalorder %s45, 0
      %p109 = por %p107, %p108
      %s111 = sadd.s32 %s110, 1
      %p114 = scmp.eq.s32.totalorder %s39, 1
      %p115 = scmp.ne.s32.totalorder %s110, %s112
      %p116 = scmp.eq.s32.totalorder %s39, 0
      %p117 = por %p115, %p116
      %p118 = scmp.ne.s32.totalorder %s110, %s112
      %p119 = scmp.eq.s32.totalorder %s44, 1
      %p120 = por %p118, %p119
      %p121 = scmp.ne.s32.totalorder %s112, %s113
      %p122 = scmp.eq.s32.totalorder %s44, 0
      %p123 = por %p121, %p122
      %p124 = scmp.ne.s32.totalorder %s112, %s113
      %p125 = scmp.eq.s32.totalorder %s45, 1
      %p126 = por %p124, %p125
      %p128 = scmp.ne.s32.totalorder %s113, %s127
      %p129 = scmp.eq.s32.totalorder %s45, 0
      %p130 = por %p128, %p129
      %s132 = sadd.s32 %s131, 1
      %p135 = scmp.eq.s32.totalorder %s39, 1
      %p136 = scmp.ne.s32.totalorder %s131, %s133
      %p137 = scmp.eq.s32.totalorder %s39, 0
      %p138 = por %p136, %p137
      %p139 = scmp.ne.s32.totalorder %s131, %s133
      %p140 = scmp.eq.s32.totalorder %s44, 1
      %p141 = por %p139, %p140
      %p142 = scmp.ne.s32.totalorder %s133, %s134
      %p143 = scmp.eq.s32.totalorder %s44, 0
      %p144 = por %p142, %p143
      %p145 = scmp.ne.s32.totalorder %s133, %s134
      %p146 = scmp.eq.s32.totalorder %s45, 1
      %p147 = por %p145, %p146
      %p149 = scmp.ne.s32.totalorder %s134, %s148
      %p150 = scmp.eq.s32.totalorder %s45, 0
      %p151 = por %p149, %p150
      %s152 = ssub.s32 %s39, %s46
      %p153 = scmp.eq.s32.totalorder %s152, 0
      %s155 = sadd.s32 %s154, 1
      %s156 = scalar_select %p153, %s154, %s155
      %p159 = pneg %p153
      %p160 = scmp.eq.s32.totalorder %s39, 1
      %p161 = por %p159, %p160
      %p162 = scmp.ne.s32.totalorder %s154, %s157
      %p163 = scmp.eq.s32.totalorder %s39, 0
      %p164 = por %p162, %p163
      %p165 = scmp.ne.s32.totalorder %s154, %s157
      %p166 = scmp.eq.s32.totalorder %s44, 1
      %p167 = por %p165, %p166
      %p168 = scmp.ne.s32.totalorder %s157, %s158
      %p169 = scmp.eq.s32.totalorder %s44, 0
      %p170 = por %p168, %p169
      %p171 = scmp.ne.s32.totalorder %s157, %s158
      %p172 = scmp.eq.s32.totalorder %s45, 1
      %p173 = por %p171, %p172
      %p175 = scmp.ne.s32.totalorder %s158, %s174
      %p176 = scmp.eq.s32.totalorder %s45, 0
      %p177 = por %p175, %p176
      %s178 = ssub.s32 %s39, %s46
      %p179 = scmp.eq.s32.totalorder %s178, 0
      %s181 = sadd.s32 %s180, 1
      %s182 = scalar_select %p179, %s180, %s181
      %p185 = pneg %p179
      %p186 = scmp.eq.s32.totalorder %s39, 1
      %p187 = por %p185, %p186
      %p188 = scmp.ne.s32.totalorder %s180, %s183
      %p189 = scmp.eq.s32.totalorder %s39, 0
      %p190 = por %p188, %p189
      %p191 = scmp.ne.s32.totalorder %s180, %s183
      %p192 = scmp.eq.s32.totalorder %s44, 1
      %p193 = por %p191, %p192
      %p194 = scmp.ne.s32.totalorder %s183, %s184
      %p195 = scmp.eq.s32.totalorder %s44, 0
      %p196 = por %p194, %p195
      %p197 = scmp.ne.s32.totalorder %s183, %s184
      %p198 = scmp.eq.s32.totalorder %s45, 1
      %p199 = por %p197, %p198
      %p201 = scmp.ne.s32.totalorder %s184, %s200
      %p202 = scmp.eq.s32.totalorder %s45, 0
      %p203 = por %p201, %p202
      %s204 = ssub.s32 %s39, %s46
      %p205 = scmp.eq.s32.totalorder %s204, 0
      %s207 = sadd.s32 %s206, 1
      %s208 = scalar_select %p205, %s206, %s207
      %p211 = pneg %p205
      %p212 = scmp.eq.s32.totalorder %s39, 1
      %p213 = por %p211, %p212
      %p214 = scmp.ne.s32.totalorder %s206, %s209
      %p215 = scmp.eq.s32.totalorder %s39, 0
      %p216 = por %p214, %p215
      %p217 = scmp.ne.s32.totalorder %s206, %s209
      %p218 = scmp.eq.s32.totalorder %s44, 1
      %p219 = por %p217, %p218
      %p220 = scmp.ne.s32.totalorder %s209, %s210
      %p221 = scmp.eq.s32.totalorder %s44, 0
      %p222 = por %p220, %p221
      %p223 = scmp.ne.s32.totalorder %s209, %s210
      %p224 = scmp.eq.s32.totalorder %s45, 1
      %p225 = por %p223, %p224
      %p227 = scmp.ne.s32.totalorder %s210, %s226
      %p228 = scmp.eq.s32.totalorder %s45, 0
      %p229 = por %p227, %p228
      %s230 = ssub.s32 %s39, %s46
      %p231 = scmp.eq.s32.totalorder %s230, 0
      %s233 = sadd.s32 %s232, 1
      %s234 = scalar_select %p231, %s232, %s233
      %p237 = pneg %p231
      %p238 = scmp.eq.s32.totalorder %s39, 1
      %p239 = por %p237, %p238
      %p240 = scmp.ne.s32.totalorder %s232, %s235
      %p241 = scmp.eq.s32.totalorder %s39, 0
      %p242 = por %p240, %p241
      %p243 = scmp.ne.s32.totalorder %s232, %s235
      %p244 = scmp.eq.s32.totalorder %s44, 1
      %p245 = por %p243, %p244
      %p246 = scmp.ne.s32.totalorder %s235, %s236
      %p247 = scmp.eq.s32.totalorder %s44, 0
      %p248 = por %p246, %p247
      %p249 = scmp.ne.s32.totalorder %s235, %s236
      %p250 = scmp.eq.s32.totalorder %s45, 1
      %p251 = por %p249, %p250
      %p253 = scmp.ne.s32.totalorder %s236, %s252
      %p254 = scmp.eq.s32.totalorder %s45, 0
      %p255 = por %p253, %p254
      %s256 = ssub.s32 %s39, %s46
      %p257 = scmp.eq.s32.totalorder %s256, 0
      %s259 = sadd.s32 %s258, 1
      %s260 = scalar_select %p257, %s258, %s259
      %p263 = pneg %p257
      %p264 = scmp.eq.s32.totalorder %s39, 1
      %p265 = por %p263, %p264
      %p266 = scmp.ne.s32.totalorder %s258, %s261
      %p267 = scmp.eq.s32.totalorder %s39, 0
      %p268 = por %p266, %p267
      %p269 = scmp.ne.s32.totalorder %s258, %s261
      %p270 = scmp.eq.s32.totalorder %s44, 1
      %p271 = por %p269, %p270
      %p272 = scmp.ne.s32.totalorder %s261, %s262
      %p273 = scmp.eq.s32.totalorder %s44, 0
      %p274 = por %p272, %p273
      %p275 = scmp.ne.s32.totalorder %s261, %s262
      %p276 = scmp.eq.s32.totalorder %s45, 1
      %p277 = por %p275, %p276
      %p279 = scmp.ne.s32.totalorder %s262, %s278
      %p280 = scmp.eq.s32.totalorder %s45, 0
      %p281 = por %p279, %p280
      %s282 = ssub.s32 %s39, %s46
      %p283 = scmp.eq.s32.totalorder %s282, 0
      %s285 = sadd.s32 %s284, 1
      %s286 = scalar_select %p283, %s284, %s285
      %p289 = pneg %p283
      %p290 = scmp.eq.s32.totalorder %s39, 1
      %p291 = por %p289, %p290
      %p292 = scmp.ne.s32.totalorder %s284, %s287
      %p293 = scmp.eq.s32.totalorder %s39, 0
      %p294 = por %p292, %p293
      %p295 = scmp.ne.s32.totalorder %s284, %s287
      %p296 = scmp.eq.s32.totalorder %s44, 1
      %p297 = por %p295, %p296
      %p298 = scmp.ne.s32.totalorder %s287, %s288
      %p299 = scmp.eq.s32.totalorder %s44, 0
      %p300 = por %p298, %p299
      %p301 = scmp.ne.s32.totalorder %s287, %s288
      %p302 = scmp.eq.s32.totalorder %s45, 1
      %p303 = por %p301, %p302
      %p305 = scmp.ne.s32.totalorder %s288, %s304
      %p306 = scmp.eq.s32.totalorder %s45, 0
      %p307 = por %p305, %p306
      %s308 = ssub.s32 %s39, %s46
      %p309 = scmp.eq.s32.totalorder %s308, 0
      %s311 = sadd.s32 %s310, 1
      %s312 = scalar_select %p309, %s310, %s311
      %p315 = pneg %p309
      %p316 = scmp.eq.s32.totalorder %s39, 1
      %p317 = por %p315, %p316
      %p318 = scmp.ne.s32.totalorder %s310, %s313
      %p319 = scmp.eq.s32.totalorder %s39, 0
      %p320 = por %p318, %p319
      %p321 = scmp.ne.s32.totalorder %s310, %s313
      %p322 = scmp.eq.s32.totalorder %s44, 1
      %p323 = por %p321, %p322
      %p324 = scmp.ne.s32.totalorder %s313, %s314
      %p325 = scmp.eq.s32.totalorder %s44, 0
      %p326 = por %p324, %p325
      %p327 = scmp.ne.s32.totalorder %s313, %s314
      %p328 = scmp.eq.s32.totalorder %s45, 1
      %p329 = por %p327, %p328
      %p331 = scmp.ne.s32.totalorder %s314, %s330
      %p332 = scmp.eq.s32.totalorder %s45, 0
      %p333 = por %p331, %p332
      %s334 = ssub.s32 %s39, %s46
      %p335 = scmp.eq.s32.totalorder %s334, 0
      %s337 = sadd.s32 %s336, 1
      %s338 = scalar_select %p335, %s336, %s337
      %p341 = pneg %p335
      %p342 = scmp.eq.s32.totalorder %s39, 1
      %p343 = por %p341, %p342
      %p344 = scmp.ne.s32.totalorder %s336, %s339
      %p345 = scmp.eq.s32.totalorder %s39, 0
      %p346 = por %p344, %p345
      %p347 = scmp.ne.s32.totalorder %s336, %s339
      %p348 = scmp.eq.s32.totalorder %s44, 1
      %p349 = por %p347, %p348
      %p350 = scmp.ne.s32.totalorder %s339, %s340
      %p351 = scmp.eq.s32.totalorder %s44, 0
      %p352 = por %p350, %p351
      %p353 = scmp.ne.s32.totalorder %s339, %s340
      %p354 = scmp.eq.s32.totalorder %s45, 1
      %p355 = por %p353, %p354
      %p357 = scmp.ne.s32.totalorder %s340, %s356
      %p358 = scmp.eq.s32.totalorder %s45, 0
      %p359 = por %p357, %p358
      %s360 = ssub.s32 %s39, %s46
      %p361 = scmp.eq.s32.totalorder %s360, 0
      %s363 = sadd.s32 %s362, 1
      %s364 = scalar_select %p361, %s362, %s363
      %p367 = pneg %p361
      %p368 = scmp.eq.s32.totalorder %s39, 1
      %p369 = por %p367, %p368
      %p370 = scmp.ne.s32.totalorder %s362, %s365
      %p371 = scmp.eq.s32.totalorder %s39, 0
      %p372 = por %p370, %p371
      %p373 = scmp.ne.s32.totalorder %s362, %s365
      %p374 = scmp.eq.s32.totalorder %s44, 1
      %p375 = por %p373, %p374
      %p376 = scmp.ne.s32.totalorder %s365, %s366
      %p377 = scmp.eq.s32.totalorder %s44, 0
      %p378 = por %p376, %p377
      %p379 = scmp.ne.s32.totalorder %s365, %s366
      %p380 = scmp.eq.s32.totalorder %s45, 1
      %p381 = por %p379, %p380
      %p383 = scmp.ne.s32.totalorder %s366, %s382
      %p384 = scmp.eq.s32.totalorder %s45, 0
      %p385 = por %p383, %p384
      %s386 = ssub.s32 %s39, %s46
      %p387 = scmp.eq.s32.totalorder %s386, 0
      %s389 = sadd.s32 %s388, 1
      %s390 = scalar_select %p387, %s388, %s389
      %p393 = pneg %p387
      %p394 = scmp.eq.s32.totalorder %s39, 1
      %p395 = por %p393, %p394
      %p396 = scmp.ne.s32.totalorder %s388, %s391
      %p397 = scmp.eq.s32.totalorder %s39, 0
      %p398 = por %p396, %p397
      %p399 = scmp.ne.s32.totalorder %s388, %s391
      %p400 = scmp.eq.s32.totalorder %s44, 1
      %p401 = por %p399, %p400
      %p402 = scmp.ne.s32.totalorder %s391, %s392
      %p403 = scmp.eq.s32.totalorder %s44, 0
      %p404 = por %p402, %p403
      %p405 = scmp.ne.s32.totalorder %s391, %s392
      %p406 = scmp.eq.s32.totalorder %s45, 1
      %p407 = por %p405, %p406
      %p409 = scmp.ne.s32.totalorder %s392, %s408
      %p410 = scmp.eq.s32.totalorder %s45, 0
      %p411 = por %p409, %p410
      %s412 = ssub.s32 %s39, %s46
      %p413 = scmp.eq.s32.totalorder %s412, 0
      %s415 = sadd.s32 %s414, 1
      %s416 = scalar_select %p413, %s414, %s415
      %p419 = pneg %p413
      %p420 = scmp.eq.s32.totalorder %s39, 1
      %p421 = por %p419, %p420
      %p422 = scmp.ne.s32.totalorder %s414, %s417
      %p423 = scmp.eq.s32.totalorder %s39, 0
      %p424 = por %p422, %p423
      %p425 = scmp.ne.s32.totalorder %s414, %s417
      %p426 = scmp.eq.s32.totalorder %s44, 1
      %p427 = por %p425, %p426
      %p428 = scmp.ne.s32.totalorder %s417, %s418
      %p429 = scmp.eq.s32.totalorder %s44, 0
      %p430 = por %p428, %p429
      %p431 = scmp.ne.s32.totalorder %s417, %s418
      %p432 = scmp.eq.s32.totalorder %s45, 1
      %p433 = por %p431, %p432
      %p435 = scmp.ne.s32.totalorder %s418, %s434
      %p436 = scmp.eq.s32.totalorder %s45, 0
      %p437 = por %p435, %p436
      %s438 = ssub.s32 %s39, %s46
      %p439 = scmp.eq.s32.totalorder %s438, 0
      %s441 = sadd.s32 %s440, 1
      %s442 = scalar_select %p439, %s440, %s441
      %p445 = pneg %p439
      %p446 = scmp.eq.s32.totalorder %s39, 1
      %p447 = por %p445, %p446
      %p448 = scmp.ne.s32.totalorder %s440, %s443
      %p449 = scmp.eq.s32.totalorder %s39, 0
      %p450 = por %p448, %p449
      %p451 = scmp.ne.s32.totalorder %s440, %s443
      %p452 = scmp.eq.s32.totalorder %s44, 1
      %p453 = por %p451, %p452
      %p454 = scmp.ne.s32.totalorder %s443, %s444
      %p455 = scmp.eq.s32.totalorder %s44, 0
      %p456 = por %p454, %p455
      %p457 = scmp.ne.s32.totalorder %s443, %s444
      %p458 = scmp.eq.s32.totalorder %s45, 1
      %p459 = por %p457, %p458
      %p461 = scmp.ne.s32.totalorder %s444, %s460
      %p462 = scmp.eq.s32.totalorder %s45, 0
      %p463 = por %p461, %p462
      %s464 = ssub.s32 %s39, %s46
      %p465 = scmp.eq.s32.totalorder %s464, 0
      %s467 = sadd.s32 %s466, 1
      %s468 = scalar_select %p465, %s466, %s467
      %p471 = pneg %p465
      %p472 = scmp.eq.s32.totalorder %s39, 1
      %p473 = por %p471, %p472
      %p474 = scmp.ne.s32.totalorder %s466, %s469
      %p475 = scmp.eq.s32.totalorder %s39, 0
      %p476 = por %p474, %p475
      %p477 = scmp.ne.s32.totalorder %s466, %s469
      %p478 = scmp.eq.s32.totalorder %s44, 1
      %p479 = por %p477, %p478
      %p480 = scmp.ne.s32.totalorder %s469, %s470
      %p481 = scmp.eq.s32.totalorder %s44, 0
      %p482 = por %p480, %p481
      %p483 = scmp.ne.s32.totalorder %s469, %s470
      %p484 = scmp.eq.s32.totalorder %s45, 1
      %p485 = por %p483, %p484
      %p487 = scmp.ne.s32.totalorder %s470, %s486
      %p488 = scmp.eq.s32.totalorder %s45, 0
      %p489 = por %p487, %p488
      %s490 = ssub.s32 %s39, %s46
      %p491 = scmp.eq.s32.totalorder %s490, 0
      %s493 = sadd.s32 %s492, 1
      %s494 = scalar_select %p491, %s492, %s493
      %p497 = pneg %p491
      %p498 = scmp.eq.s32.totalorder %s39, 1
      %p499 = por %p497, %p498
      %p500 = scmp.ne.s32.totalorder %s492, %s495
      %p501 = scmp.eq.s32.totalorder %s39, 0
      %p502 = por %p500, %p501
      %p503 = scmp.ne.s32.totalorder %s492, %s495
      %p504 = scmp.eq.s32.totalorder %s44, 1
      %p505 = por %p503, %p504
      %p506 = scmp.ne.s32.totalorder %s495, %s496
      %p507 = scmp.eq.s32.totalorder %s44, 0
      %p508 = por %p506, %p507
      %p509 = scmp.ne.s32.totalorder %s495, %s496
      %p510 = scmp.eq.s32.totalorder %s45, 1
      %p511 = por %p509, %p510
      %p513 = scmp.ne.s32.totalorder %s496, %s512
      %p514 = scmp.eq.s32.totalorder %s45, 0
      %p515 = por %p513, %p514
      %s516 = ssub.s32 %s39, %s46
      %p517 = scmp.eq.s32.totalorder %s516, 0
      %s519 = sadd.s32 %s518, 1
      %s520 = scalar_select %p517, %s518, %s519
      %p523 = pneg %p517
      %p524 = scmp.eq.s32.totalorder %s39, 1
      %p525 = por %p523, %p524
      %p526 = scmp.ne.s32.totalorder %s518, %s521
      %p527 = scmp.eq.s32.totalorder %s39, 0
      %p528 = por %p526, %p527
      %p529 = scmp.ne.s32.totalorder %s518, %s521
      %p530 = scmp.eq.s32.totalorder %s44, 1
      %p531 = por %p529, %p530
      %p532 = scmp.ne.s32.totalorder %s521, %s522
      %p533 = scmp.eq.s32.totalorder %s44, 0
      %p534 = por %p532, %p533
      %p535 = scmp.ne.s32.totalorder %s521, %s522
      %p536 = scmp.eq.s32.totalorder %s45, 1
      %p537 = por %p535, %p536
      %p539 = scmp.ne.s32.totalorder %s522, %s538
      %p540 = scmp.eq.s32.totalorder %s45, 0
      %p541 = por %p539, %p540
      %s542 = ssub.s32 %s39, %s46
      %p543 = scmp.eq.s32.totalorder %s542, 0
      %s545 = sadd.s32 %s544, 1
      %s546 = scalar_select %p543, %s544, %s545
      %p549 = pneg %p543
      %p550 = scmp.eq.s32.totalorder %s39, 1
      %p551 = por %p549, %p550
      %p552 = scmp.ne.s32.totalorder %s544, %s547
      %p553 = scmp.eq.s32.totalorder %s39, 0
      %p554 = por %p552, %p553
      %p555 = scmp.ne.s32.totalorder %s544, %s547
      %p556 = scmp.eq.s32.totalorder %s44, 1
      %p557 = por %p555, %p556
      %p558 = scmp.ne.s32.totalorder %s547, %s548
      %p559 = scmp.eq.s32.totalorder %s44, 0
      %p560 = por %p558, %p559
      %p561 = scmp.ne.s32.totalorder %s547, %s548
      %p562 = scmp.eq.s32.totalorder %s45, 1
      %p563 = por %p561, %p562
      %p565 = scmp.ne.s32.totalorder %s548, %s564
      %p566 = scmp.eq.s32.totalorder %s45, 0
      %p567 = por %p565, %p566
      %s569 = sadd.s32 %s568, 1
      %p572 = scmp.eq.s32.totalorder %s39, 1
      %p573 = scmp.ne.s32.totalorder %s568, %s570
      %p574 = scmp.eq.s32.totalorder %s39, 0
      %p575 = por %p573, %p574
      %p576 = scmp.ne.s32.totalorder %s568, %s570
      %p577 = scmp.eq.s32.totalorder %s44, 1
      %p578 = por %p576, %p577
      %p579 = scmp.ne.s32.totalorder %s570, %s571
      %p580 = scmp.eq.s32.totalorder %s44, 0
      %p581 = por %p579, %p580
      %p582 = scmp.ne.s32.totalorder %s570, %s571
      %p583 = scmp.eq.s32.totalorder %s45, 1
      %p584 = por %p582, %p583
      %p586 = scmp.ne.s32.totalorder %s571, %s585
      %p587 = scmp.eq.s32.totalorder %s45, 0
      %p588 = por %p586, %p587
      %s590 = sadd.s32 %s589, 1
      %p593 = scmp.eq.s32.totalorder %s39, 1
      %p594 = scmp.ne.s32.totalorder %s589, %s591
      %p595 = scmp.eq.s32.totalorder %s39, 0
      %p596 = por %p594, %p595
      %p597 = scmp.ne.s32.totalorder %s589, %s591
      %p598 = scmp.eq.s32.totalorder %s44, 1
      %p599 = por %p597, %p598
      %p600 = scmp.ne.s32.totalorder %s591, %s592
      %p601 = scmp.eq.s32.totalorder %s44, 0
      %p602 = por %p600, %p601
      %p603 = scmp.ne.s32.totalorder %s591, %s592
      %p604 = scmp.eq.s32.totalorder %s45, 1
      %p605 = por %p603, %p604
      %p607 = scmp.ne.s32.totalorder %s592, %s606
      %p608 = scmp.eq.s32.totalorder %s45, 0
      %p609 = por %p607, %p608
      %s611 = sadd.s32 %s610, 1
      %p614 = scmp.eq.s32.totalorder %s39, 1
      %p615 = scmp.ne.s32.totalorder %s610, %s612
      %p616 = scmp.eq.s32.totalorder %s39, 0
      %p617 = por %p615, %p616
      %p618 = scmp.ne.s32.totalorder %s610, %s612
      %p619 = scmp.eq.s32.totalorder %s44, 1
      %p620 = por %p618, %p619
      %p621 = scmp.ne.s32.totalorder %s612, %s613
      %p622 = scmp.eq.s32.totalorder %s44, 0
      %p623 = por %p621, %p622
      %p624 = scmp.ne.s32.totalorder %s612, %s613
      %p625 = scmp.eq.s32.totalorder %s45, 1
      %p626 = por %p624, %p625
      %p628 = scmp.ne.s32.totalorder %s613, %s627
      %p629 = scmp.eq.s32.totalorder %s45, 0
      %p630 = por %p628, %p629
      %s632 = sadd.s32 %s631, 1
      %p635 = scmp.eq.s32.totalorder %s39, 1
      %p636 = scmp.ne.s32.totalorder %s631, %s633
      %p637 = scmp.eq.s32.totalorder %s39, 0
      %p638 = por %p636, %p637
      %p639 = scmp.ne.s32.totalorder %s631, %s633
      %p640 = scmp.eq.s32.totalorder %s44, 1
      %p641 = por %p639, %p640
      %p642 = scmp.ne.s32.totalorder %s633, %s634
      %p643 = scmp.eq.s32.totalorder %s44, 0
      %p644 = por %p642, %p643
      %p645 = scmp.ne.s32.totalorder %s633, %s634
      %p646 = scmp.eq.s32.totalorder %s45, 1
      %p647 = por %p645, %p646
      %p649 = scmp.ne.s32.totalorder %s634, %s648
      %p650 = scmp.eq.s32.totalorder %s45, 0
      %p651 = por %p649, %p650
      %p652 = scmp.le.s32.totalorder 1, %s39
      %p653 = scmp.lt.s32.totalorder %s39, 3
      %p654 = pnand %p652, %p653
      %p655 = pneg %p654
      // Predicated region
      $region9: #{tpu_custom_call.1} parent=5 // pred_check
        _
      $region10: #{tpu_custom_call.1} parent=5 // pred_check_branch
        %657 = sbr.rel (%p654) target = $region12
      $region11: #{tpu_custom_call.1} parent=5 // pred_region
        %s658 = ssub.s32 %s39, 1
        // Predicated region
        $region13: #{tpu_custom_call.1} parent=11 // pred_check
          %p659 = pneg %p60
        $region14: #{tpu_custom_call.1} parent=11 // pred_check_branch
          %661 = sbr.rel (%p659) target = $region16
        $region15: #{tpu_custom_call.1} parent=11 // pred_region
          %s663 = ssub.s32 256, 256
          %664 = vsyncadd [#allocation4], %s663
          %s665 = sshll.u32 [#allocation3], 4
          %s666 = int_to_ptr.vmem [resolvable:$true] %s665
          %671 = dma.hbm_to_vmem [thread:$0]  %s0, 256, %s666, [#allocation4], 128, 128, 8
        $region16: #{tpu_custom_call.1} parent=11 // pred_fallthru
          _
        // Predicated region
        $region17: #{tpu_custom_call.1} parent=11 // pred_check
          %p672 = pneg %p81
        $region18: #{tpu_custom_call.1} parent=11 // pred_check_branch
          %674 = sbr.rel (%p672) target = $region20
        $region19: #{tpu_custom_call.1} parent=11 // pred_region
          _
        $region20: #{tpu_custom_call.1} parent=11 // pred_fallthru
          _
        // Predicated region
        $region21: #{tpu_custom_call.1} parent=11 // pred_check
          %p675 = pneg %p102
        $region22: #{tpu_custom_call.1} parent=11 // pred_check_branch
          %677 = sbr.rel (%p675) target = $region24
        $region23: #{tpu_custom_call.1} parent=11 // pred_region
          %s679 = ssub.s32 512, 512
          %680 = vsyncadd [#allocation7], %s679
          %s681 = sshll.u32 [#allocation6], 4
          %s682 = int_to_ptr.vmem [resolvable:$true] %s681
          %687 = dma.hbm_to_vmem [thread:$0]  %s2, 512, %s682, [#allocation7], 128, 128, 8
        $region24: #{tpu_custom_call.1} parent=11 // pred_fallthru
          _
        // Predicated region
        $region25: #{tpu_custom_call.1} parent=11 // pred_check
          %p688 = pneg %p123
        $region26: #{tpu_custom_call.1} parent=11 // pred_check_branch
          %690 = sbr.rel (%p688) target = $region28
        $region27: #{tpu_custom_call.1} parent=11 // pred_region
          %s692 = ssub.s32 128, 128
          %693 = vsyncadd [#allocation7], %s692
          %s695 = sshll.u32 [#allocation8], 4
          %s696 = int_to_ptr.vmem [resolvable:$true] %s695
          %698 = dma.hbm_to_vmem [thread:$0]  %s3, 128, %s696, [#allocation7]
        $region28: #{tpu_custom_call.1} parent=11 // pred_fallthru
          _
        // Predicated region
        $region29: #{tpu_custom_call.1} parent=11 // pred_check
          %p699 = pneg %p144
        $region30: #{tpu_custom_call.1} parent=11 // pred_check_branch
          %701 = sbr.rel (%p699) target = $region32
        $region31: #{tpu_custom_call.1} parent=11 // pred_region
          _
        $region32: #{tpu_custom_call.1} parent=11 // pred_fallthru
          _
        // Predicated region
        $region33: #{tpu_custom_call.1} parent=11 // pred_check
          %p702 = pneg %p581
        $region34: #{tpu_custom_call.1} parent=11 // pred_check_branch
          %704 = sbr.rel (%p702) target = $region36
        $region35: #{tpu_custom_call.1} parent=11 // pred_region
          _
        $region36: #{tpu_custom_call.1} parent=11 // pred_fallthru
          _
        // Predicated region
        $region37: #{tpu_custom_call.1} parent=11 // pred_check
          %p705 = pneg %p602
        $region38: #{tpu_custom_call.1} parent=11 // pred_check_branch
          %707 = sbr.rel (%p705) target = $region40
        $region39: #{tpu_custom_call.1} parent=11 // pred_region
          _
        $region40: #{tpu_custom_call.1} parent=11 // pred_fallthru
          _
        // Predicated region
        $region41: #{tpu_custom_call.1} parent=11 // pred_check
          %p708 = pneg %p623
        $region42: #{tpu_custom_call.1} parent=11 // pred_check_branch
          %710 = sbr.rel (%p708) target = $region44
        $region43: #{tpu_custom_call.1} parent=11 // pred_region
          _
        $region44: #{tpu_custom_call.1} parent=11 // pred_fallthru
          _
      $region12: #{tpu_custom_call.1} parent=5 // pred_fallthru
        _
      %p711 = scmp.lt.s32.totalorder %s39, 2
      // Predicated region
      $region45: #{tpu_custom_call.1} parent=5 // pred_check
        %p712 = pneg %p711
      $region46: #{tpu_custom_call.1} parent=5 // pred_check_branch
        %714 = sbr.rel (%p712) target = $region48
      $region47: #{tpu_custom_call.1} parent=5 // pred_region
        // Predicated region
        $region49: #{tpu_custom_call.1} parent=47 // pred_check
          %p715 = pneg %p164
        $region50: #{tpu_custom_call.1} parent=47 // pred_check_branch
          %717 = sbr.rel (%p715) target = $region52
        $region51: #{tpu_custom_call.1} parent=47 // pred_region
          %p718 = scmp.lt.s32.totalorder %s39, 1
          %s719 = scalar_select %p718, %s39, 1
          %s720 = scalar_lea.vmem %s5, %s719
        $region52: #{tpu_custom_call.1} parent=47 // pred_fallthru
          _
        // Predicated region
        $region53: #{tpu_custom_call.1} parent=47 // pred_check
          %p721 = pneg %p190
        $region54: #{tpu_custom_call.1} parent=47 // pred_check_branch
          %723 = sbr.rel (%p721) target = $region56
        $region55: #{tpu_custom_call.1} parent=47 // pred_region
          %p724 = scmp.lt.s32.totalorder %s39, 1
          %s725 = scalar_select %p724, %s39, 1
          %s726 = scalar_lea.vmem %s6, %s725
        $region56: #{tpu_custom_call.1} parent=47 // pred_fallthru
          _
        // Predicated region
        $region57: #{tpu_custom_call.1} parent=47 // pred_check
          %p727 = pneg %p216
        $region58: #{tpu_custom_call.1} parent=47 // pred_check_branch
          %729 = sbr.rel (%p727) target = $region60
        $region59: #{tpu_custom_call.1} parent=47 // pred_region
          %p730 = scmp.lt.s32.totalorder %s39, 1
          %s731 = scalar_select %p730, %s39, 1
          %s732 = smul.addr %s731, 4
          %s733 = smul.addr %s732, 8
          %s734 = scalar_lea.vmem %s7, %s733
        $region60: #{tpu_custom_call.1} parent=47 // pred_fallthru
          _
        // Predicated region
        $region61: #{tpu_custom_call.1} parent=47 // pred_check
          %p735 = pneg %p242
        $region62: #{tpu_custom_call.1} parent=47 // pred_check_branch
          %737 = sbr.rel (%p735) target = $region64
        $region63: #{tpu_custom_call.1} parent=47 // pred_region
          %p738 = scmp.lt.s32.totalorder %s39, 1
          %s739 = scalar_select %p738, %s39, 1
          %s740 = scalar_lea.vmem %s8, %s739
        $region64: #{tpu_custom_call.1} parent=47 // pred_fallthru
          _
        // Predicated region
        $region65: #{tpu_custom_call.1} parent=47 // pred_check
          %p741 = pneg %p268
        $region66: #{tpu_custom_call.1} parent=47 // pred_check_branch
          %743 = sbr.rel (%p741) target = $region68
        $region67: #{tpu_custom_call.1} parent=47 // pred_region
          %p744 = scmp.lt.s32.totalorder %s39, 1
          %s745 = scalar_select %p744, %s39, 1
          %s746 = smul.addr %s745, 4
          %s747 = smul.addr %s746, 8
          %s748 = scalar_lea.vmem %s9, %s747
        $region68: #{tpu_custom_call.1} parent=47 // pred_fallthru
          _
        // Predicated region
        $region69: #{tpu_custom_call.1} parent=47 // pred_check
          %p749 = pneg %p294
        $region70: #{tpu_custom_call.1} parent=47 // pred_check_branch
          %751 = sbr.rel (%p749) target = $region72
        $region71: #{tpu_custom_call.1} parent=47 // pred_region
          %p752 = scmp.lt.s32.totalorder %s39, 1
          %s753 = scalar_select %p752, %s39, 1
          %s754 = scalar_lea.vmem %s10, %s753
        $region72: #{tpu_custom_call.1} parent=47 // pred_fallthru
          _
        // Predicated region
        $region73: #{tpu_custom_call.1} parent=47 // pred_check
          %p755 = pneg %p320
        $region74: #{tpu_custom_call.1} parent=47 // pred_check_branch
          %757 = sbr.rel (%p755) target = $region76
        $region75: #{tpu_custom_call.1} parent=47 // pred_region
          %p758 = scmp.lt.s32.totalorder %s39, 1
          %s759 = scalar_select %p758, %s39, 1
          %s760 = smul.addr %s759, 4
          %s761 = smul.addr %s760, 8
          %s762 = scalar_lea.vmem %s11, %s761
        $region76: #{tpu_custom_call.1} parent=47 // pred_fallthru
          _
        // Predicated region
        $region77: #{tpu_custom_call.1} parent=47 // pred_check
          %p763 = pneg %p346
        $region78: #{tpu_custom_call.1} parent=47 // pred_check_branch
          %765 = sbr.rel (%p763) target = $region80
        $region79: #{tpu_custom_call.1} parent=47 // pred_region
          %p766 = scmp.lt.s32.totalorder %s39, 1
          %s767 = scalar_select %p766, %s39, 1
          %s768 = scalar_lea.vmem %s12, %s767
        $region80: #{tpu_custom_call.1} parent=47 // pred_fallthru
          _
        // Predicated region
        $region81: #{tpu_custom_call.1} parent=47 // pred_check
          %p769 = pneg %p372
        $region82: #{tpu_custom_call.1} parent=47 // pred_check_branch
          %771 = sbr.rel (%p769) target = $region84
        $region83: #{tpu_custom_call.1} parent=47 // pred_region
          %p772 = scmp.lt.s32.totalorder %s39, 1
          %s773 = scalar_select %p772, %s39, 1
          %s774 = smul.addr %s773, 4
          %s775 = smul.addr %s774, 8
          %s776 = scalar_lea.vmem %s13, %s775
        $region84: #{tpu_custom_call.1} parent=47 // pred_fallthru
          _
        // Predicated region
        $region85: #{tpu_custom_call.1} parent=47 // pred_check
          %p777 = pneg %p398
        $region86: #{tpu_custom_call.1} parent=47 // pred_check_branch
          %779 = sbr.rel (%p777) target = $region88
        $region87: #{tpu_custom_call.1} parent=47 // pred_region
          %p780 = scmp.lt.s32.totalorder %s39, 1
          %s781 = scalar_select %p780, %s39, 1
          %s782 = scalar_lea.vmem %s14, %s781
        $region88: #{tpu_custom_call.1} parent=47 // pred_fallthru
          _
        // Predicated region
        $region89: #{tpu_custom_call.1} parent=47 // pred_check
          %p783 = pneg %p424
        $region90: #{tpu_custom_call.1} parent=47 // pred_check_branch
          %785 = sbr.rel (%p783) target = $region92
        $region91: #{tpu_custom_call.1} parent=47 // pred_region
          %p786 = scmp.lt.s32.totalorder %s39, 1
          %s787 = scalar_select %p786, %s39, 1
          %s788 = scalar_lea.vmem %s15, %s787
        $region92: #{tpu_custom_call.1} parent=47 // pred_fallthru
          _
        // Predicated region
        $region93: #{tpu_custom_call.1} parent=47 // pred_check
          %p789 = pneg %p450
        $region94: #{tpu_custom_call.1} parent=47 // pred_check_branch
          %791 = sbr.rel (%p789) target = $region96
        $region95: #{tpu_custom_call.1} parent=47 // pred_region
          %s792 = sand.u32 %s39, 1
          %s793 = scalar_lea.sflag [#allocation10], %s792
          %s794 = sand.u32 %s440, 1
          %s795 = scalar_lea.vmem [#allocation9], %s794
          %s797 = ssub.s32 16, 16
          %798 = vsyncadd %s793, %s797
          %s799 = smul.addr %s39, 16
          %s800 = scalar_lea.hbm %s16, %s799
          %s802 = sshll.u32 %s795, 4
          %s803 = int_to_ptr.vmem [resolvable:$true] %s802
          %805 = dma.hbm_to_vmem [thread:$0]  %s800, 16, %s803, %s793
        $region96: #{tpu_custom_call.1} parent=47 // pred_fallthru
          _
        // Predicated region
        $region97: #{tpu_custom_call.1} parent=47 // pred_check
          %p806 = pneg %p476
        $region98: #{tpu_custom_call.1} parent=47 // pred_check_branch
          %808 = sbr.rel (%p806) target = $region100
        $region99: #{tpu_custom_call.1} parent=47 // pred_region
          %s809 = sand.u32 %s39, 1
          %s810 = scalar_lea.sflag [#allocation10], %s809
          %s811 = sand.u32 %s466, 1
          %s812 = smul.addr %s811, 32
          %s813 = scalar_lea.vmem [#allocation11], %s812
          %s815 = ssub.s32 512, 512
          %816 = vsyncadd %s810, %s815
          %s817 = smul.addr %s39, 4
          %s818 = smul.addr %s817, 128
          %s819 = scalar_lea.hbm %s17, %s818
          %s820 = sshll.u32 %s813, 4
          %s821 = int_to_ptr.vmem [resolvable:$true] %s820
          %826 = dma.hbm_to_vmem [thread:$0]  %s819, 512, %s821, %s810, 128, 128, 8
        $region100: #{tpu_custom_call.1} parent=47 // pred_fallthru
          _
        // Predicated region
        $region101: #{tpu_custom_call.1} parent=47 // pred_check
          %p827 = pneg %p502
        $region102: #{tpu_custom_call.1} parent=47 // pred_check_branch
          %829 = sbr.rel (%p827) target = $region104
        $region103: #{tpu_custom_call.1} parent=47 // pred_region
          %s830 = sand.u32 %s492, 1
          %s831 = scalar_lea.sflag [#allocation13], %s830
          %s832 = sand.u32 %s492, 1
          %s833 = scalar_lea.vmem [#allocation12], %s832
          %s835 = ssub.s32 16, 16
          %836 = vsyncadd %s831, %s835
          %s837 = smul.addr %s39, 16
          %s838 = scalar_lea.hbm %s18, %s837
          %s840 = sshll.u32 %s833, 4
          %s841 = int_to_ptr.vmem [resolvable:$true] %s840
          %843 = dma.hbm_to_vmem [thread:$0]  %s838, 16, %s841, %s831
        $region104: #{tpu_custom_call.1} parent=47 // pred_fallthru
          _
        // Predicated region
        $region105: #{tpu_custom_call.1} parent=47 // pred_check
          %p844 = pneg %p528
        $region106: #{tpu_custom_call.1} parent=47 // pred_check_branch
          %846 = sbr.rel (%p844) target = $region108
        $region107: #{tpu_custom_call.1} parent=47 // pred_region
          %p847 = scmp.lt.s32.totalorder %s39, 1
          %s848 = scalar_select %p847, %s39, 1
          %s849 = smul.addr %s848, 8
          %s850 = smul.addr %s849, 8
          %s851 = scalar_lea.vmem %s19, %s850
        $region108: #{tpu_custom_call.1} parent=47 // pred_fallthru
          _
        // Predicated region
        $region109: #{tpu_custom_call.1} parent=47 // pred_check
          %p852 = pneg %p554
        $region110: #{tpu_custom_call.1} parent=47 // pred_check_branch
          %854 = sbr.rel (%p852) target = $region112
        $region111: #{tpu_custom_call.1} parent=47 // pred_region
          %p855 = scmp.lt.s32.totalorder %s39, 1
          %s856 = scalar_select %p855, %s39, 1
          %s857 = scalar_lea.vmem %s20, %s856
        $region112: #{tpu_custom_call.1} parent=47 // pred_fallthru
          _
      $region48: #{tpu_custom_call.1} parent=5 // pred_fallthru
        _
      %p858 = scmp.le.s32.totalorder 1, %s39
      %p859 = scmp.lt.s32.totalorder %s39, 3
      %p860 = pnand %p858, %p859
      %p861 = pneg %p860
      // Predicated region
      $region113: #{tpu_custom_call.1} parent=5 // pred_check
        _
      $region114: #{tpu_custom_call.1} parent=5 // pred_check_branch
        %863 = sbr.rel (%p860) target = $region116
      $region115: #{tpu_custom_call.1} parent=5 // pred_region
        %s864 = ssub.s32 %s39, 1
        // Predicated region
        $region117: #{tpu_custom_call.1} parent=115 // pred_check
          %p865 = pneg %p60
        $region118: #{tpu_custom_call.1} parent=115 // pred_check_branch
          %867 = sbr.rel (%p865) target = $region120
        $region119: #{tpu_custom_call.1} parent=115 // pred_region
          %868 = dma.done [#allocation4], 256
        $region120: #{tpu_custom_call.1} parent=115 // pred_fallthru
          _
        // Predicated region
        $region121: #{tpu_custom_call.1} parent=115 // pred_check
          %p869 = pneg %p102
        $region122: #{tpu_custom_call.1} parent=115 // pred_check_branch
          %871 = sbr.rel (%p869) target = $region124
        $region123: #{tpu_custom_call.1} parent=115 // pred_region
          %872 = dma.done [#allocation7], 512
        $region124: #{tpu_custom_call.1} parent=115 // pred_fallthru
          _
        // Predicated region
        $region125: #{tpu_custom_call.1} parent=115 // pred_check
          %p873 = pneg %p123
        $region126: #{tpu_custom_call.1} parent=115 // pred_check_branch
          %875 = sbr.rel (%p873) target = $region128
        $region127: #{tpu_custom_call.1} parent=115 // pred_region
          %876 = dma.done [#allocation7], 128
        $region128: #{tpu_custom_call.1} parent=115 // pred_fallthru
          _
        %s877 = sand.u32 %s44, 1
        %s878 = scalar_lea.sflag [#allocation10], %s877
        %s879 = sand.u32 %s443, 1
        %s880 = scalar_lea.vmem [#allocation9], %s879
        // Predicated region
        $region129: #{tpu_custom_call.1} parent=115 // pred_check
          %p881 = pneg %p456
        $region130: #{tpu_custom_call.1} parent=115 // pred_check_branch
          %883 = sbr.rel (%p881) target = $region132
        $region131: #{tpu_custom_call.1} parent=115 // pred_region
          %884 = dma.done %s878, 16
        $region132: #{tpu_custom_call.1} parent=115 // pred_fallthru
          _
        %s885 = sand.u32 %s44, 1
        %s886 = scalar_lea.sflag [#allocation10], %s885
        %s887 = sand.u32 %s469, 1
        %s888 = smul.addr %s887, 32
        %s889 = scalar_lea.vmem [#allocation11], %s888
        // Predicated region
        $region133: #{tpu_custom_call.1} parent=115 // pred_check
          %p890 = pneg %p482
        $region134: #{tpu_custom_call.1} parent=115 // pred_check_branch
          %892 = sbr.rel (%p890) target = $region136
        $region135: #{tpu_custom_call.1} parent=115 // pred_region
          %893 = dma.done %s886, 512
        $region136: #{tpu_custom_call.1} parent=115 // pred_fallthru
          _
        %s894 = sand.u32 %s495, 1
        %s895 = scalar_lea.sflag [#allocation13], %s894
        %s896 = sand.u32 %s495, 1
        %s897 = scalar_lea.vmem [#allocation12], %s896
        // Predicated region
        $region137: #{tpu_custom_call.1} parent=115 // pred_check
          %p898 = pneg %p508
        $region138: #{tpu_custom_call.1} parent=115 // pred_check_branch
          %900 = sbr.rel (%p898) target = $region140
        $region139: #{tpu_custom_call.1} parent=115 // pred_region
          %901 = dma.done %s895, 16
        $region140: #{tpu_custom_call.1} parent=115 // pred_fallthru
          _
        %p902 = pneg %p60
        %p903 = pneg %p57
        %p904 = pneg %p81
        %p905 = pneg %p78
        %p906 = pneg %p102
        %p907 = pneg %p99
        %p908 = pneg %p123
        %p909 = pneg %p120
        %p910 = pneg %p144
        %p911 = pneg %p141
        %p912 = scmp.lt.s32.totalorder %s44, 1
        %s913 = scalar_select %p912, %s44, 1
        %s914 = scalar_lea.vmem %s5, %s913
        %p915 = pneg %p170
        %p916 = pneg %p167
        %p917 = scmp.lt.s32.totalorder %s44, 1
        %s918 = scalar_select %p917, %s44, 1
        %s919 = scalar_lea.vmem %s6, %s918
        %p920 = pneg %p196
        %p921 = pneg %p193
        %p922 = scmp.lt.s32.totalorder %s44, 1
        %s923 = scalar_select %p922, %s44, 1
        %s924 = smul.addr %s923, 4
        %s925 = smul.addr %s924, 8
        %s926 = scalar_lea.vmem %s7, %s925
        %p927 = pneg %p222
        %p928 = pneg %p219
        %p929 = scmp.lt.s32.totalorder %s44, 1
        %s930 = scalar_select %p929, %s44, 1
        %s931 = scalar_lea.vmem %s8, %s930
        %p932 = pneg %p248
        %p933 = pneg %p245
        %p934 = scmp.lt.s32.totalorder %s44, 1
        %s935 = scalar_select %p934, %s44, 1
        %s936 = smul.addr %s935, 4
        %s937 = smul.addr %s936, 8
        %s938 = scalar_lea.vmem %s9, %s937
        %p939 = pneg %p274
        %p940 = pneg %p271
        %p941 = scmp.lt.s32.totalorder %s44, 1
        %s942 = scalar_select %p941, %s44, 1
        %s943 = scalar_lea.vmem %s10, %s942
        %p944 = pneg %p300
        %p945 = pneg %p297
        %p946 = scmp.lt.s32.totalorder %s44, 1
        %s947 = scalar_select %p946, %s44, 1
        %s948 = smul.addr %s947, 4
        %s949 = smul.addr %s948, 8
        %s950 = scalar_lea.vmem %s11, %s949
        %p951 = pneg %p326
        %p952 = pneg %p323
        %p953 = scmp.lt.s32.totalorder %s44, 1
        %s954 = scalar_select %p953, %s44, 1
        %s955 = scalar_lea.vmem %s12, %s954
        %p956 = pneg %p352
        %p957 = pneg %p349
        %p958 = scmp.lt.s32.totalorder %s44, 1
        %s959 = scalar_select %p958, %s44, 1
        %s960 = smul.addr %s959, 4
        %s961 = smul.addr %s960, 8
        %s962 = scalar_lea.vmem %s13, %s961
        %p963 = pneg %p378
        %p964 = pneg %p375
        %p965 = scmp.lt.s32.totalorder %s44, 1
        %s966 = scalar_select %p965, %s44, 1
        %s967 = scalar_lea.vmem %s14, %s966
        %p968 = pneg %p404
        %p969 = pneg %p401
        %p970 = scmp.lt.s32.totalorder %s44, 1
        %s971 = scalar_select %p970, %s44, 1
        %s972 = scalar_lea.vmem %s15, %s971
        %p973 = pneg %p430
        %p974 = pneg %p427
        %s975 = sand.u32 %s44, 1
        %s976 = scalar_lea.sflag [#allocation10], %s975
        %s977 = sand.u32 %s443, 1
        %s978 = scalar_lea.vmem [#allocation9], %s977
        %p979 = pneg %p456
        %p980 = pneg %p453
        %s981 = sand.u32 %s44, 1
        %s982 = scalar_lea.sflag [#allocation10], %s981
        %s983 = sand.u32 %s469, 1
        %s984 = smul.addr %s983, 32
        %s985 = scalar_lea.vmem [#allocation11], %s984
        %p986 = pneg %p482
        %p987 = pneg %p479
        %s988 = sand.u32 %s495, 1
        %s989 = scalar_lea.sflag [#allocation13], %s988
        %s990 = sand.u32 %s495, 1
        %s991 = scalar_lea.vmem [#allocation12], %s990
        %p992 = pneg %p508
        %p993 = pneg %p505
        %p994 = scmp.lt.s32.totalorder %s44, 1
        %s995 = scalar_select %p994, %s44, 1
        %s996 = smul.addr %s995, 8
        %s997 = smul.addr %s996, 8
        %s998 = scalar_lea.vmem %s19, %s997
        %p999 = pneg %p534
        %p1000 = pneg %p531
        %p1001 = scmp.lt.s32.totalorder %s44, 1
        %s1002 = scalar_select %p1001, %s44, 1
        %s1003 = scalar_lea.vmem %s20, %s1002
        %p1004 = pneg %p560
        %p1005 = pneg %p557
        %p1006 = pneg %p581
        %p1007 = pneg %p578
        %p1008 = pneg %p602
        %p1009 = pneg %p599
        %p1010 = pneg %p623
        %p1011 = pneg %p620
        %p1012 = pneg %p644
        %p1013 = pneg %p641
        %p1014 = scmp.lt.s32.totalorder %s44, 1
        %s1015 = scalar_select %p1014, %s44, 1
        %s1016 = scalar_lea.vmem %s5, %s1015
        %p1017 = scmp.lt.s32.totalorder %s44, 1
        %s1018 = scalar_select %p1017, %s44, 1
        %s1019 = scalar_lea.vmem %s6, %s1018
        %p1020 = scmp.lt.s32.totalorder %s44, 1
        %s1021 = scalar_select %p1020, %s44, 1
        %s1022 = smul.addr %s1021, 4
        %s1023 = smul.addr %s1022, 8
        %s1024 = scalar_lea.vmem %s7, %s1023
        %p1025 = scmp.lt.s32.totalorder %s44, 1
        %s1026 = scalar_select %p1025, %s44, 1
        %s1027 = scalar_lea.vmem %s8, %s1026
        %p1028 = scmp.lt.s32.totalorder %s44, 1
        %s1029 = scalar_select %p1028, %s44, 1
        %s1030 = smul.addr %s1029, 4
        %s1031 = smul.addr %s1030, 8
        %s1032 = scalar_lea.vmem %s9, %s1031
        %p1033 = scmp.lt.s32.totalorder %s44, 1
        %s1034 = scalar_select %p1033, %s44, 1
        %s1035 = scalar_lea.vmem %s10, %s1034
        %p1036 = scmp.lt.s32.totalorder %s44, 1
        %s1037 = scalar_select %p1036, %s44, 1
        %s1038 = smul.addr %s1037, 4
        %s1039 = smul.addr %s1038, 8
        %s1040 = scalar_lea.vmem %s11, %s1039
        %p1041 = scmp.lt.s32.totalorder %s44, 1
        %s1042 = scalar_select %p1041, %s44, 1
        %s1043 = scalar_lea.vmem %s12, %s1042
        %p1044 = scmp.lt.s32.totalorder %s44, 1
        %s1045 = scalar_select %p1044, %s44, 1
        %s1046 = smul.addr %s1045, 4
        %s1047 = smul.addr %s1046, 8
        %s1048 = scalar_lea.vmem %s13, %s1047
        %p1049 = scmp.lt.s32.totalorder %s44, 1
        %s1050 = scalar_select %p1049, %s44, 1
        %s1051 = scalar_lea.vmem %s14, %s1050
        %p1052 = scmp.lt.s32.totalorder %s44, 1
        %s1053 = scalar_select %p1052, %s44, 1
        %s1054 = scalar_lea.vmem %s15, %s1053
        %p1055 = scmp.lt.s32.totalorder %s44, 1
        %s1056 = scalar_select %p1055, %s44, 1
        %s1057 = smul.addr %s1056, 8
        %s1058 = smul.addr %s1057, 8
        %s1059 = scalar_lea.vmem %s19, %s1058
        %p1060 = scmp.lt.s32.totalorder %s44, 1
        %s1061 = scalar_select %p1060, %s44, 1
        %s1062 = scalar_lea.vmem %s20, %s1061
        %p1063 = scmp.eq.s32.totalorder %s44, 0
        // Predicated region
        $region141: #{tpu_custom_call.1} parent=115 // pred_check
          %p1064 = pneg %p1063
        $region142: #{tpu_custom_call.1} parent=115 // pred_check_branch
          %1066 = sbr.rel (%p1064) target = $region144
        $region143: #{tpu_custom_call.1} parent=115 // pred_region
          %v1067 = vld [vmem:[#allocation3] sm:$0xff]
          %v1068 = vld [vmem:[#allocation3 + $0x8] sm:$0xff]
          %vm1069 = vcmask 261120
          %1070 = vst.msk [vmem:[#allocation2] sm:$0xff] %vm1069, %v1067
          %1071 = vst.msk [vmem:[#allocation2 + $0x8] sm:$0xff] %vm1069, %v1068
        $region144: #{tpu_custom_call.1} parent=115 // pred_fallthru
          _
        %v1072 = vld [vmem:[#allocation2] sm:$0xff]
        %v1073 = vld [vmem:[#allocation2 + $0x8] sm:$0xff]
        %v1074 = vld [vmem:[%s1016] sm:$0x1]
        %v1075 = vld [vmem:[%s1019] sm:$0x1]
        %vm1076 = vcmask 261120
        %v1077 = vsel %vm1076, %v1072, 0.0
        %1078 = vadd.xlane.f32.xlu0 %v1077
        %v1079 = vpop.xlane.xlu0 %1078
        %v1080 = vsel %vm1076, %v1073, 0.0
        %1081 = vadd.xlane.f32.xlu0 %v1080
        %v1082 = vpop.xlane.xlu0 %1081
        %v1083 = vrcp.pop 32.0
        %v1084 = vmul.f32 %v1079, %v1083
        %v1085 = vmul.f32 %v1082, %v1083
        %v1086 = vsub.f32 %v1072, %v1084
        %v1087 = vsub.f32 %v1073, %v1085
        %v1088 = vmul.f32 %v1086, %v1086
        %v1089 = vmul.f32 %v1087, %v1087
        %v1090 = vsel %vm1076, %v1088, 0.0
        %1091 = vadd.xlane.f32.xlu0 %v1090
        %v1092 = vpop.xlane.xlu0 %1091
        %v1093 = vsel %vm1076, %v1089, 0.0
        %1094 = vadd.xlane.f32.xlu0 %v1093
        %v1095 = vpop.xlane.xlu0 %1094
        %v1096 = vmul.f32 %v1092, %v1083
        %v1097 = vmul.f32 %v1095, %v1083
        %v1098 = vadd.f32 %v1096, 1e-05
        %v1099 = vadd.f32 %v1097, 1e-05
        %v1100 = vrsqrt.pop %v1098
        %v1101 = vrsqrt.pop %v1099
        %v1102 = vmul.f32 %v1086, %v1100
        %v1103 = vmul.f32 %v1087, %v1101
        %v1105 = vlaneseq
        %v1106 = vshrl.u32 %v1105, 7
        %v1107 = vsub.s32 0, %v1106
        %v1108 = vrot.slane %v1074, %v1107
        %v1110 = vmul.f32 %v1102, %v1108
        %v1111 = vmul.f32 %v1103, %v1108
        %v1113 = vlaneseq
        %v1114 = vshrl.u32 %v1113, 7
        %v1115 = vsub.s32 0, %v1114
        %v1116 = vrot.slane %v1075, %v1115
        %v1118 = vadd.f32 %v1110, %v1116
        %v1119 = vadd.f32 %v1111, %v1116
        %v1120 = vld [vmem:[%s1024] sm:$0xff]
        %v1121 = vld [vmem:[%s1024 + $0x8] sm:$0xff]
        %v1122 = vld [vmem:[%s1024 + $0x10] sm:$0xff]
        %v1123 = vld [vmem:[%s1024 + $0x18] sm:$0xff]
        %v1124 = vld [vmem:[%s1027] sm:$0x1]
        %v1126 = vlaneseq
        %v1127 = vshrl.u32 %v1126, 7
        %v1128 = vsub.s32 0, %v1127
        %v1129 = vrot.slane %v1124, %v1128
        %v1132 = vsel %vm1076, %v1118, 0
        %v1135 = vsel %vm1076, %v1119, 0
        %1137 = vmatprep.subr.mxu0 0.0
        %1138 = vmatpush1.msra.mxu0 0.0
        %1139 = vmatprep.subr.mxu0 0.0
        %1140 = vmatpush1.msra.mxu0 0.0
        %1141 = vmatprep.subr.mxu0 0.0
        %1142 = vmatpush1.msra.mxu0 0.0
        %1143 = vmatprep.subr.mxu0 0.0
        %1144 = vmatpush1.msra.mxu0 0.0
        %1145 = vmatprep.subr.mxu0 0.0
        %1146 = vmatpush1.msra.mxu0 0.0
        %1147 = vmatprep.subr.mxu0 0.0
        %1148 = vmatpush1.msra.mxu0 0.0
        %1149 = vmatprep.subr.mxu0 0.0
        %1150 = vmatpush1.msra.mxu0 0.0
        %1151 = vmatprep.subr.mxu0 0.0
        %1152 = vmatpush1.msra.mxu0 0.0
        %1153 = vmatprep.subr.mxu0 0.0
        %1154 = vmatpush1.msra.mxu0 0.0
        %1155 = vmatprep.subr.mxu0 0.0
        %1156 = vmatpush1.msra.mxu0 0.0
        %1157 = vmatprep.subr.mxu0 0.0
        %1158 = vmatpush1.msra.mxu0 0.0
        %1159 = vmatprep.subr.mxu0 0.0
        %1160 = vmatpush1.msra.mxu0 0.0
        %1161 = vmatprep.subr.mxu0 0.0
        %1162 = vmatpush1.msra.mxu0 %v1123
        %1163 = vmatprep.subr.mxu0 0.0
        %1164 = vmatpush1.msra.mxu0 %v1122
        %1165 = vmatprep.subr.mxu0 0.0
        %1166 = vmatpush1.msra.mxu0 %v1121
        %1167 = vmatprep.subr.mxu0 0.0
        %1168 = vmatpush1.msra.mxu0 %v1120
        %1169 = vmatprep.subr.mxu0 0.0
        %1170 = vmatpush2.msra.mxu0 0.0
        %1171 = vmatprep.subr.mxu0 0.0
        %1172 = vmatpush2.msra.mxu0 0.0
        %1173 = vmatprep.subr.mxu0 0.0
        %1174 = vmatpush2.msra.mxu0 0.0
        %1175 = vmatprep.subr.mxu0 0.0
        %1176 = vmatpush2.msra.mxu0 0.0
        %1177 = vmatprep.subr.mxu0 0.0
        %1178 = vmatpush2.msra.mxu0 0.0
        %1179 = vmatprep.subr.mxu0 0.0
        %1180 = vmatpush2.msra.mxu0 0.0
        %1181 = vmatprep.subr.mxu0 0.0
        %1182 = vmatpush2.msra.mxu0 0.0
        %1183 = vmatprep.subr.mxu0 0.0
        %1184 = vmatpush2.msra.mxu0 0.0
        %1185 = vmatprep.subr.mxu0 0.0
        %1186 = vmatpush2.msra.mxu0 0.0
        %1187 = vmatprep.subr.mxu0 0.0
        %1188 = vmatpush2.msra.mxu0 0.0
        %1189 = vmatprep.subr.mxu0 0.0
        %1190 = vmatpush2.msra.mxu0 0.0
        %1191 = vmatprep.subr.mxu0 0.0
        %1192 = vmatpush2.msra.mxu0 0.0
        %1193 = vmatprep.subr.mxu0 0.0
        %1194 = vmatpush2.msra.mxu0 0.0
        %1195 = vmatprep.subr.mxu0 0.0
        %1196 = vmatpush2.msra.mxu0 0.0
        %1197 = vmatprep.subr.mxu0 0.0
        %1198 = vmatpush2.msra.mxu0 0.0
        %1199 = vmatprep.subr.mxu0 0.0
        %1200 = vmatpush2.msra.mxu0 0.0
        %1201 = vmatprep.mubr.f32.mxu0 0.0
        %1202 = vmatmul.mubr.f32.gmra.mxu0 %v1132
        %v1203 = vpop.f32.mrf.mxu0
        %v1204 = vadd.f32 %v1129, %v1203
        %v1205 = vpop.f32.mrf.mxu0
        %1206 = vmatprep.mubr.f32.mxu0 0.0
        %1207 = vmatmul.mubr.f32.gmra.mxu0 %v1135
        %v1208 = vpop.f32.mrf.mxu0
        %v1209 = vadd.f32 %v1129, %v1208
        %v1210 = vpop.f32.mrf.mxu0
        %1211 = vdwg.mxu0
        %v1212 = vld [vmem:[%s1032] sm:$0xff]
        %v1213 = vld [vmem:[%s1032 + $0x8] sm:$0xff]
        %v1214 = vld [vmem:[%s1032 + $0x10] sm:$0xff]
        %v1215 = vld [vmem:[%s1032 + $0x18] sm:$0xff]
        %v1216 = vld [vmem:[%s1035] sm:$0x1]
        %v1218 = vlaneseq
        %v1219 = vshrl.u32 %v1218, 7
        %v1220 = vsub.s32 0, %v1219
        %v1221 = vrot.slane %v1216, %v1220
        %1223 = vmatprep.subr.mxu0 0.0
        %1224 = vmatpush1.msra.mxu0 0.0
        %1225 = vmatprep.subr.mxu0 0.0
        %1226 = vmatpush1.msra.mxu0 0.0
        %1227 = vmatprep.subr.mxu0 0.0
        %1228 = vmatpush1.msra.mxu0 0.0
        %1229 = vmatprep.subr.mxu0 0.0
        %1230 = vmatpush1.msra.mxu0 0.0
        %1231 = vmatprep.subr.mxu0 0.0
        %1232 = vmatpush1.msra.mxu0 0.0
        %1233 = vmatprep.subr.mxu0 0.0
        %1234 = vmatpush1.msra.mxu0 0.0
        %1235 = vmatprep.subr.mxu0 0.0
        %1236 = vmatpush1.msra.mxu0 0.0
        %1237 = vmatprep.subr.mxu0 0.0
        %1238 = vmatpush1.msra.mxu0 0.0
        %1239 = vmatprep.subr.mxu0 0.0
        %1240 = vmatpush1.msra.mxu0 0.0
        %1241 = vmatprep.subr.mxu0 0.0
        %1242 = vmatpush1.msra.mxu0 0.0
        %1243 = vmatprep.subr.mxu0 0.0
        %1244 = vmatpush1.msra.mxu0 0.0
        %1245 = vmatprep.subr.mxu0 0.0
        %1246 = vmatpush1.msra.mxu0 0.0
        %1247 = vmatprep.subr.mxu0 0.0
        %1248 = vmatpush1.msra.mxu0 %v1215
        %1249 = vmatprep.subr.mxu0 0.0
        %1250 = vmatpush1.msra.mxu0 %v1214
        %1251 = vmatprep.subr.mxu0 0.0
        %1252 = vmatpush1.msra.mxu0 %v1213
        %1253 = vmatprep.subr.mxu0 0.0
        %1254 = vmatpush1.msra.mxu0 %v1212
        %1255 = vmatprep.subr.mxu0 0.0
        %1256 = vmatpush2.msra.mxu0 0.0
        %1257 = vmatprep.subr.mxu0 0.0
        %1258 = vmatpush2.msra.mxu0 0.0
        %1259 = vmatprep.subr.mxu0 0.0
        %1260 = vmatpush2.msra.mxu0 0.0
        %1261 = vmatprep.subr.mxu0 0.0
        %1262 = vmatpush2.msra.mxu0 0.0
        %1263 = vmatprep.subr.mxu0 0.0
        %1264 = vmatpush2.msra.mxu0 0.0
        %1265 = vmatprep.subr.mxu0 0.0
        %1266 = vmatpush2.msra.mxu0 0.0
        %1267 = vmatprep.subr.mxu0 0.0
        %1268 = vmatpush2.msra.mxu0 0.0
        %1269 = vmatprep.subr.mxu0 0.0
        %1270 = vmatpush2.msra.mxu0 0.0
        %1271 = vmatprep.subr.mxu0 0.0
        %1272 = vmatpush2.msra.mxu0 0.0
        %1273 = vmatprep.subr.mxu0 0.0
        %1274 = vmatpush2.msra.mxu0 0.0
        %1275 = vmatprep.subr.mxu0 0.0
        %1276 = vmatpush2.msra.mxu0 0.0
        %1277 = vmatprep.subr.mxu0 0.0
        %1278 = vmatpush2.msra.mxu0 0.0
        %1279 = vmatprep.subr.mxu0 0.0
        %1280 = vmatpush2.msra.mxu0 0.0
        %1281 = vmatprep.subr.mxu0 0.0
        %1282 = vmatpush2.msra.mxu0 0.0
        %1283 = vmatprep.subr.mxu0 0.0
        %1284 = vmatpush2.msra.mxu0 0.0
        %1285 = vmatprep.subr.mxu0 0.0
        %1286 = vmatpush2.msra.mxu0 0.0
        %1287 = vmatprep.mubr.f32.mxu0 0.0
        %1288 = vmatmul.mubr.f32.gmra.mxu0 %v1132
        %v1289 = vpop.f32.mrf.mxu0
        %v1290 = vadd.f32 %v1221, %v1289
        %v1291 = vpop.f32.mrf.mxu0
        %1292 = vmatprep.mubr.f32.mxu0 0.0
        %1293 = vmatmul.mubr.f32.gmra.mxu0 %v1135
        %v1294 = vpop.f32.mrf.mxu0
        %v1295 = vadd.f32 %v1221, %v1294
        %v1296 = vpop.f32.mrf.mxu0
        %1297 = vdwg.mxu0
        %v1298 = vld [vmem:[%s1040] sm:$0xff]
        %v1299 = vld [vmem:[%s1040 + $0x8] sm:$0xff]
        %v1300 = vld [vmem:[%s1040 + $0x10] sm:$0xff]
        %v1301 = vld [vmem:[%s1040 + $0x18] sm:$0xff]
        %v1302 = vld [vmem:[%s1043] sm:$0x1]
        %v1304 = vlaneseq
        %v1305 = vshrl.u32 %v1304, 7
        %v1306 = vsub.s32 0, %v1305
        %v1307 = vrot.slane %v1302, %v1306
        %1309 = vmatprep.subr.mxu0 0.0
        %1310 = vmatpush1.msra.mxu0 0.0
        %1311 = vmatprep.subr.mxu0 0.0
        %1312 = vmatpush1.msra.mxu0 0.0
        %1313 = vmatprep.subr.mxu0 0.0
        %1314 = vmatpush1.msra.mxu0 0.0
        %1315 = vmatprep.subr.mxu0 0.0
        %1316 = vmatpush1.msra.mxu0 0.0
        %1317 = vmatprep.subr.mxu0 0.0
        %1318 = vmatpush1.msra.mxu0 0.0
        %1319 = vmatprep.subr.mxu0 0.0
        %1320 = vmatpush1.msra.mxu0 0.0
        %1321 = vmatprep.subr.mxu0 0.0
        %1322 = vmatpush1.msra.mxu0 0.0
        %1323 = vmatprep.subr.mxu0 0.0
        %1324 = vmatpush1.msra.mxu0 0.0
        %1325 = vmatprep.subr.mxu0 0.0
        %1326 = vmatpush1.msra.mxu0 0.0
        %1327 = vmatprep.subr.mxu0 0.0
        %1328 = vmatpush1.msra.mxu0 0.0
        %1329 = vmatprep.subr.mxu0 0.0
        %1330 = vmatpush1.msra.mxu0 0.0
        %1331 = vmatprep.subr.mxu0 0.0
        %1332 = vmatpush1.msra.mxu0 0.0
        %1333 = vmatprep.subr.mxu0 0.0
        %1334 = vmatpush1.msra.mxu0 %v1301
        %1335 = vmatprep.subr.mxu0 0.0
        %1336 = vmatpush1.msra.mxu0 %v1300
        %1337 = vmatprep.subr.mxu0 0.0
        %1338 = vmatpush1.msra.mxu0 %v1299
        %1339 = vmatprep.subr.mxu0 0.0
        %1340 = vmatpush1.msra.mxu0 %v1298
        %1341 = vmatprep.subr.mxu0 0.0
        %1342 = vmatpush2.msra.mxu0 0.0
        %1343 = vmatprep.subr.mxu0 0.0
        %1344 = vmatpush2.msra.mxu0 0.0
        %1345 = vmatprep.subr.mxu0 0.0
        %1346 = vmatpush2.msra.mxu0 0.0
        %1347 = vmatprep.subr.mxu0 0.0
        %1348 = vmatpush2.msra.mxu0 0.0
        %1349 = vmatprep.subr.mxu0 0.0
        %1350 = vmatpush2.msra.mxu0 0.0
        %1351 = vmatprep.subr.mxu0 0.0
        %1352 = vmatpush2.msra.mxu0 0.0
        %1353 = vmatprep.subr.mxu0 0.0
        %1354 = vmatpush2.msra.mxu0 0.0
        %1355 = vmatprep.subr.mxu0 0.0
        %1356 = vmatpush2.msra.mxu0 0.0
        %1357 = vmatprep.subr.mxu0 0.0
        %1358 = vmatpush2.msra.mxu0 0.0
        %1359 = vmatprep.subr.mxu0 0.0
        %1360 = vmatpush2.msra.mxu0 0.0
        %1361 = vmatprep.subr.mxu0 0.0
        %1362 = vmatpush2.msra.mxu0 0.0
        %1363 = vmatprep.subr.mxu0 0.0
        %1364 = vmatpush2.msra.mxu0 0.0
        %1365 = vmatprep.subr.mxu0 0.0
        %1366 = vmatpush2.msra.mxu0 0.0
        %1367 = vmatprep.subr.mxu0 0.0
        %1368 = vmatpush2.msra.mxu0 0.0
        %1369 = vmatprep.subr.mxu0 0.0
        %1370 = vmatpush2.msra.mxu0 0.0
        %1371 = vmatprep.subr.mxu0 0.0
        %1372 = vmatpush2.msra.mxu0 0.0
        %1373 = vmatprep.mubr.f32.mxu0 0.0
        %1374 = vmatmul.mubr.f32.gmra.mxu0 %v1132
        %v1375 = vpop.f32.mrf.mxu0
        %v1376 = vadd.f32 %v1307, %v1375
        %v1377 = vpop.f32.mrf.mxu0
        %1378 = vmatprep.mubr.f32.mxu0 0.0
        %1379 = vmatmul.mubr.f32.gmra.mxu0 %v1135
        %v1380 = vpop.f32.mrf.mxu0
        %v1381 = vadd.f32 %v1307, %v1380
        %v1382 = vpop.f32.mrf.mxu0
        %1383 = vdwg.mxu0
        %v1384 = vld [vmem:[#allocation6] sm:$0xff]
        %v1385 = vld [vmem:[#allocation6 + $0x8] sm:$0xff]
        %v1386 = vld [vmem:[#allocation6 + $0x10] sm:$0xff]
        %v1387 = vld [vmem:[#allocation6 + $0x18] sm:$0xff]
        %v1388 = vld [vmem:[#allocation8] sm:$0xff]
        %v1389 = vmul.f32 %v1204, %v1384
        %v1390 = vmul.f32 %v1204, %v1385
        %v1391 = vmul.f32 %v1204, %v1386
        %v1392 = vmul.f32 %v1204, %v1387
        %v1394 = vsel %vm1076, %v1389, 0
        %v1397 = vsel %vm1076, %v1390, 0
        %v1400 = vsel %vm1076, %v1391, 0
        %v1403 = vsel %vm1076, %v1392, 0
        %v1406 = vsel %vm1076, %v1290, 0
        %1408 = vmatprep.subr.mxu0 0.0
        %1409 = vmatpush1.xpose.msra.mxu0 0.0
        %1410 = vmatprep.subr.mxu0 0.0
        %1411 = vmatpush1.xpose.msra.mxu0 0.0
        %1412 = vmatprep.subr.mxu0 0.0
        %1413 = vmatpush1.xpose.msra.mxu0 0.0
        %1414 = vmatprep.subr.mxu0 0.0
        %1415 = vmatpush1.xpose.msra.mxu0 0.0
        %1416 = vmatprep.subr.mxu0 0.0
        %1417 = vmatpush1.xpose.msra.mxu0 0.0
        %1418 = vmatprep.subr.mxu0 0.0
        %1419 = vmatpush1.xpose.msra.mxu0 0.0
        %1420 = vmatprep.subr.mxu0 0.0
        %1421 = vmatpush1.xpose.msra.mxu0 0.0
        %1422 = vmatprep.subr.mxu0 0.0
        %1423 = vmatpush1.xpose.msra.mxu0 0.0
        %1424 = vmatprep.subr.mxu0 0.0
        %1425 = vmatpush1.xpose.msra.mxu0 0.0
        %1426 = vmatprep.subr.mxu0 0.0
        %1427 = vmatpush1.xpose.msra.mxu0 0.0
        %1428 = vmatprep.subr.mxu0 0.0
        %1429 = vmatpush1.xpose.msra.mxu0 0.0
        %1430 = vmatprep.subr.mxu0 0.0
        %1431 = vmatpush1.xpose.msra.mxu0 0.0
        %1432 = vmatprep.subr.mxu0 0.0
        %1433 = vmatpush1.xpose.msra.mxu0 0.0
        %1434 = vmatprep.subr.mxu0 0.0
        %1435 = vmatpush1.xpose.msra.mxu0 0.0
        %1436 = vmatprep.subr.mxu0 0.0
        %1437 = vmatpush1.xpose.msra.mxu0 0.0
        %1438 = vmatprep.subr.mxu0 0.0
        %1439 = vmatpush1.xpose.msra.mxu0 %v1406
        %1440 = vmatprep.subr.mxu0 0.0
        %1441 = vmatpush2.xpose.msra.mxu0 0.0
        %1442 = vmatprep.subr.mxu0 0.0
        %1443 = vmatpush2.xpose.msra.mxu0 0.0
        %1444 = vmatprep.subr.mxu0 0.0
        %1445 = vmatpush2.xpose.msra.mxu0 0.0
        %1446 = vmatprep.subr.mxu0 0.0
        %1447 = vmatpush2.xpose.msra.mxu0 0.0
        %1448 = vmatprep.subr.mxu0 0.0
        %1449 = vmatpush2.xpose.msra.mxu0 0.0
        %1450 = vmatprep.subr.mxu0 0.0
        %1451 = vmatpush2.xpose.msra.mxu0 0.0
        %1452 = vmatprep.subr.mxu0 0.0
        %1453 = vmatpush2.xpose.msra.mxu0 0.0
        %1454 = vmatprep.subr.mxu0 0.0
        %1455 = vmatpush2.xpose.msra.mxu0 0.0
        %1456 = vmatprep.subr.mxu0 0.0
        %1457 = vmatpush2.xpose.msra.mxu0 0.0
        %1458 = vmatprep.subr.mxu0 0.0
        %1459 = vmatpush2.xpose.msra.mxu0 0.0
        %1460 = vmatprep.subr.mxu0 0.0
        %1461 = vmatpush2.xpose.msra.mxu0 0.0
        %1462 = vmatprep.subr.mxu0 0.0
        %1463 = vmatpush2.xpose.msra.mxu0 0.0
        %1464 = vmatprep.subr.mxu0 0.0
        %1465 = vmatpush2.xpose.msra.mxu0 0.0
        %1466 = vmatprep.subr.mxu0 0.0
        %1467 = vmatpush2.xpose.msra.mxu0 0.0
        %1468 = vmatprep.subr.mxu0 0.0
        %1469 = vmatpush2.xpose.msra.mxu0 0.0
        %1470 = vmatprep.subr.mxu0 0.0
        %1471 = vmatpush2.xpose.msra.mxu0 0.0
        %1472 = vmatprep.mubr.f32.mxu0 0.0
        %1473 = vmatmul.mubr.f32.gmra.mxu0 %v1394
        %v1474 = vpop.f32.mrf.mxu0
        %v1475 = vadd.f32 0.0, %v1474
        %v1476 = vpop.f32.mrf.mxu0
        %1477 = vmatprep.mubr.f32.mxu0 0.0
        %1478 = vmatmul.mubr.f32.gmra.mxu0 %v1397
        %v1479 = vpop.f32.mrf.mxu0
        %v1480 = vadd.f32 0.0, %v1479
        %v1481 = vpop.f32.mrf.mxu0
        %1482 = vmatprep.mubr.f32.mxu0 0.0
        %1483 = vmatmul.mubr.f32.gmra.mxu0 %v1400
        %v1484 = vpop.f32.mrf.mxu0
        %v1485 = vadd.f32 0.0, %v1484
        %v1486 = vpop.f32.mrf.mxu0
        %1487 = vmatprep.mubr.f32.mxu0 0.0
        %1488 = vmatmul.mubr.f32.gmra.mxu0 %v1403
        %v1489 = vpop.f32.mrf.mxu0
        %v1490 = vadd.f32 0.0, %v1489
        %v1491 = vpop.f32.mrf.mxu0
        %1492 = vdwg.mxu0
        %v1493 = vmul.f32 %v1475, 0.35355338
        %v1494 = vmul.f32 %v1480, 0.35355338
        %v1495 = vmul.f32 %v1485, 0.35355338
        %v1496 = vmul.f32 %v1490, 0.35355338
        %v1497 = vld [vmem:[%s1] sm:$0xff]
        %v1498 = vld [vmem:[%s1 + $0x8] sm:$0xff]
        %v1499 = vld [vmem:[%s1 + $0x10] sm:$0xff]
        %v1500 = vld [vmem:[%s1 + $0x18] sm:$0xff]
        %v1501 = vadd.f32 %v1493, %v1497
        %v1502 = vadd.f32 %v1494, %v1498
        %v1503 = vadd.f32 %v1495, %v1499
        %v1504 = vadd.f32 %v1496, %v1500
        %vm1505 = vcmask 64512
        %v1506 = vsel %vm1505, %v1501, -inf
        %1507 = vmax.xlane.f32.xlu0 %v1506
        %v1508 = vpop.xlane.xlu0 %1507
        %v1509 = vsel %vm1505, %v1502, -inf
        %1510 = vmax.xlane.f32.xlu0 %v1509
        %v1511 = vpop.xlane.xlu0 %1510
        %v1512 = vsel %vm1505, %v1503, -inf
        %1513 = vmax.xlane.f32.xlu0 %v1512
        %v1514 = vpop.xlane.xlu0 %1513
        %v1515 = vsel %vm1505, %v1504, -inf
        %1516 = vmax.xlane.f32.xlu0 %v1515
        %v1517 = vpop.xlane.xlu0 %1516
        %v1518 = vsub.f32 %v1501, %v1508
        %v1519 = vsub.f32 %v1502, %v1511
        %v1520 = vsub.f32 %v1503, %v1514
        %v1521 = vsub.f32 %v1504, %v1517
        %v1522 = vmul.f32 %v1518, 1.442695
        %v1523 = vpow.pop %v1522
        %v1524 = vmul.f32 %v1519, 1.442695
        %v1525 = vpow.pop %v1524
        %v1526 = vmul.f32 %v1520, 1.442695
        %v1527 = vpow.pop %v1526
        %v1528 = vmul.f32 %v1521, 1.442695
        %v1529 = vpow.pop %v1528
        %v1530 = vsel %vm1505, %v1523, 0.0
        %1531 = vadd.xlane.f32.xlu0 %v1530
        %v1532 = vpop.xlane.xlu0 %1531
        %v1533 = vsel %vm1505, %v1525, 0.0
        %1534 = vadd.xlane.f32.xlu0 %v1533
        %v1535 = vpop.xlane.xlu0 %1534
        %v1536 = vsel %vm1505, %v1527, 0.0
        %1537 = vadd.xlane.f32.xlu0 %v1536
        %v1538 = vpop.xlane.xlu0 %1537
        %v1539 = vsel %vm1505, %v1529, 0.0
        %1540 = vadd.xlane.f32.xlu0 %v1539
        %v1541 = vpop.xlane.xlu0 %1540
        %v1542 = vrcp.pop %v1532
        %v1543 = vrcp.pop %v1535
        %v1544 = vrcp.pop %v1538
        %v1545 = vrcp.pop %v1541
        %v1546 = vmul.f32 %v1523, %v1542
        %v1547 = vmul.f32 %v1525, %v1543
        %v1548 = vmul.f32 %v1527, %v1544
        %v1549 = vmul.f32 %v1529, %v1545
        %v1551 = vsel %vm1505, %v1546, 0
        %v1554 = vsel %vm1505, %v1547, 0
        %v1557 = vsel %vm1505, %v1548, 0
        %v1560 = vsel %vm1505, %v1549, 0
        %1562 = vmatprep.subr.mxu0 0.0
        %1563 = vmatpush1.msra.mxu0 0.0
        %1564 = vmatprep.subr.mxu0 0.0
        %1565 = vmatpush1.msra.mxu0 0.0
        %1566 = vmatprep.subr.mxu0 0.0
        %1567 = vmatpush1.msra.mxu0 0.0
        %1568 = vmatprep.subr.mxu0 0.0
        %1569 = vmatpush1.msra.mxu0 0.0
        %1570 = vmatprep.subr.mxu0 0.0
        %1571 = vmatpush1.msra.mxu0 0.0
        %1572 = vmatprep.subr.mxu0 0.0
        %1573 = vmatpush1.msra.mxu0 0.0
        %1574 = vmatprep.subr.mxu0 0.0
        %1575 = vmatpush1.msra.mxu0 0.0
        %1576 = vmatprep.subr.mxu0 0.0
        %1577 = vmatpush1.msra.mxu0 0.0
        %1578 = vmatprep.subr.mxu0 0.0
        %1579 = vmatpush1.msra.mxu0 0.0
        %1580 = vmatprep.subr.mxu0 0.0
        %1581 = vmatpush1.msra.mxu0 0.0
        %1582 = vmatprep.subr.mxu0 0.0
        %1583 = vmatpush1.msra.mxu0 0.0
        %1584 = vmatprep.subr.mxu0 0.0
        %1585 = vmatpush1.msra.mxu0 0.0
        %1586 = vmatprep.subr.mxu0 0.0
        %1587 = vmatpush1.msra.mxu0 0.0
        %1588 = vmatprep.subr.mxu0 0.0
        %1589 = vmatpush1.msra.mxu0 0.0
        %1590 = vmatprep.subr.mxu0 0.0
        %1591 = vmatpush1.msra.mxu0 0.0
        %1592 = vmatprep.subr.mxu0 0.0
        %1593 = vmatpush1.msra.mxu0 %v1376
        %1594 = vmatprep.subr.mxu0 0.0
        %1595 = vmatpush2.msra.mxu0 0.0
        %1596 = vmatprep.subr.mxu0 0.0
        %1597 = vmatpush2.msra.mxu0 0.0
        %1598 = vmatprep.subr.mxu0 0.0
        %1599 = vmatpush2.msra.mxu0 0.0
        %1600 = vmatprep.subr.mxu0 0.0
        %1601 = vmatpush2.msra.mxu0 0.0
        %1602 = vmatprep.subr.mxu0 0.0
        %1603 = vmatpush2.msra.mxu0 0.0
        %1604 = vmatprep.subr.mxu0 0.0
        %1605 = vmatpush2.msra.mxu0 0.0
        %1606 = vmatprep.subr.mxu0 0.0
        %1607 = vmatpush2.msra.mxu0 0.0
        %1608 = vmatprep.subr.mxu0 0.0
        %1609 = vmatpush2.msra.mxu0 0.0
        %1610 = vmatprep.subr.mxu0 0.0
        %1611 = vmatpush2.msra.mxu0 0.0
        %1612 = vmatprep.subr.mxu0 0.0
        %1613 = vmatpush2.msra.mxu0 0.0
        %1614 = vmatprep.subr.mxu0 0.0
        %1615 = vmatpush2.msra.mxu0 0.0
        %1616 = vmatprep.subr.mxu0 0.0
        %1617 = vmatpush2.msra.mxu0 0.0
        %1618 = vmatprep.subr.mxu0 0.0
        %1619 = vmatpush2.msra.mxu0 0.0
        %1620 = vmatprep.subr.mxu0 0.0
        %1621 = vmatpush2.msra.mxu0 0.0
        %1622 = vmatprep.subr.mxu0 0.0
        %1623 = vmatpush2.msra.mxu0 0.0
        %1624 = vmatprep.subr.mxu0 0.0
        %1625 = vmatpush2.msra.mxu0 0.0
        %1626 = vmatprep.mubr.f32.mxu0 0.0
        %1627 = vmatmul.mubr.f32.gmra.mxu0 %v1551
        %v1628 = vpop.f32.mrf.mxu0
        %v1629 = vadd.f32 0.0, %v1628
        %v1630 = vpop.f32.mrf.mxu0
        %1631 = vmatprep.mubr.f32.mxu0 0.0
        %1632 = vmatmul.mubr.f32.gmra.mxu0 %v1554
        %v1633 = vpop.f32.mrf.mxu0
        %v1634 = vadd.f32 0.0, %v1633
        %v1635 = vpop.f32.mrf.mxu0
        %1636 = vmatprep.mubr.f32.mxu0 0.0
        %1637 = vmatmul.mubr.f32.gmra.mxu0 %v1557
        %v1638 = vpop.f32.mrf.mxu0
        %v1639 = vadd.f32 0.0, %v1638
        %v1640 = vpop.f32.mrf.mxu0
        %1641 = vmatprep.mubr.f32.mxu0 0.0
        %1642 = vmatmul.mubr.f32.gmra.mxu0 %v1560
        %v1643 = vpop.f32.mrf.mxu0
        %v1644 = vadd.f32 0.0, %v1643
        %v1645 = vpop.f32.mrf.mxu0
        %1646 = vdwg.mxu0
        %v1647 = vmul.f32 %v1629, %v1384
        %v1648 = vmul.f32 %v1634, %v1385
        %v1649 = vmul.f32 %v1639, %v1386
        %v1650 = vmul.f32 %v1644, %v1387
        %v1652 = vsel %vm1076, %v1388, 0
        %1654 = vmatprep.subr.mxu0 0.0
        %1655 = vmatpush1.msra.mxu0 0.0
        %1656 = vmatprep.subr.mxu0 0.0
        %1657 = vmatpush1.msra.mxu0 0.0
        %1658 = vmatprep.subr.mxu0 0.0
        %1659 = vmatpush1.msra.mxu0 0.0
        %1660 = vmatprep.subr.mxu0 0.0
        %1661 = vmatpush1.msra.mxu0 0.0
        %1662 = vmatprep.subr.mxu0 0.0
        %1663 = vmatpush1.msra.mxu0 0.0
        %1664 = vmatprep.subr.mxu0 0.0
        %1665 = vmatpush1.msra.mxu0 0.0
        %1666 = vmatprep.subr.mxu0 0.0
        %1667 = vmatpush1.msra.mxu0 0.0
        %1668 = vmatprep.subr.mxu0 0.0
        %1669 = vmatpush1.msra.mxu0 0.0
        %1670 = vmatprep.subr.mxu0 0.0
        %1671 = vmatpush1.msra.mxu0 0.0
        %1672 = vmatprep.subr.mxu0 0.0
        %1673 = vmatpush1.msra.mxu0 0.0
        %1674 = vmatprep.subr.mxu0 0.0
        %1675 = vmatpush1.msra.mxu0 0.0
        %1676 = vmatprep.subr.mxu0 0.0
        %1677 = vmatpush1.msra.mxu0 0.0
        %1678 = vmatprep.subr.mxu0 0.0
        %1679 = vmatpush1.msra.mxu0 %v1650
        %1680 = vmatprep.subr.mxu0 0.0
        %1681 = vmatpush1.msra.mxu0 %v1649
        %1682 = vmatprep.subr.mxu0 0.0
        %1683 = vmatpush1.msra.mxu0 %v1648
        %1684 = vmatprep.subr.mxu0 0.0
        %1685 = vmatpush1.msra.mxu0 %v1647
        %1686 = vmatprep.subr.mxu0 0.0
        %1687 = vmatpush2.msra.mxu0 0.0
        %1688 = vmatprep.subr.mxu0 0.0
        %1689 = vmatpush2.msra.mxu0 0.0
        %1690 = vmatprep.subr.mxu0 0.0
        %1691 = vmatpush2.msra.mxu0 0.0
        %1692 = vmatprep.subr.mxu0 0.0
        %1693 = vmatpush2.msra.mxu0 0.0
        %1694 = vmatprep.subr.mxu0 0.0
        %1695 = vmatpush2.msra.mxu0 0.0
        %1696 = vmatprep.subr.mxu0 0.0
        %1697 = vmatpush2.msra.mxu0 0.0
        %1698 = vmatprep.subr.mxu0 0.0
        %1699 = vmatpush2.msra.mxu0 0.0
        %1700 = vmatprep.subr.mxu0 0.0
        %1701 = vmatpush2.msra.mxu0 0.0
        %1702 = vmatprep.subr.mxu0 0.0
        %1703 = vmatpush2.msra.mxu0 0.0
        %1704 = vmatprep.subr.mxu0 0.0
        %1705 = vmatpush2.msra.mxu0 0.0
        %1706 = vmatprep.subr.mxu0 0.0
        %1707 = vmatpush2.msra.mxu0 0.0
        %1708 = vmatprep.subr.mxu0 0.0
        %1709 = vmatpush2.msra.mxu0 0.0
        %1710 = vmatprep.subr.mxu0 0.0
        %1711 = vmatpush2.msra.mxu0 0.0
        %1712 = vmatprep.subr.mxu0 0.0
        %1713 = vmatpush2.msra.mxu0 0.0
        %1714 = vmatprep.subr.mxu0 0.0
        %1715 = vmatpush2.msra.mxu0 0.0
        %1716 = vmatprep.subr.mxu0 0.0
        %1717 = vmatpush2.msra.mxu0 0.0
        %1718 = vmatprep.mubr.f32.mxu0 0.0
        %1719 = vmatmul.mubr.f32.gmra.mxu0 %v1652
        %v1720 = vpop.f32.mrf.mxu0
        %v1721 = vadd.f32 0.0, %v1720
        %v1722 = vpop.f32.mrf.mxu0
        %1723 = vdwg.mxu0
        %v1724 = vmul.f32 %v1209, %v1384
        %v1725 = vmul.f32 %v1209, %v1385
        %v1726 = vmul.f32 %v1209, %v1386
        %v1727 = vmul.f32 %v1209, %v1387
        %v1729 = vsel %vm1076, %v1724, 0
        %v1732 = vsel %vm1076, %v1725, 0
        %v1735 = vsel %vm1076, %v1726, 0
        %v1738 = vsel %vm1076, %v1727, 0
        %v1741 = vsel %vm1076, %v1295, 0
        %1743 = vmatprep.subr.mxu0 0.0
        %1744 = vmatpush1.xpose.msra.mxu0 0.0
        %1745 = vmatprep.subr.mxu0 0.0
        %1746 = vmatpush1.xpose.msra.mxu0 0.0
        %1747 = vmatprep.subr.mxu0 0.0
        %1748 = vmatpush1.xpose.msra.mxu0 0.0
        %1749 = vmatprep.subr.mxu0 0.0
        %1750 = vmatpush1.xpose.msra.mxu0 0.0
        %1751 = vmatprep.subr.mxu0 0.0
        %1752 = vmatpush1.xpose.msra.mxu0 0.0
        %1753 = vmatprep.subr.mxu0 0.0
        %1754 = vmatpush1.xpose.msra.mxu0 0.0
        %1755 = vmatprep.subr.mxu0 0.0
        %1756 = vmatpush1.xpose.msra.mxu0 0.0
        %1757 = vmatprep.subr.mxu0 0.0
        %1758 = vmatpush1.xpose.msra.mxu0 0.0
        %1759 = vmatprep.subr.mxu0 0.0
        %1760 = vmatpush1.xpose.msra.mxu0 0.0
        %1761 = vmatprep.subr.mxu0 0.0
        %1762 = vmatpush1.xpose.msra.mxu0 0.0
        %1763 = vmatprep.subr.mxu0 0.0
        %1764 = vmatpush1.xpose.msra.mxu0 0.0
        %1765 = vmatprep.subr.mxu0 0.0
        %1766 = vmatpush1.xpose.msra.mxu0 0.0
        %1767 = vmatprep.subr.mxu0 0.0
        %1768 = vmatpush1.xpose.msra.mxu0 0.0
        %1769 = vmatprep.subr.mxu0 0.0
        %1770 = vmatpush1.xpose.msra.mxu0 0.0
        %1771 = vmatprep.subr.mxu0 0.0
        %1772 = vmatpush1.xpose.msra.mxu0 0.0
        %1773 = vmatprep.subr.mxu0 0.0
        %1774 = vmatpush1.xpose.msra.mxu0 %v1741
        %1775 = vmatprep.subr.mxu0 0.0
        %1776 = vmatpush2.xpose.msra.mxu0 0.0
        %1777 = vmatprep.subr.mxu0 0.0
        %1778 = vmatpush2.xpose.msra.mxu0 0.0
        %1779 = vmatprep.subr.mxu0 0.0
        %1780 = vmatpush2.xpose.msra.mxu0 0.0
        %1781 = vmatprep.subr.mxu0 0.0
        %1782 = vmatpush2.xpose.msra.mxu0 0.0
        %1783 = vmatprep.subr.mxu0 0.0
        %1784 = vmatpush2.xpose.msra.mxu0 0.0
        %1785 = vmatprep.subr.mxu0 0.0
        %1786 = vmatpush2.xpose.msra.mxu0 0.0
        %1787 = vmatprep.subr.mxu0 0.0
        %1788 = vmatpush2.xpose.msra.mxu0 0.0
        %1789 = vmatprep.subr.mxu0 0.0
        %1790 = vmatpush2.xpose.msra.mxu0 0.0
        %1791 = vmatprep.subr.mxu0 0.0
        %1792 = vmatpush2.xpose.msra.mxu0 0.0
        %1793 = vmatprep.subr.mxu0 0.0
        %1794 = vmatpush2.xpose.msra.mxu0 0.0
        %1795 = vmatprep.subr.mxu0 0.0
        %1796 = vmatpush2.xpose.msra.mxu0 0.0
        %1797 = vmatprep.subr.mxu0 0.0
        %1798 = vmatpush2.xpose.msra.mxu0 0.0
        %1799 = vmatprep.subr.mxu0 0.0
        %1800 = vmatpush2.xpose.msra.mxu0 0.0
        %1801 = vmatprep.subr.mxu0 0.0
        %1802 = vmatpush2.xpose.msra.mxu0 0.0
        %1803 = vmatprep.subr.mxu0 0.0
        %1804 = vmatpush2.xpose.msra.mxu0 0.0
        %1805 = vmatprep.subr.mxu0 0.0
        %1806 = vmatpush2.xpose.msra.mxu0 0.0
        %1807 = vmatprep.mubr.f32.mxu0 0.0
        %1808 = vmatmul.mubr.f32.gmra.mxu0 %v1729
        %v1809 = vpop.f32.mrf.mxu0
        %v1810 = vadd.f32 0.0, %v1809
        %v1811 = vpop.f32.mrf.mxu0
        %1812 = vmatprep.mubr.f32.mxu0 0.0
        %1813 = vmatmul.mubr.f32.gmra.mxu0 %v1732
        %v1814 = vpop.f32.mrf.mxu0
        %v1815 = vadd.f32 0.0, %v1814
        %v1816 = vpop.f32.mrf.mxu0
        %1817 = vmatprep.mubr.f32.mxu0 0.0
        %1818 = vmatmul.mubr.f32.gmra.mxu0 %v1735
        %v1819 = vpop.f32.mrf.mxu0
        %v1820 = vadd.f32 0.0, %v1819
        %v1821 = vpop.f32.mrf.mxu0
        %1822 = vmatprep.mubr.f32.mxu0 0.0
        %1823 = vmatmul.mubr.f32.gmra.mxu0 %v1738
        %v1824 = vpop.f32.mrf.mxu0
        %v1825 = vadd.f32 0.0, %v1824
        %v1826 = vpop.f32.mrf.mxu0
        %1827 = vdwg.mxu0
        %v1828 = vmul.f32 %v1810, 0.35355338
        %v1829 = vmul.f32 %v1815, 0.35355338
        %v1830 = vmul.f32 %v1820, 0.35355338
        %v1831 = vmul.f32 %v1825, 0.35355338
        %s1832 = scalar_lea.vmem %s1, 32
        %v1833 = vld [vmem:[%s1832] sm:$0xff]
        %v1834 = vld [vmem:[%s1832 + $0x8] sm:$0xff]
        %v1835 = vld [vmem:[%s1832 + $0x10] sm:$0xff]
        %v1836 = vld [vmem:[%s1832 + $0x18] sm:$0xff]
        %v1837 = vadd.f32 %v1828, %v1833
        %v1838 = vadd.f32 %v1829, %v1834
        %v1839 = vadd.f32 %v1830, %v1835
        %v1840 = vadd.f32 %v1831, %v1836
        %v1841 = vsel %vm1505, %v1837, -inf
        %1842 = vmax.xlane.f32.xlu0 %v1841
        %v1843 = vpop.xlane.xlu0 %1842
        %v1844 = vsel %vm1505, %v1838, -inf
        %1845 = vmax.xlane.f32.xlu0 %v1844
        %v1846 = vpop.xlane.xlu0 %1845
        %v1847 = vsel %vm1505, %v1839, -inf
        %1848 = vmax.xlane.f32.xlu0 %v1847
        %v1849 = vpop.xlane.xlu0 %1848
        %v1850 = vsel %vm1505, %v1840, -inf
        %1851 = vmax.xlane.f32.xlu0 %v1850
        %v1852 = vpop.xlane.xlu0 %1851
        %v1853 = vsub.f32 %v1837, %v1843
        %v1854 = vsub.f32 %v1838, %v1846
        %v1855 = vsub.f32 %v1839, %v1849
        %v1856 = vsub.f32 %v1840, %v1852
        %v1857 = vmul.f32 %v1853, 1.442695
        %v1858 = vpow.pop %v1857
        %v1859 = vmul.f32 %v1854, 1.442695
        %v1860 = vpow.pop %v1859
        %v1861 = vmul.f32 %v1855, 1.442695
        %v1862 = vpow.pop %v1861
        %v1863 = vmul.f32 %v1856, 1.442695
        %v1864 = vpow.pop %v1863
        %v1865 = vsel %vm1505, %v1858, 0.0
        %1866 = vadd.xlane.f32.xlu0 %v1865
        %v1867 = vpop.xlane.xlu0 %1866
        %v1868 = vsel %vm1505, %v1860, 0.0
        %1869 = vadd.xlane.f32.xlu0 %v1868
        %v1870 = vpop.xlane.xlu0 %1869
        %v1871 = vsel %vm1505, %v1862, 0.0
        %1872 = vadd.xlane.f32.xlu0 %v1871
        %v1873 = vpop.xlane.xlu0 %1872
        %v1874 = vsel %vm1505, %v1864, 0.0
        %1875 = vadd.xlane.f32.xlu0 %v1874
        %v1876 = vpop.xlane.xlu0 %1875
        %v1877 = vrcp.pop %v1867
        %v1878 = vrcp.pop %v1870
        %v1879 = vrcp.pop %v1873
        %v1880 = vrcp.pop %v1876
        %v1881 = vmul.f32 %v1858, %v1877
        %v1882 = vmul.f32 %v1860, %v1878
        %v1883 = vmul.f32 %v1862, %v1879
        %v1884 = vmul.f32 %v1864, %v1880
        %v1886 = vsel %vm1505, %v1881, 0
        %v1889 = vsel %vm1505, %v1882, 0
        %v1892 = vsel %vm1505, %v1883, 0
        %v1895 = vsel %vm1505, %v1884, 0
        %1897 = vmatprep.subr.mxu0 0.0
        %1898 = vmatpush1.msra.mxu0 0.0
        %1899 = vmatprep.subr.mxu0 0.0
        %1900 = vmatpush1.msra.mxu0 0.0
        %1901 = vmatprep.subr.mxu0 0.0
        %1902 = vmatpush1.msra.mxu0 0.0
        %1903 = vmatprep.subr.mxu0 0.0
        %1904 = vmatpush1.msra.mxu0 0.0
        %1905 = vmatprep.subr.mxu0 0.0
        %1906 = vmatpush1.msra.mxu0 0.0
        %1907 = vmatprep.subr.mxu0 0.0
        %1908 = vmatpush1.msra.mxu0 0.0
        %1909 = vmatprep.subr.mxu0 0.0
        %1910 = vmatpush1.msra.mxu0 0.0
        %1911 = vmatprep.subr.mxu0 0.0
        %1912 = vmatpush1.msra.mxu0 0.0
        %1913 = vmatprep.subr.mxu0 0.0
        %1914 = vmatpush1.msra.mxu0 0.0
        %1915 = vmatprep.subr.mxu0 0.0
        %1916 = vmatpush1.msra.mxu0 0.0
        %1917 = vmatprep.subr.mxu0 0.0
        %1918 = vmatpush1.msra.mxu0 0.0
        %1919 = vmatprep.subr.mxu0 0.0
        %1920 = vmatpush1.msra.mxu0 0.0
        %1921 = vmatprep.subr.mxu0 0.0
        %1922 = vmatpush1.msra.mxu0 0.0
        %1923 = vmatprep.subr.mxu0 0.0
        %1924 = vmatpush1.msra.mxu0 0.0
        %1925 = vmatprep.subr.mxu0 0.0
        %1926 = vmatpush1.msra.mxu0 0.0
        %1927 = vmatprep.subr.mxu0 0.0
        %1928 = vmatpush1.msra.mxu0 %v1381
        %1929 = vmatprep.subr.mxu0 0.0
        %1930 = vmatpush2.msra.mxu0 0.0
        %1931 = vmatprep.subr.mxu0 0.0
        %1932 = vmatpush2.msra.mxu0 0.0
        %1933 = vmatprep.subr.mxu0 0.0
        %1934 = vmatpush2.msra.mxu0 0.0
        %1935 = vmatprep.subr.mxu0 0.0
        %1936 = vmatpush2.msra.mxu0 0.0
        %1937 = vmatprep.subr.mxu0 0.0
        %1938 = vmatpush2.msra.mxu0 0.0
        %1939 = vmatprep.subr.mxu0 0.0
        %1940 = vmatpush2.msra.mxu0 0.0
        %1941 = vmatprep.subr.mxu0 0.0
        %1942 = vmatpush2.msra.mxu0 0.0
        %1943 = vmatprep.subr.mxu0 0.0
        %1944 = vmatpush2.msra.mxu0 0.0
        %1945 = vmatprep.subr.mxu0 0.0
        %1946 = vmatpush2.msra.mxu0 0.0
        %1947 = vmatprep.subr.mxu0 0.0
        %1948 = vmatpush2.msra.mxu0 0.0
        %1949 = vmatprep.subr.mxu0 0.0
        %1950 = vmatpush2.msra.mxu0 0.0
        %1951 = vmatprep.subr.mxu0 0.0
        %1952 = vmatpush2.msra.mxu0 0.0
        %1953 = vmatprep.subr.mxu0 0.0
        %1954 = vmatpush2.msra.mxu0 0.0
        %1955 = vmatprep.subr.mxu0 0.0
        %1956 = vmatpush2.msra.mxu0 0.0
        %1957 = vmatprep.subr.mxu0 0.0
        %1958 = vmatpush2.msra.mxu0 0.0
        %1959 = vmatprep.subr.mxu0 0.0
        %1960 = vmatpush2.msra.mxu0 0.0
        %1961 = vmatprep.mubr.f32.mxu0 0.0
        %1962 = vmatmul.mubr.f32.gmra.mxu0 %v1886
        %v1963 = vpop.f32.mrf.mxu0
        %v1964 = vadd.f32 0.0, %v1963
        %v1965 = vpop.f32.mrf.mxu0
        %1966 = vmatprep.mubr.f32.mxu0 0.0
        %1967 = vmatmul.mubr.f32.gmra.mxu0 %v1889
        %v1968 = vpop.f32.mrf.mxu0
        %v1969 = vadd.f32 0.0, %v1968
        %v1970 = vpop.f32.mrf.mxu0
        %1971 = vmatprep.mubr.f32.mxu0 0.0
        %1972 = vmatmul.mubr.f32.gmra.mxu0 %v1892
        %v1973 = vpop.f32.mrf.mxu0
        %v1974 = vadd.f32 0.0, %v1973
        %v1975 = vpop.f32.mrf.mxu0
        %1976 = vmatprep.mubr.f32.mxu0 0.0
        %1977 = vmatmul.mubr.f32.gmra.mxu0 %v1895
        %v1978 = vpop.f32.mrf.mxu0
        %v1979 = vadd.f32 0.0, %v1978
        %v1980 = vpop.f32.mrf.mxu0
        %1981 = vdwg.mxu0
        %v1982 = vmul.f32 %v1964, %v1384
        %v1983 = vmul.f32 %v1969, %v1385
        %v1984 = vmul.f32 %v1974, %v1386
        %v1985 = vmul.f32 %v1979, %v1387
        %1986 = vmatprep.subr.mxu0 0.0
        %1987 = vmatpush1.msra.mxu0 0.0
        %1988 = vmatprep.subr.mxu0 0.0
        %1989 = vmatpush1.msra.mxu0 0.0
        %1990 = vmatprep.subr.mxu0 0.0
        %1991 = vmatpush1.msra.mxu0 0.0
        %1992 = vmatprep.subr.mxu0 0.0
        %1993 = vmatpush1.msra.mxu0 0.0
        %1994 = vmatprep.subr.mxu0 0.0
        %1995 = vmatpush1.msra.mxu0 0.0
        %1996 = vmatprep.subr.mxu0 0.0
        %1997 = vmatpush1.msra.mxu0 0.0
        %1998 = vmatprep.subr.mxu0 0.0
        %1999 = vmatpush1.msra.mxu0 0.0
        %2000 = vmatprep.subr.mxu0 0.0
        %2001 = vmatpush1.msra.mxu0 0.0
        %2002 = vmatprep.subr.mxu0 0.0
        %2003 = vmatpush1.msra.mxu0 0.0
        %2004 = vmatprep.subr.mxu0 0.0
        %2005 = vmatpush1.msra.mxu0 0.0
        %2006 = vmatprep.subr.mxu0 0.0
        %2007 = vmatpush1.msra.mxu0 0.0
        %2008 = vmatprep.subr.mxu0 0.0
        %2009 = vmatpush1.msra.mxu0 0.0
        %2010 = vmatprep.subr.mxu0 0.0
        %2011 = vmatpush1.msra.mxu0 %v1985
        %2012 = vmatprep.subr.mxu0 0.0
        %2013 = vmatpush1.msra.mxu0 %v1984
        %2014 = vmatprep.subr.mxu0 0.0
        %2015 = vmatpush1.msra.mxu0 %v1983
        %2016 = vmatprep.subr.mxu0 0.0
        %2017 = vmatpush1.msra.mxu0 %v1982
        %2018 = vmatprep.subr.mxu0 0.0
        %2019 = vmatpush2.msra.mxu0 0.0
        %2020 = vmatprep.subr.mxu0 0.0
        %2021 = vmatpush2.msra.mxu0 0.0
        %2022 = vmatprep.subr.mxu0 0.0
        %2023 = vmatpush2.msra.mxu0 0.0
        %2024 = vmatprep.subr.mxu0 0.0
        %2025 = vmatpush2.msra.mxu0 0.0
        %2026 = vmatprep.subr.mxu0 0.0
        %2027 = vmatpush2.msra.mxu0 0.0
        %2028 = vmatprep.subr.mxu0 0.0
        %2029 = vmatpush2.msra.mxu0 0.0
        %2030 = vmatprep.subr.mxu0 0.0
        %2031 = vmatpush2.msra.mxu0 0.0
        %2032 = vmatprep.subr.mxu0 0.0
        %2033 = vmatpush2.msra.mxu0 0.0
        %2034 = vmatprep.subr.mxu0 0.0
        %2035 = vmatpush2.msra.mxu0 0.0
        %2036 = vmatprep.subr.mxu0 0.0
        %2037 = vmatpush2.msra.mxu0 0.0
        %2038 = vmatprep.subr.mxu0 0.0
        %2039 = vmatpush2.msra.mxu0 0.0
        %2040 = vmatprep.subr.mxu0 0.0
        %2041 = vmatpush2.msra.mxu0 0.0
        %2042 = vmatprep.subr.mxu0 0.0
        %2043 = vmatpush2.msra.mxu0 0.0
        %2044 = vmatprep.subr.mxu0 0.0
        %2045 = vmatpush2.msra.mxu0 0.0
        %2046 = vmatprep.subr.mxu0 0.0
        %2047 = vmatpush2.msra.mxu0 0.0
        %2048 = vmatprep.subr.mxu0 0.0
        %2049 = vmatpush2.msra.mxu0 0.0
        %2050 = vmatprep.mubr.f32.mxu0 0.0
        %2051 = vmatmul.mubr.f32.gmra.mxu0 %v1652
        %v2052 = vpop.f32.mrf.mxu0
        %v2053 = vadd.f32 0.0, %v2052
        %v2054 = vpop.f32.mrf.mxu0
        %2055 = vdwg.mxu0
        %v2056 = vld [vmem:[%s1048] sm:$0xff]
        %v2057 = vld [vmem:[%s1048 + $0x8] sm:$0xff]
        %v2058 = vld [vmem:[%s1048 + $0x10] sm:$0xff]
        %v2059 = vld [vmem:[%s1048 + $0x18] sm:$0xff]
        %v2061 = vsel %vm1076, %v1721, 0
        %v2064 = vsel %vm1076, %v2053, 0
        %2066 = vmatprep.subr.mxu0 0.0
        %2067 = vmatpush1.msra.mxu0 0.0
        %2068 = vmatprep.subr.mxu0 0.0
        %2069 = vmatpush1.msra.mxu0 0.0
        %2070 = vmatprep.subr.mxu0 0.0
        %2071 = vmatpush1.msra.mxu0 0.0
        %2072 = vmatprep.subr.mxu0 0.0
        %2073 = vmatpush1.msra.mxu0 0.0
        %2074 = vmatprep.subr.mxu0 0.0
        %2075 = vmatpush1.msra.mxu0 0.0
        %2076 = vmatprep.subr.mxu0 0.0
        %2077 = vmatpush1.msra.mxu0 0.0
        %2078 = vmatprep.subr.mxu0 0.0
        %2079 = vmatpush1.msra.mxu0 0.0
        %2080 = vmatprep.subr.mxu0 0.0
        %2081 = vmatpush1.msra.mxu0 0.0
        %2082 = vmatprep.subr.mxu0 0.0
        %2083 = vmatpush1.msra.mxu0 0.0
        %2084 = vmatprep.subr.mxu0 0.0
        %2085 = vmatpush1.msra.mxu0 0.0
        %2086 = vmatprep.subr.mxu0 0.0
        %2087 = vmatpush1.msra.mxu0 0.0
        %2088 = vmatprep.subr.mxu0 0.0
        %2089 = vmatpush1.msra.mxu0 0.0
        %2090 = vmatprep.subr.mxu0 0.0
        %2091 = vmatpush1.msra.mxu0 %v2059
        %2092 = vmatprep.subr.mxu0 0.0
        %2093 = vmatpush1.msra.mxu0 %v2058
        %2094 = vmatprep.subr.mxu0 0.0
        %2095 = vmatpush1.msra.mxu0 %v2057
        %2096 = vmatprep.subr.mxu0 0.0
        %2097 = vmatpush1.msra.mxu0 %v2056
        %2098 = vmatprep.subr.mxu0 0.0
        %2099 = vmatpush2.msra.mxu0 0.0
        %2100 = vmatprep.subr.mxu0 0.0
        %2101 = vmatpush2.msra.mxu0 0.0
        %2102 = vmatprep.subr.mxu0 0.0
        %2103 = vmatpush2.msra.mxu0 0.0
        %2104 = vmatprep.subr.mxu0 0.0
        %2105 = vmatpush2.msra.mxu0 0.0
        %2106 = vmatprep.subr.mxu0 0.0
        %2107 = vmatpush2.msra.mxu0 0.0
        %2108 = vmatprep.subr.mxu0 0.0
        %2109 = vmatpush2.msra.mxu0 0.0
        %2110 = vmatprep.subr.mxu0 0.0
        %2111 = vmatpush2.msra.mxu0 0.0
        %2112 = vmatprep.subr.mxu0 0.0
        %2113 = vmatpush2.msra.mxu0 0.0
        %2114 = vmatprep.subr.mxu0 0.0
        %2115 = vmatpush2.msra.mxu0 0.0
        %2116 = vmatprep.subr.mxu0 0.0
        %2117 = vmatpush2.msra.mxu0 0.0
        %2118 = vmatprep.subr.mxu0 0.0
        %2119 = vmatpush2.msra.mxu0 0.0
        %2120 = vmatprep.subr.mxu0 0.0
        %2121 = vmatpush2.msra.mxu0 0.0
        %2122 = vmatprep.subr.mxu0 0.0
        %2123 = vmatpush2.msra.mxu0 0.0
        %2124 = vmatprep.subr.mxu0 0.0
        %2125 = vmatpush2.msra.mxu0 0.0
        %2126 = vmatprep.subr.mxu0 0.0
        %2127 = vmatpush2.msra.mxu0 0.0
        %2128 = vmatprep.subr.mxu0 0.0
        %2129 = vmatpush2.msra.mxu0 0.0
        %2130 = vmatprep.mubr.f32.mxu0 0.0
        %2131 = vmatmul.mubr.f32.gmra.mxu0 %v2061
        %v2132 = vpop.f32.mrf.mxu0
        %v2133 = vadd.f32 0.0, %v2132
        %v2134 = vpop.f32.mrf.mxu0
        %2135 = vmatprep.mubr.f32.mxu0 0.0
        %2136 = vmatmul.mubr.f32.gmra.mxu0 %v2064
        %v2137 = vpop.f32.mrf.mxu0
        %v2138 = vadd.f32 0.0, %v2137
        %v2139 = vpop.f32.mrf.mxu0
        %2140 = vdwg.mxu0
        %v2141 = vadd.f32 %v1072, %v2133
        %v2142 = vadd.f32 %v1073, %v2138
        %v2143 = vld [vmem:[%s1051] sm:$0x1]
        %v2145 = vlaneseq
        %v2146 = vshrl.u32 %v2145, 7
        %v2147 = vsub.s32 0, %v2146
        %v2148 = vrot.slane %v2143, %v2147
        %v2150 = vadd.f32 %v2141, %v2148
        %v2151 = vadd.f32 %v2142, %v2148
        %v2152 = vld [vmem:[%s1054] sm:$0x1]
        %v2153 = vld [vmem:[%s880] sm:$0x1]
        %v2154 = vsel %vm1076, %v2150, 0.0
        %2155 = vadd.xlane.f32.xlu0 %v2154
        %v2156 = vpop.xlane.xlu0 %2155
        %v2157 = vsel %vm1076, %v2151, 0.0
        %2158 = vadd.xlane.f32.xlu0 %v2157
        %v2159 = vpop.xlane.xlu0 %2158
        %v2160 = vmul.f32 %v2156, %v1083
        %v2161 = vmul.f32 %v2159, %v1083
        %v2162 = vsub.f32 %v2150, %v2160
        %v2163 = vsub.f32 %v2151, %v2161
        %v2164 = vmul.f32 %v2162, %v2162
        %v2165 = vmul.f32 %v2163, %v2163
        %v2166 = vsel %vm1076, %v2164, 0.0
        %2167 = vadd.xlane.f32.xlu0 %v2166
        %v2168 = vpop.xlane.xlu0 %2167
        %v2169 = vsel %vm1076, %v2165, 0.0
        %2170 = vadd.xlane.f32.xlu0 %v2169
        %v2171 = vpop.xlane.xlu0 %2170
        %v2172 = vmul.f32 %v2168, %v1083
        %v2173 = vmul.f32 %v2171, %v1083
        %v2174 = vadd.f32 %v2172, 1e-05
        %v2175 = vadd.f32 %v2173, 1e-05
        %v2176 = vrsqrt.pop %v2174
        %v2177 = vrsqrt.pop %v2175
        %v2178 = vmul.f32 %v2162, %v2176
        %v2179 = vmul.f32 %v2163, %v2177
        %v2181 = vlaneseq
        %v2182 = vshrl.u32 %v2181, 7
        %v2183 = vsub.s32 0, %v2182
        %v2184 = vrot.slane %v2152, %v2183
        %v2186 = vmul.f32 %v2178, %v2184
        %v2187 = vmul.f32 %v2179, %v2184
        %v2189 = vlaneseq
        %v2190 = vshrl.u32 %v2189, 7
        %v2191 = vsub.s32 0, %v2190
        %v2192 = vrot.slane %v2153, %v2191
        %v2194 = vadd.f32 %v2186, %v2192
        %v2195 = vadd.f32 %v2187, %v2192
        %v2196 = vld [vmem:[%s889] sm:$0xff]
        %v2197 = vld [vmem:[%s889 + $0x8] sm:$0xff]
        %v2198 = vld [vmem:[%s889 + $0x10] sm:$0xff]
        %v2199 = vld [vmem:[%s889 + $0x18] sm:$0xff]
        %v2200 = vld [vmem:[%s897] sm:$0x1]
        %v2202 = vlaneseq
        %v2203 = vshrl.u32 %v2202, 7
        %v2204 = vsub.s32 0, %v2203
        %v2205 = vrot.slane %v2200, %v2204
        %v2208 = vsel %vm1076, %v2194, 0
        %v2211 = vsel %vm1076, %v2195, 0
        %2213 = vmatprep.subr.mxu0 0.0
        %2214 = vmatpush1.msra.mxu0 0.0
        %2215 = vmatprep.subr.mxu0 0.0
        %2216 = vmatpush1.msra.mxu0 0.0
        %2217 = vmatprep.subr.mxu0 0.0
        %2218 = vmatpush1.msra.mxu0 0.0
        %2219 = vmatprep.subr.mxu0 0.0
        %2220 = vmatpush1.msra.mxu0 0.0
        %2221 = vmatprep.subr.mxu0 0.0
        %2222 = vmatpush1.msra.mxu0 0.0
        %2223 = vmatprep.subr.mxu0 0.0
        %2224 = vmatpush1.msra.mxu0 0.0
        %2225 = vmatprep.subr.mxu0 0.0
        %2226 = vmatpush1.msra.mxu0 0.0
        %2227 = vmatprep.subr.mxu0 0.0
        %2228 = vmatpush1.msra.mxu0 0.0
        %2229 = vmatprep.subr.mxu0 0.0
        %2230 = vmatpush1.msra.mxu0 0.0
        %2231 = vmatprep.subr.mxu0 0.0
        %2232 = vmatpush1.msra.mxu0 0.0
        %2233 = vmatprep.subr.mxu0 0.0
        %2234 = vmatpush1.msra.mxu0 0.0
        %2235 = vmatprep.subr.mxu0 0.0
        %2236 = vmatpush1.msra.mxu0 0.0
        %2237 = vmatprep.subr.mxu0 0.0
        %2238 = vmatpush1.msra.mxu0 %v2199
        %2239 = vmatprep.subr.mxu0 0.0
        %2240 = vmatpush1.msra.mxu0 %v2198
        %2241 = vmatprep.subr.mxu0 0.0
        %2242 = vmatpush1.msra.mxu0 %v2197
        %2243 = vmatprep.subr.mxu0 0.0
        %2244 = vmatpush1.msra.mxu0 %v2196
        %2245 = vmatprep.subr.mxu0 0.0
        %2246 = vmatpush2.msra.mxu0 0.0
        %2247 = vmatprep.subr.mxu0 0.0
        %2248 = vmatpush2.msra.mxu0 0.0
        %2249 = vmatprep.subr.mxu0 0.0
        %2250 = vmatpush2.msra.mxu0 0.0
        %2251 = vmatprep.subr.mxu0 0.0
        %2252 = vmatpush2.msra.mxu0 0.0
        %2253 = vmatprep.subr.mxu0 0.0
        %2254 = vmatpush2.msra.mxu0 0.0
        %2255 = vmatprep.subr.mxu0 0.0
        %2256 = vmatpush2.msra.mxu0 0.0
        %2257 = vmatprep.subr.mxu0 0.0
        %2258 = vmatpush2.msra.mxu0 0.0
        %2259 = vmatprep.subr.mxu0 0.0
        %2260 = vmatpush2.msra.mxu0 0.0
        %2261 = vmatprep.subr.mxu0 0.0
        %2262 = vmatpush2.msra.mxu0 0.0
        %2263 = vmatprep.subr.mxu0 0.0
        %2264 = vmatpush2.msra.mxu0 0.0
        %2265 = vmatprep.subr.mxu0 0.0
        %2266 = vmatpush2.msra.mxu0 0.0
        %2267 = vmatprep.subr.mxu0 0.0
        %2268 = vmatpush2.msra.mxu0 0.0
        %2269 = vmatprep.subr.mxu0 0.0
        %2270 = vmatpush2.msra.mxu0 0.0
        %2271 = vmatprep.subr.mxu0 0.0
        %2272 = vmatpush2.msra.mxu0 0.0
        %2273 = vmatprep.subr.mxu0 0.0
        %2274 = vmatpush2.msra.mxu0 0.0
        %2275 = vmatprep.subr.mxu0 0.0
        %2276 = vmatpush2.msra.mxu0 0.0
        %2277 = vmatprep.mubr.f32.mxu0 0.0
        %2278 = vmatmul.mubr.f32.gmra.mxu0 %v2208
        %v2279 = vpop.f32.mrf.mxu0
        %v2280 = vadd.f32 %v2205, %v2279
        %v2281 = vpop.f32.mrf.mxu0
        %2282 = vmatprep.mubr.f32.mxu0 0.0
        %2283 = vmatmul.mubr.f32.gmra.mxu0 %v2211
        %v2284 = vpop.f32.mrf.mxu0
        %v2285 = vadd.f32 %v2205, %v2284
        %v2286 = vpop.f32.mrf.mxu0
        %2287 = vdwg.mxu0
        %v2288 = vmul.f32 %v2280, -1.702
        %v2289 = vmul.f32 %v2285, -1.702
        %v2290 = vmul.f32 %v2288, 1.442695
        %v2291 = vpow.pop %v2290
        %v2292 = vmul.f32 %v2289, 1.442695
        %v2293 = vpow.pop %v2292
        %v2294 = vadd.f32 %v2291, 1.0
        %v2295 = vadd.f32 %v2293, 1.0
        %v2296 = vrcp.pop %v2294
        %v2297 = vrcp.pop %v2295
        %v2298 = vmul.f32 %v2280, %v2296
        %v2299 = vmul.f32 %v2285, %v2297
        %v2300 = vld [vmem:[%s1059] sm:$0xff]
        %v2301 = vld [vmem:[%s1059 + $0x8] sm:$0xff]
        %v2302 = vld [vmem:[%s1059 + $0x10] sm:$0xff]
        %v2303 = vld [vmem:[%s1059 + $0x18] sm:$0xff]
        %v2304 = vld [vmem:[%s1059 + $0x20] sm:$0xff]
        %v2305 = vld [vmem:[%s1059 + $0x28] sm:$0xff]
        %v2306 = vld [vmem:[%s1059 + $0x30] sm:$0xff]
        %v2307 = vld [vmem:[%s1059 + $0x38] sm:$0xff]
        %vm2308 = vcmask 523264
        %v2310 = vsel %vm2308, %v2298, 0
        %v2313 = vsel %vm2308, %v2299, 0
        %2315 = vmatprep.subr.mxu0 0.0
        %2316 = vmatpush1.msra.mxu0 0.0
        %2317 = vmatprep.subr.mxu0 0.0
        %2318 = vmatpush1.msra.mxu0 0.0
        %2319 = vmatprep.subr.mxu0 0.0
        %2320 = vmatpush1.msra.mxu0 0.0
        %2321 = vmatprep.subr.mxu0 0.0
        %2322 = vmatpush1.msra.mxu0 0.0
        %2323 = vmatprep.subr.mxu0 0.0
        %2324 = vmatpush1.msra.mxu0 0.0
        %2325 = vmatprep.subr.mxu0 0.0
        %2326 = vmatpush1.msra.mxu0 0.0
        %2327 = vmatprep.subr.mxu0 0.0
        %2328 = vmatpush1.msra.mxu0 0.0
        %2329 = vmatprep.subr.mxu0 0.0
        %2330 = vmatpush1.msra.mxu0 0.0
        %2331 = vmatprep.subr.mxu0 0.0
        %2332 = vmatpush1.msra.mxu0 %v2307
        %2333 = vmatprep.subr.mxu0 0.0
        %2334 = vmatpush1.msra.mxu0 %v2306
        %2335 = vmatprep.subr.mxu0 0.0
        %2336 = vmatpush1.msra.mxu0 %v2305
        %2337 = vmatprep.subr.mxu0 0.0
        %2338 = vmatpush1.msra.mxu0 %v2304
        %2339 = vmatprep.subr.mxu0 0.0
        %2340 = vmatpush1.msra.mxu0 %v2303
        %2341 = vmatprep.subr.mxu0 0.0
        %2342 = vmatpush1.msra.mxu0 %v2302
        %2343 = vmatprep.subr.mxu0 0.0
        %2344 = vmatpush1.msra.mxu0 %v2301
        %2345 = vmatprep.subr.mxu0 0.0
        %2346 = vmatpush1.msra.mxu0 %v2300
        %2347 = vmatprep.subr.mxu0 0.0
        %2348 = vmatpush2.msra.mxu0 0.0
        %2349 = vmatprep.subr.mxu0 0.0
        %2350 = vmatpush2.msra.mxu0 0.0
        %2351 = vmatprep.subr.mxu0 0.0
        %2352 = vmatpush2.msra.mxu0 0.0
        %2353 = vmatprep.subr.mxu0 0.0
        %2354 = vmatpush2.msra.mxu0 0.0
        %2355 = vmatprep.subr.mxu0 0.0
        %2356 = vmatpush2.msra.mxu0 0.0
        %2357 = vmatprep.subr.mxu0 0.0
        %2358 = vmatpush2.msra.mxu0 0.0
        %2359 = vmatprep.subr.mxu0 0.0
        %2360 = vmatpush2.msra.mxu0 0.0
        %2361 = vmatprep.subr.mxu0 0.0
        %2362 = vmatpush2.msra.mxu0 0.0
        %2363 = vmatprep.subr.mxu0 0.0
        %2364 = vmatpush2.msra.mxu0 0.0
        %2365 = vmatprep.subr.mxu0 0.0
        %2366 = vmatpush2.msra.mxu0 0.0
        %2367 = vmatprep.subr.mxu0 0.0
        %2368 = vmatpush2.msra.mxu0 0.0
        %2369 = vmatprep.subr.mxu0 0.0
        %2370 = vmatpush2.msra.mxu0 0.0
        %2371 = vmatprep.subr.mxu0 0.0
        %2372 = vmatpush2.msra.mxu0 0.0
        %2373 = vmatprep.subr.mxu0 0.0
        %2374 = vmatpush2.msra.mxu0 0.0
        %2375 = vmatprep.subr.mxu0 0.0
        %2376 = vmatpush2.msra.mxu0 0.0
        %2377 = vmatprep.subr.mxu0 0.0
        %2378 = vmatpush2.msra.mxu0 0.0
        %2379 = vmatprep.mubr.f32.mxu0 0.0
        %2380 = vmatmul.mubr.f32.gmra.mxu0 %v2310
        %v2381 = vpop.f32.mrf.mxu0
        %v2382 = vadd.f32 0.0, %v2381
        %v2383 = vpop.f32.mrf.mxu0
        %2384 = vmatprep.mubr.f32.mxu0 0.0
        %2385 = vmatmul.mubr.f32.gmra.mxu0 %v2313
        %v2386 = vpop.f32.mrf.mxu0
        %v2387 = vadd.f32 0.0, %v2386
        %v2388 = vpop.f32.mrf.mxu0
        %2389 = vdwg.mxu0
        %v2390 = vadd.f32 %v2150, %v2382
        %v2391 = vadd.f32 %v2151, %v2387
        %v2392 = vld [vmem:[%s1062] sm:$0x1]
        %v2394 = vlaneseq
        %v2395 = vshrl.u32 %v2394, 7
        %v2396 = vsub.s32 0, %v2395
        %v2397 = vrot.slane %v2392, %v2396
        %v2399 = vadd.f32 %v2390, %v2397
        %v2400 = vadd.f32 %v2391, %v2397
        %2401 = vst.msk [vmem:[#allocation2] sm:$0xff] %vm1076, %v2399
        %2402 = vst.msk [vmem:[#allocation2 + $0x8] sm:$0xff] %vm1076, %v2400
        %p2403 = scmp.eq.s32.totalorder %s44, 1
        // Predicated region
        $region145: #{tpu_custom_call.1} parent=115 // pred_check
          %p2404 = pneg %p2403
        $region146: #{tpu_custom_call.1} parent=115 // pred_check_branch
          %2406 = sbr.rel (%p2404) target = $region148
        $region147: #{tpu_custom_call.1} parent=115 // pred_region
          %v2407 = vld [vmem:[%s4] sm:$0x3]
          %vm2408 = vcmask 130048
          %v2410 = vsel %vm2408, %v2407, 0
          %2412 = vmatprep.subr.mxu0 0.0
          %2413 = vmatpush1.msra.mxu0 0.0
          %2414 = vmatprep.subr.mxu0 0.0
          %2415 = vmatpush1.msra.mxu0 0.0
          %2416 = vmatprep.subr.mxu0 0.0
          %2417 = vmatpush1.msra.mxu0 0.0
          %2418 = vmatprep.subr.mxu0 0.0
          %2419 = vmatpush1.msra.mxu0 0.0
          %2420 = vmatprep.subr.mxu0 0.0
          %2421 = vmatpush1.msra.mxu0 0.0
          %2422 = vmatprep.subr.mxu0 0.0
          %2423 = vmatpush1.msra.mxu0 0.0
          %2424 = vmatprep.subr.mxu0 0.0
          %2425 = vmatpush1.msra.mxu0 0.0
          %2426 = vmatprep.subr.mxu0 0.0
          %2427 = vmatpush1.msra.mxu0 0.0
          %2428 = vmatprep.subr.mxu0 0.0
          %2429 = vmatpush1.msra.mxu0 0.0
          %2430 = vmatprep.subr.mxu0 0.0
          %2431 = vmatpush1.msra.mxu0 0.0
          %2432 = vmatprep.subr.mxu0 0.0
          %2433 = vmatpush1.msra.mxu0 0.0
          %2434 = vmatprep.subr.mxu0 0.0
          %2435 = vmatpush1.msra.mxu0 0.0
          %2436 = vmatprep.subr.mxu0 0.0
          %2437 = vmatpush1.msra.mxu0 0.0
          %2438 = vmatprep.subr.mxu0 0.0
          %2439 = vmatpush1.msra.mxu0 0.0
          %2440 = vmatprep.subr.mxu0 0.0
          %2441 = vmatpush1.msra.mxu0 %v2400
          %2442 = vmatprep.subr.mxu0 0.0
          %2443 = vmatpush1.msra.mxu0 %v2399
          %2444 = vmatprep.subr.mxu0 0.0
          %2445 = vmatpush2.msra.mxu0 0.0
          %2446 = vmatprep.subr.mxu0 0.0
          %2447 = vmatpush2.msra.mxu0 0.0
          %2448 = vmatprep.subr.mxu0 0.0
          %2449 = vmatpush2.msra.mxu0 0.0
          %2450 = vmatprep.subr.mxu0 0.0
          %2451 = vmatpush2.msra.mxu0 0.0
          %2452 = vmatprep.subr.mxu0 0.0
          %2453 = vmatpush2.msra.mxu0 0.0
          %2454 = vmatprep.subr.mxu0 0.0
          %2455 = vmatpush2.msra.mxu0 0.0
          %2456 = vmatprep.subr.mxu0 0.0
          %2457 = vmatpush2.msra.mxu0 0.0
          %2458 = vmatprep.subr.mxu0 0.0
          %2459 = vmatpush2.msra.mxu0 0.0
          %2460 = vmatprep.subr.mxu0 0.0
          %2461 = vmatpush2.msra.mxu0 0.0
          %2462 = vmatprep.subr.mxu0 0.0
          %2463 = vmatpush2.msra.mxu0 0.0
          %2464 = vmatprep.subr.mxu0 0.0
          %2465 = vmatpush2.msra.mxu0 0.0
          %2466 = vmatprep.subr.mxu0 0.0
          %2467 = vmatpush2.msra.mxu0 0.0
          %2468 = vmatprep.subr.mxu0 0.0
          %2469 = vmatpush2.msra.mxu0 0.0
          %2470 = vmatprep.subr.mxu0 0.0
          %2471 = vmatpush2.msra.mxu0 0.0
          %2472 = vmatprep.subr.mxu0 0.0
          %2473 = vmatpush2.msra.mxu0 0.0
          %2474 = vmatprep.subr.mxu0 0.0
          %2475 = vmatpush2.msra.mxu0 0.0
          %2476 = vmatprep.mubr.f32.mxu0 0.0
          %2477 = vmatmul.mubr.f32.gmra.mxu0 %v2410
          %v2478 = vpop.f32.mrf.mxu0
          %v2479 = vadd.f32 0.0, %v2478
          %v2480 = vpop.f32.mrf.mxu0
          %2481 = vdwg.mxu0
          %vm2482 = vcmask 254976
          %v2483 = vsel %vm2482, %v2479, 0.0
          %2484 = vadd.xlane.f32.xlu0 %v2483
          %v2485 = vpop.xlane.xlu0 %2484
          %v2486 = vmul.f32 %v2485, %v1083
          %v2487 = vsub.f32 %v2479, %v2486
          %v2488 = vmul.f32 %v2487, %v2487
          %v2489 = vsel %vm2482, %v2488, 0.0
          %2490 = vadd.xlane.f32.xlu0 %v2489
          %v2491 = vpop.xlane.xlu0 %2490
          %v2492 = vmul.f32 %v2491, %v1083
          %v2493 = vadd.f32 %v2492, 1e-05
          %v2494 = vrsqrt.pop %v2493
          %v2495 = vmul.f32 %v2487, %v2494
          %v2496 = vld [vmem:[%s21] sm:$0x1]
          %v2498 = vlaneseq
          %v2499 = vshrl.u32 %v2498, 7
          %v2500 = vsub.s32 0, %v2499
          %v2501 = vrot.slane %v2496, %v2500
          %v2503 = vmul.f32 %v2495, %v2501
          %v2504 = vld [vmem:[%s22] sm:$0x1]
          %v2506 = vlaneseq
          %v2507 = vshrl.u32 %v2506, 7
          %v2508 = vsub.s32 0, %v2507
          %v2509 = vrot.slane %v2504, %v2508
          %v2511 = vadd.f32 %v2503, %v2509
          %v2512 = vld [vmem:[%s23] sm:$0xff]
          %v2513 = vld [vmem:[%s23 + $0x8] sm:$0xff]
          %v2514 = vld [vmem:[%s23 + $0x10] sm:$0xff]
          %v2515 = vld [vmem:[%s23 + $0x18] sm:$0xff]
          %v2517 = vsel %vm1076, %v2511, 0
          %2519 = vmatprep.subr.mxu0 0.0
          %2520 = vmatpush1.msra.mxu0 0.0
          %2521 = vmatprep.subr.mxu0 0.0
          %2522 = vmatpush1.msra.mxu0 0.0
          %2523 = vmatprep.subr.mxu0 0.0
          %2524 = vmatpush1.msra.mxu0 0.0
          %2525 = vmatprep.subr.mxu0 0.0
          %2526 = vmatpush1.msra.mxu0 0.0
          %2527 = vmatprep.subr.mxu0 0.0
          %2528 = vmatpush1.msra.mxu0 0.0
          %2529 = vmatprep.subr.mxu0 0.0
          %2530 = vmatpush1.msra.mxu0 0.0
          %2531 = vmatprep.subr.mxu0 0.0
          %2532 = vmatpush1.msra.mxu0 0.0
          %2533 = vmatprep.subr.mxu0 0.0
          %2534 = vmatpush1.msra.mxu0 0.0
          %2535 = vmatprep.subr.mxu0 0.0
          %2536 = vmatpush1.msra.mxu0 0.0
          %2537 = vmatprep.subr.mxu0 0.0
          %2538 = vmatpush1.msra.mxu0 0.0
          %2539 = vmatprep.subr.mxu0 0.0
          %2540 = vmatpush1.msra.mxu0 0.0
          %2541 = vmatprep.subr.mxu0 0.0
          %2542 = vmatpush1.msra.mxu0 0.0
          %2543 = vmatprep.subr.mxu0 0.0
          %2544 = vmatpush1.msra.mxu0 %v2515
          %2545 = vmatprep.subr.mxu0 0.0
          %2546 = vmatpush1.msra.mxu0 %v2514
          %2547 = vmatprep.subr.mxu0 0.0
          %2548 = vmatpush1.msra.mxu0 %v2513
          %2549 = vmatprep.subr.mxu0 0.0
          %2550 = vmatpush1.msra.mxu0 %v2512
          %2551 = vmatprep.subr.mxu0 0.0
          %2552 = vmatpush2.msra.mxu0 0.0
          %2553 = vmatprep.subr.mxu0 0.0
          %2554 = vmatpush2.msra.mxu0 0.0
          %2555 = vmatprep.subr.mxu0 0.0
          %2556 = vmatpush2.msra.mxu0 0.0
          %2557 = vmatprep.subr.mxu0 0.0
          %2558 = vmatpush2.msra.mxu0 0.0
          %2559 = vmatprep.subr.mxu0 0.0
          %2560 = vmatpush2.msra.mxu0 0.0
          %2561 = vmatprep.subr.mxu0 0.0
          %2562 = vmatpush2.msra.mxu0 0.0
          %2563 = vmatprep.subr.mxu0 0.0
          %2564 = vmatpush2.msra.mxu0 0.0
          %2565 = vmatprep.subr.mxu0 0.0
          %2566 = vmatpush2.msra.mxu0 0.0
          %2567 = vmatprep.subr.mxu0 0.0
          %2568 = vmatpush2.msra.mxu0 0.0
          %2569 = vmatprep.subr.mxu0 0.0
          %2570 = vmatpush2.msra.mxu0 0.0
          %2571 = vmatprep.subr.mxu0 0.0
          %2572 = vmatpush2.msra.mxu0 0.0
          %2573 = vmatprep.subr.mxu0 0.0
          %2574 = vmatpush2.msra.mxu0 0.0
          %2575 = vmatprep.subr.mxu0 0.0
          %2576 = vmatpush2.msra.mxu0 0.0
          %2577 = vmatprep.subr.mxu0 0.0
          %2578 = vmatpush2.msra.mxu0 0.0
          %2579 = vmatprep.subr.mxu0 0.0
          %2580 = vmatpush2.msra.mxu0 0.0
          %2581 = vmatprep.subr.mxu0 0.0
          %2582 = vmatpush2.msra.mxu0 0.0
          %2583 = vmatprep.mubr.f32.mxu0 0.0
          %2584 = vmatmul.mubr.f32.gmra.mxu0 %v2517
          %v2585 = vpop.f32.mrf.mxu0
          %v2586 = vadd.f32 0.0, %v2585
          %v2587 = vpop.f32.mrf.mxu0
          %2588 = vdwg.mxu0
          %vm2589 = vcmask 123904
          %2590 = vst.msk [vmem:[#allocation14] sm:$0x3] %vm2589, %v2586
        $region148: #{tpu_custom_call.1} parent=115 // pred_fallthru
          _
        // Predicated region
        $region149: #{tpu_custom_call.1} parent=115 // pred_check
          %p2591 = pneg %p641
        $region150: #{tpu_custom_call.1} parent=115 // pred_check_branch
          %2593 = sbr.rel (%p2591) target = $region152
        $region151: #{tpu_custom_call.1} parent=115 // pred_region
          %s2595 = ssub.s32 32, 32
          %2596 = vsyncadd [#allocation5], %s2595
          %s2598 = sshll.u32 [#allocation14], 4
          %s2599 = int_to_ptr.vmem [resolvable:$true] %s2598
          %2601 = dma.vmem_to_hbm [thread:$0]  %s2599, 32, %s24, [#allocation5]
        $region152: #{tpu_custom_call.1} parent=115 // pred_fallthru
          _
        // Predicated region
        $region153: #{tpu_custom_call.1} parent=115 // pred_check
          %p2602 = pneg %p641
        $region154: #{tpu_custom_call.1} parent=115 // pred_check_branch
          %2604 = sbr.rel (%p2602) target = $region156
        $region155: #{tpu_custom_call.1} parent=115 // pred_region
          %2605 = dma.done [#allocation5], 32
        $region156: #{tpu_custom_call.1} parent=115 // pred_fallthru
          _
      $region116: #{tpu_custom_call.1} parent=5 // pred_fallthru
        _
      %p2606 = scmp.le.s32.totalorder 2, %s39
      // Predicated region
      $region157: #{tpu_custom_call.1} parent=5 // pred_check
        %p2607 = pneg %p2606
      $region158: #{tpu_custom_call.1} parent=5 // pred_check_branch
        %2609 = sbr.rel (%p2607) target = $region160
      $region159: #{tpu_custom_call.1} parent=5 // pred_region
        %s2610 = ssub.s32 %s39, 2
      $region160: #{tpu_custom_call.1} parent=5 // pred_fallthru
        _
    $region6: #{tpu_custom_call.1} parent=1 // loop_footer
      %s43 = sadd.s32 1, %s39
    $region7: #{tpu_custom_call.1} parent=1 // loop_footer_branch
      %38 = sbr.rel target = $region3
    $region8: #{tpu_custom_call.1} parent=1 // loop_exit
      _
    %2611 = vsyncpa [#allocation4], 1
    %s2612 = scalar_lea.sflag [#allocation4], 1
    %2613 = vsyncpa %s2612, 1
    %2614 = vsyncpa [#allocation7], 1
    %2615 = vsyncpa [#allocation10], 1
    %s2616 = scalar_lea.sflag [#allocation10], 1
    %2617 = vsyncpa %s2616, 1
    %2618 = vsyncpa [#allocation13], 1
    %s2619 = scalar_lea.sflag [#allocation13], 1
    %2620 = vsyncpa %s2619, 1
    %2621 = vsyncpa [#allocation5], 1
    %s2622 = scalar_lea.sflag [#allocation5], 1
    %2623 = vsyncpa %s2622, 1

</llo_original>
